<compile_context>
chip_gen: v6e
topology: v6e:2x2x1
jax: 0.10.0
libtpu: 0.0.40
codegen_flags: <defaults>
</compile_context>

<pallas_src>
import functools

import jax
import jax.numpy as jnp
from jax import lax
from jax.experimental import pallas as pl
from jax.experimental.pallas import tpu as pltpu


# ----------------------------------------------------------------------------
# Parameter preprocessing (done once, outside jit)
# ----------------------------------------------------------------------------
def _toeplitz_weight(w_hwio, width):
    """(3,3,Cin,Cout) conv weight -> (3, width*Cin, width*Cout) per-dy Toeplitz
    matrices; dx taps and the SAME zero padding in W are baked into the matrix."""
    kh, kw, cin, cout = w_hwio.shape
    wi = jnp.arange(width)[:, None, None]
    wo = jnp.arange(width)[None, :, None]
    dx = jnp.arange(kw)[None, None, :]
    ind = (wi == wo + dx - 1).astype(w_hwio.dtype)          # (W, W, 3)
    t = jnp.einsum("iox,yxcd->yicod", ind, w_hwio)          # (3, W, Cin, W, Cout)
    return t.reshape(kh, width * cin, width * cout)


def _row_pool_selector(h, pad_out):
    """0/1 matrices selecting even/odd rows for the 2x2 pool.  If pad_out, the
    output gets one zero halo row on each side (ready to be the next conv's input)."""
    hh = h // 2
    rows = jnp.arange(hh)
    cols = jnp.arange(h)
    sel_e = (cols[None, :] == 2 * rows[:, None]).astype(jnp.bfloat16)
    sel_o = (cols[None, :] == 2 * rows[:, None] + 1).astype(jnp.bfloat16)
    if pad_out:
        sel_e = jnp.pad(sel_e, ((1, 1), (0, 0)))
        sel_o = jnp.pad(sel_o, ((1, 1), (0, 0)))
    return jnp.stack([sel_e, sel_o])                        # (2, hh(+2), h)


def _lane_pool_selector(width, c):
    """0/1 matrices selecting even/odd W positions (per channel) and compacting the
    lane dim from width*c to (width//2)*c."""
    wh = width // 2
    out_l = jnp.arange(wh * c)
    in_l = jnp.arange(width * c)
    src_e = 2 * (out_l // c) * c + (out_l % c)
    sel_e = (in_l[:, None] == src_e[None, :]).astype(jnp.bfloat16)
    sel_o = (in_l[:, None] == (src_e + c)[None, :]).astype(jnp.bfloat16)
    return jnp.stack([sel_e, sel_o])                        # (2, width*c, wh*c)


def init_params(key, in_channels, hidden_units, output_shape):
    """PyTorch-like parameters (Conv weight HWIO, bias, folded BN scale/shift, FC)."""
    def conv_bn(k, c_in, c_out):
        k1, k2, k3, k4, k5, k6 = jax.random.split(k, 6)
        w = jax.random.normal(k1, (3, 3, c_in, c_out), jnp.float32) / jnp.sqrt(9.0 * c_in)
        b = 0.05 * jax.random.normal(k2, (c_out,), jnp.float32)
        gamma = 1.0 + 0.1 * jax.random.normal(k3, (c_out,), jnp.float32)
        beta = 0.1 * jax.random.normal(k4, (c_out,), jnp.float32)
        mean = 0.1 * jax.random.normal(k5, (c_out,), jnp.float32)
        var = 1.0 + 0.1 * jnp.abs(jax.random.normal(k6, (c_out,), jnp.float32))
        scale = gamma / jnp.sqrt(var + 1e-5)
        shift = beta - mean * scale
        return {"w": w, "b": b, "scale": scale, "shift": shift}

    keys = jax.random.split(key, 6)
    h = hidden_units
    params = {
        "block1": [conv_bn(keys[0], in_channels, h), conv_bn(keys[1], h, h)],
        "block2": [conv_bn(keys[2], h, h), conv_bn(keys[3], h, h)],
    }
    feat = hidden_units * 8 * 8  # nn.Linear(in_features=hidden_units*8*8, ...)
    params["fc_w"] = jax.random.normal(keys[4], (feat, output_shape), jnp.float32) / jnp.sqrt(float(feat))
    params["fc_b"] = 0.05 * jax.random.normal(keys[5], (output_shape,), jnp.float32)
    return params


def prepare_params(params, height, width):
    """Build kernel-ready tensors: bf16 Toeplitz conv weights, per-lane act vectors
    (bias folded into shift for Conv->BN->ReLU), pooling selectors, permuted+padded
    classifier weights."""
    hid = params["block1"][0]["w"].shape[-1]

    def pack_conv(layer, w_cols, bn_before_relu):
        t = _toeplitz_weight(layer["w"], w_cols).astype(jnp.bfloat16)
        scale, shift, b = layer["scale"], layer["shift"], layer["b"]
        if bn_before_relu:                     # y = relu(conv*scale + (b*scale+shift))
            pre = jnp.zeros_like(b)            # bias folded into post (saves a VPU add)
            post = b * scale + shift
        else:                                  # y = relu(conv + b)*scale + shift
            pre, post = b, shift
        v = jnp.stack([jnp.tile(pre, w_cols),
                       jnp.tile(scale, w_cols),
                       jnp.tile(post, w_cols)]).astype(jnp.float32)
        return t, v[:, None, :]                # (3, 1, w_cols*Cout)

    def pack_block(layers, hgt, wdt, bn_before_relu, pad_out_rows):
        t1, v1 = pack_conv(layers[0], wdt, bn_before_relu)
        t2, v2 = pack_conv(layers[1], wdt, bn_before_relu)
        c_out = layers[1]["w"].shape[-1]
        return {"t1": t1, "v1": v1, "t2": t2, "v2": v2,
                "rs": _row_pool_selector(hgt, pad_out_rows),
                "cs": _lane_pool_selector(wdt, c_out)}

    prep = {
        "block1": pack_block(params["block1"], height, width, True, True),
        "block2": pack_block(params["block2"], height // 2, width // 2, False, False),
    }
    # Classifier: permute rows from PyTorch's NCHW (c,h,w) flatten order to the
    # kernel's pooled-slab (h,w,c) order, pad the output dim to 128 lanes.
    hf, wf = height // 4, width // 4
    out_dim = params["fc_w"].shape[-1]
    w_slab = (params["fc_w"].reshape(hid, hf, wf, out_dim)
              .transpose(1, 2, 0, 3).reshape(hf * wf * hid, out_dim))
    opad = 128
    prep["fc_w"] = jnp.zeros((hf * wf * hid, opad), jnp.bfloat16).at[:, :out_dim].set(
        w_slab.astype(jnp.bfloat16))
    prep["fc_b"] = jnp.zeros((1, opad), jnp.float32).at[0, :out_dim].set(params["fc_b"])
    return prep


# ----------------------------------------------------------------------------
# Fused conv block kernel: conv3x3 -> act -> conv3x3 -> act -> maxpool2
# ----------------------------------------------------------------------------
def _block_kernel(x_ref, t1_ref, v1_ref, t2_ref, v2_ref, rs_ref, cs_ref,
                  o_ref, h1_ref, *, bn_before_relu, body_h):
    H = body_h
    L1 = t1_ref.shape[-1]
    L2 = t2_ref.shape[-1]

    def act(z, v_ref):
        if bn_before_relu:     # Conv -> BN -> ReLU (bias pre-folded into v[2])
            return jnp.maximum(z * v_ref[1] + v_ref[2], 0.0)
        return jnp.maximum(z + v_ref[0], 0.0) * v_ref[1] + v_ref[2]  # Conv -> ReLU -> BN

    # ---- conv1: 3 lane-dense matmuls (one per dy); Toeplitz weights handle dx + W pad.
    acc1 = jnp.zeros((H, L1), jnp.float32)
    for dy in range(3):
        acc1 = acc1 + jnp.dot(x_ref[pl.ds(dy, H), :], t1_ref[dy],
                              preferred_element_type=jnp.float32)
    y1 = act(acc1, v1_ref).astype(h1_ref.dtype)

    # ---- stage y1 in VMEM with a 16-row zero halo (all stores 16-row aligned for bf16).
    zero_band = jnp.zeros((16, L1), h1_ref.dtype)
    h1_ref[pl.ds(0, 16), :] = zero_band
    h1_ref[pl.ds(H + 16, 16), :] = zero_band
    h1_ref[pl.ds(16, H), :] = y1

    # ---- conv2 from the VMEM scratch.
    acc2 = jnp.zeros((H, L2), jnp.float32)
    for dy in range(3):
        acc2 = acc2 + jnp.dot(h1_ref[pl.ds(15 + dy, H), :], t2_ref[dy],
                              preferred_element_type=jnp.float32)
    y2 = act(acc2, v2_ref).astype(jnp.bfloat16)

    # ---- 2x2 maxpool via 0/1 selection matmuls (keeps everything lane-dense, MXU idle).
    r_e = jnp.dot(rs_ref[0], y2, preferred_element_type=jnp.float32)
    r_o = jnp.dot(rs_ref[1], y2, preferred_element_type=jnp.float32)
    yr = jnp.maximum(r_e, r_o).astype(jnp.bfloat16)
    p_e = jnp.dot(yr, cs_ref[0], preferred_element_type=jnp.float32)
    p_o = jnp.dot(yr, cs_ref[1], preferred_element_type=jnp.float32)
    o_ref[...] = jnp.maximum(p_e, p_o).astype(o_ref.dtype)


def conv_block(x_slab, blk, *, bn_before_relu):
    """x_slab: (N, H+2, W*Cin) bf16 slab (zero row-halo already present).
    Returns the pooled slab (N, Hh(+2), (W//2)*Cout) bf16."""
    n, hp, lin = x_slab.shape
    h = hp - 2
    assert h % 16 == 0, "spatial height must be a multiple of 16 for this kernel"
    t1, v1, t2, v2, rs, cs = (blk["t1"], blk["v1"], blk["t2"], blk["v2"],
                              blk["rs"], blk["cs"])
    l1 = t1.shape[-1]
    hh_out = rs.shape[1]
    lh = cs.shape[-1]
    kernel = functools.partial(_block_kernel, bn_before_relu=bn_before_relu, body_h=h)
    return pl.pallas_call(
        kernel,
        grid=(n,),
        in_specs=[
            pl.BlockSpec((None, hp, lin), lambda i: (i, 0, 0)),
            pl.BlockSpec(t1.shape, lambda i: (0, 0, 0)),
            pl.BlockSpec(v1.shape, lambda i: (0, 0, 0)),
            pl.BlockSpec(t2.shape, lambda i: (0, 0, 0)),
            pl.BlockSpec(v2.shape, lambda i: (0, 0, 0)),
            pl.BlockSpec(rs.shape, lambda i: (0, 0, 0)),
            pl.BlockSpec(cs.shape, lambda i: (0, 0, 0)),
        ],
        out_specs=pl.BlockSpec((None, hh_out, lh), lambda i: (i, 0, 0)),
        out_shape=jax.ShapeDtypeStruct((n, hh_out, lh), jnp.bfloat16),
        scratch_shapes=[pltpu.VMEM((h + 32, l1), jnp.bfloat16)],
        compiler_params=pltpu.CompilerParams(
            dimension_semantics=("parallel",),          # batch axis -> both TCs on v7x
            vmem_limit_bytes=32 * 1024 * 1024),
    )(x_slab, t1, v1, t2, v2, rs, cs)


# ----------------------------------------------------------------------------
# Linear classifier (output dim padded to 128 lanes; sliced in the wrapper)
# ----------------------------------------------------------------------------
def _linear_kernel(x_ref, w_ref, b_ref, o_ref):
    o_ref[...] = (jnp.dot(x_ref[...], w_ref[...],
                          preferred_element_type=jnp.float32) + b_ref[...])


def linear(x, w, b):
    n, f = x.shape
    opad = w.shape[1]
    return pl.pallas_call(
        _linear_kernel,
        grid=(1,),
        in_specs=[pl.BlockSpec((n, f), lambda i: (0, 0)),
                  pl.BlockSpec((f, opad), lambda i: (0, 0)),
                  pl.BlockSpec((1, opad), lambda i: (0, 0))],
        out_specs=pl.BlockSpec((n, opad), lambda i: (0, 0)),
        out_shape=jax.ShapeDtypeStruct((n, opad), jnp.float32),
    )(x, w, b)


# ----------------------------------------------------------------------------
# Full model forward (3 pallas_calls total)
# ----------------------------------------------------------------------------
@functools.partial(jax.jit, static_argnames=("out_dim",))
def covid19_forward(prep, x_nchw, *, out_dim):
    n, cin, h, w = x_nchw.shape
    # NCHW -> lane-dense (N, H, W*Cin) slab with a 1-row zero halo, cast to bf16.
    x = jnp.transpose(x_nchw, (0, 2, 3, 1)).reshape(n, h, w * cin)
    x = jnp.pad(x, ((0, 0), (1, 1), (0, 0))).astype(jnp.bfloat16)
    # conv_block_1: Conv->BN->ReLU x2 -> MaxPool2 -> Dropout (eval: identity)
    y = conv_block(x, prep["block1"], bn_before_relu=True)
    # conv_block_2: Conv->ReLU->BN x2 -> MaxPool2 -> Dropout (eval: identity)
    y = conv_block(y, prep["block2"], bn_before_relu=False)
    # classifier: pooled slab is already (h, w, c)-ordered; fc_w rows were permuted
    # to match (PyTorch flattens NCHW), output dim padded to 128 and sliced here.
    feat = y.reshape(n, -1)
    logits = linear(feat, prep["fc_w"], prep["fc_b"])
    return logits[:, :out_dim]


# Pure-JAX reference (same inference semantics, f32) for a sanity check.
def reference_forward(params, x_nchw):
    x = jnp.transpose(x_nchw, (0, 2, 3, 1)).astype(jnp.float32)

    def conv(x, layer, bn_first):
        y = lax.conv_general_dilated(
            x, layer["w"], (1, 1), "SAME",
            dimension_numbers=("NHWC", "HWIO", "NHWC"))
        y = y + layer["b"]
        if bn_first:
            return jnp.maximum(y * layer["scale"] + layer["shift"], 0.0)
        return jnp.maximum(y, 0.0) * layer["scale"] + layer["shift"]

    def pool(x):
        return lax.reduce_window(x, -jnp.inf, lax.max,
                                 (1, 2, 2, 1), (1, 2, 2, 1), "VALID")

    for layer in params["block1"]:
        x = conv(x, layer, True)
    x = pool(x)
    for layer in params["block2"]:
        x = conv(x, layer, False)
    x = pool(x)
    feat = jnp.transpose(x, (0, 3, 1, 2)).reshape(x.shape[0], -1)
    return feat @ params["fc_w"] + params["fc_b"]


if __name__ == "__main__":
    key = jax.random.PRNGKey(0)
    kp, kx = jax.random.split(key)

    # Spatial size must be 32x32 so the classifier's in_features = hidden_units*8*8
    # matches the PyTorch module.
    input_shape, hidden_units, output_shape = 3, 8, 4
    height = width = 32
    batch = 2

    params = init_params(kp, input_shape, hidden_units, output_shape)
    prep = prepare_params(params, height, width)
    x = jax.random.normal(kx, (batch, input_shape, height, width), jnp.float32)  # NCHW

    out = jax.block_until_ready(covid19_forward(prep, x, out_dim=output_shape))
    ref = jax.block_until_ready(reference_forward(params, x))

    assert out.shape == (batch, output_shape), out.shape
    assert bool(jnp.allclose(out, ref, rtol=1e-1, atol=1e-1)), (out, ref)
    print("KERNEL_OK")
</pallas_src>

<mosaic_0001>
module attributes {stable_mosaic.version = 11 : i64} {
  func.func @_block_kernel(%arg0: i32, %arg1: memref<1x18x128xbf16, #tpu.memory_space<vmem>>, %arg2: memref<3x128x128xbf16, #tpu.memory_space<vmem>>, %arg3: memref<3x1x128xf32, #tpu.memory_space<vmem>>, %arg4: memref<3x128x128xbf16, #tpu.memory_space<vmem>>, %arg5: memref<3x1x128xf32, #tpu.memory_space<vmem>>, %arg6: memref<2x8x16xbf16, #tpu.memory_space<vmem>>, %arg7: memref<2x128x64xbf16, #tpu.memory_space<vmem>>, %arg8: memref<1x8x64xbf16, #tpu.memory_space<vmem>>, %arg9: memref<48x128xbf16, #tpu.memory_space<vmem>>) attributes {dimension_semantics = [#tpu.dimension_semantics<parallel>], iteration_bounds = array<i64: 2>, scalar_prefetch = 0 : i64, scratch_operands = 1 : i64, tpu.core_type = #tpu.core_type<tc>, window_params = [{transform_indices = @transform_0, window_bounds = array<i64: 1, 18, 128>}, {pipeline_mode = #tpu.pipeline_mode<synchronous>, transform_indices = @transform_1, window_bounds = array<i64: 3, 128, 128>}, {pipeline_mode = #tpu.pipeline_mode<synchronous>, transform_indices = @transform_2, window_bounds = array<i64: 3, 1, 128>}, {pipeline_mode = #tpu.pipeline_mode<synchronous>, transform_indices = @transform_3, window_bounds = array<i64: 3, 128, 128>}, {pipeline_mode = #tpu.pipeline_mode<synchronous>, transform_indices = @transform_4, window_bounds = array<i64: 3, 1, 128>}, {pipeline_mode = #tpu.pipeline_mode<synchronous>, transform_indices = @transform_5, window_bounds = array<i64: 2, 8, 16>}, {pipeline_mode = #tpu.pipeline_mode<synchronous>, transform_indices = @transform_6, window_bounds = array<i64: 2, 128, 64>}, {transform_indices = @transform_7, window_bounds = array<i64: 1, 8, 64>}]} {
    %cst = arith.constant 0.000000e+00 : f32
    %0 = vector.broadcast %cst : f32 to vector<16x128xf32>
    %c0 = arith.constant 0 : index
    %c0_0 = arith.constant 0 : index
    %c0_1 = arith.constant 0 : index
    %1 = vector.load %arg1[%c0, %c0_0, %c0_1] : memref<1x18x128xbf16, #tpu.memory_space<vmem>>, vector<1x16x128xbf16>
    %2 = vector.shape_cast %1 : vector<1x16x128xbf16> to vector<16x128xbf16>
    %c0_2 = arith.constant 0 : index
    %c0_3 = arith.constant 0 : index
    %c0_4 = arith.constant 0 : index
    %3 = vector.load %arg2[%c0_2, %c0_3, %c0_4] : memref<3x128x128xbf16, #tpu.memory_space<vmem>>, vector<1x128x128xbf16>
    %4 = vector.shape_cast %3 : vector<1x128x128xbf16> to vector<128x128xbf16>
    %cst_5 = arith.constant dense<0.000000e+00> : vector<16x128xf32>
    %5 = tpu.matmul %2, %4, %cst_5 {dimension_numbers = #tpu.dot_dimension_numbers<[1], [0], [0], [1], [0, 0, 1, 1], [], []>} : vector<16x128xbf16>, vector<128x128xbf16>, vector<16x128xf32> -> vector<16x128xf32>
    %6 = arith.addf %0, %5 : vector<16x128xf32>
    %c0_6 = arith.constant 0 : index
    %c1 = arith.constant 1 : index
    %c0_7 = arith.constant 0 : index
    %7 = vector.load %arg1[%c0_6, %c1, %c0_7] : memref<1x18x128xbf16, #tpu.memory_space<vmem>>, vector<1x16x128xbf16>
    %8 = vector.shape_cast %7 : vector<1x16x128xbf16> to vector<16x128xbf16>
    %c1_8 = arith.constant 1 : index
    %c0_9 = arith.constant 0 : index
    %c0_10 = arith.constant 0 : index
    %9 = vector.load %arg2[%c1_8, %c0_9, %c0_10] : memref<3x128x128xbf16, #tpu.memory_space<vmem>>, vector<1x128x128xbf16>
    %10 = vector.shape_cast %9 : vector<1x128x128xbf16> to vector<128x128xbf16>
    %cst_11 = arith.constant dense<0.000000e+00> : vector<16x128xf32>
    %11 = tpu.matmul %8, %10, %cst_11 {dimension_numbers = #tpu.dot_dimension_numbers<[1], [0], [0], [1], [0, 0, 1, 1], [], []>} : vector<16x128xbf16>, vector<128x128xbf16>, vector<16x128xf32> -> vector<16x128xf32>
    %12 = arith.addf %6, %11 : vector<16x128xf32>
    %c0_12 = arith.constant 0 : index
    %c2 = arith.constant 2 : index
    %c0_13 = arith.constant 0 : index
    %13 = vector.load %arg1[%c0_12, %c2, %c0_13] : memref<1x18x128xbf16, #tpu.memory_space<vmem>>, vector<1x16x128xbf16>
    %14 = vector.shape_cast %13 : vector<1x16x128xbf16> to vector<16x128xbf16>
    %c2_14 = arith.constant 2 : index
    %c0_15 = arith.constant 0 : index
    %c0_16 = arith.constant 0 : index
    %15 = vector.load %arg2[%c2_14, %c0_15, %c0_16] : memref<3x128x128xbf16, #tpu.memory_space<vmem>>, vector<1x128x128xbf16>
    %16 = vector.shape_cast %15 : vector<1x128x128xbf16> to vector<128x128xbf16>
    %cst_17 = arith.constant dense<0.000000e+00> : vector<16x128xf32>
    %17 = tpu.matmul %14, %16, %cst_17 {dimension_numbers = #tpu.dot_dimension_numbers<[1], [0], [0], [1], [0, 0, 1, 1], [], []>} : vector<16x128xbf16>, vector<128x128xbf16>, vector<16x128xf32> -> vector<16x128xf32>
    %18 = arith.addf %12, %17 : vector<16x128xf32>
    %c0_18 = arith.constant 0 : index
    %c0_19 = arith.constant 0 : index
    %c0_20 = arith.constant 0 : index
    %19 = vector.load %arg3[%c0_18, %c0_19, %c0_20] : memref<3x1x128xf32, #tpu.memory_space<vmem>>, vector<1x1x128xf32>
    %20 = vector.shape_cast %19 : vector<1x1x128xf32> to vector<1x128xf32>
    %21 = vector.broadcast %20 : vector<1x128xf32> to vector<16x128xf32>
    %22 = arith.addf %18, %21 : vector<16x128xf32>
    %cst_21 = arith.constant 0.000000e+00 : f32
    %23 = vector.broadcast %cst_21 : f32 to vector<16x128xf32>
    %24 = arith.maximumf %22, %23 : vector<16x128xf32>
    %c1_22 = arith.constant 1 : index
    %c0_23 = arith.constant 0 : index
    %c0_24 = arith.constant 0 : index
    %25 = vector.load %arg3[%c1_22, %c0_23, %c0_24] : memref<3x1x128xf32, #tpu.memory_space<vmem>>, vector<1x1x128xf32>
    %26 = vector.shape_cast %25 : vector<1x1x128xf32> to vector<1x128xf32>
    %27 = vector.broadcast %26 : vector<1x128xf32> to vector<16x128xf32>
    %28 = arith.mulf %24, %27 : vector<16x128xf32>
    %c2_25 = arith.constant 2 : index
    %c0_26 = arith.constant 0 : index
    %c0_27 = arith.constant 0 : index
    %29 = vector.load %arg3[%c2_25, %c0_26, %c0_27] : memref<3x1x128xf32, #tpu.memory_space<vmem>>, vector<1x1x128xf32>
    %30 = vector.shape_cast %29 : vector<1x1x128xf32> to vector<1x128xf32>
    %31 = vector.broadcast %30 : vector<1x128xf32> to vector<16x128xf32>
    %32 = arith.addf %28, %31 : vector<16x128xf32>
    %33 = arith.truncf %32 : vector<16x128xf32> to vector<16x128xbf16>
    %cst_28 = arith.constant 0.000000e+00 : bf16
    %34 = vector.broadcast %cst_28 : bf16 to vector<16x128xbf16>
    %c0_29 = arith.constant 0 : index
    %c0_30 = arith.constant 0 : index
    %35 = vector.load %arg9[%c0_29, %c0_30] : memref<48x128xbf16, #tpu.memory_space<vmem>>, vector<16x128xbf16>
    tpu.vector_store %arg9[%c0_29, %c0_30], %34 {strides = array<i32>} : memref<48x128xbf16, #tpu.memory_space<vmem>>, vector<16x128xbf16>,
    %c32 = arith.constant 32 : index
    %c0_31 = arith.constant 0 : index
    %36 = vector.load %arg9[%c32, %c0_31] : memref<48x128xbf16, #tpu.memory_space<vmem>>, vector<16x128xbf16>
    tpu.vector_store %arg9[%c32, %c0_31], %34 {strides = array<i32>} : memref<48x128xbf16, #tpu.memory_space<vmem>>, vector<16x128xbf16>,
    %c16 = arith.constant 16 : index
    %c0_32 = arith.constant 0 : index
    %37 = vector.load %arg9[%c16, %c0_32] : memref<48x128xbf16, #tpu.memory_space<vmem>>, vector<16x128xbf16>
    tpu.vector_store %arg9[%c16, %c0_32], %33 {strides = array<i32>} : memref<48x128xbf16, #tpu.memory_space<vmem>>, vector<16x128xbf16>,
    %cst_33 = arith.constant 0.000000e+00 : f32
    %38 = vector.broadcast %cst_33 : f32 to vector<16x128xf32>
    %c15 = arith.constant 15 : index
    %c0_34 = arith.constant 0 : index
    %39 = vector.load %arg9[%c15, %c0_34] : memref<48x128xbf16, #tpu.memory_space<vmem>>, vector<16x128xbf16>
    %c0_35 = arith.constant 0 : index
    %c0_36 = arith.constant 0 : index
    %c0_37 = arith.constant 0 : index
    %40 = vector.load %arg4[%c0_35, %c0_36, %c0_37] : memref<3x128x128xbf16, #tpu.memory_space<vmem>>, vector<1x128x128xbf16>
    %41 = vector.shape_cast %40 : vector<1x128x128xbf16> to vector<128x128xbf16>
    %cst_38 = arith.constant dense<0.000000e+00> : vector<16x128xf32>
    %42 = tpu.matmul %39, %41, %cst_38 {dimension_numbers = #tpu.dot_dimension_numbers<[1], [0], [0], [1], [0, 0, 1, 1], [], []>} : vector<16x128xbf16>, vector<128x128xbf16>, vector<16x128xf32> -> vector<16x128xf32>
    %43 = arith.addf %38, %42 : vector<16x128xf32>
    %c16_39 = arith.constant 16 : index
    %c0_40 = arith.constant 0 : index
    %44 = vector.load %arg9[%c16_39, %c0_40] : memref<48x128xbf16, #tpu.memory_space<vmem>>, vector<16x128xbf16>
    %c1_41 = arith.constant 1 : index
    %c0_42 = arith.constant 0 : index
    %c0_43 = arith.constant 0 : index
    %45 = vector.load %arg4[%c1_41, %c0_42, %c0_43] : memref<3x128x128xbf16, #tpu.memory_space<vmem>>, vector<1x128x128xbf16>
    %46 = vector.shape_cast %45 : vector<1x128x128xbf16> to vector<128x128xbf16>
    %cst_44 = arith.constant dense<0.000000e+00> : vector<16x128xf32>
    %47 = tpu.matmul %44, %46, %cst_44 {dimension_numbers = #tpu.dot_dimension_numbers<[1], [0], [0], [1], [0, 0, 1, 1], [], []>} : vector<16x128xbf16>, vector<128x128xbf16>, vector<16x128xf32> -> vector<16x128xf32>
    %48 = arith.addf %43, %47 : vector<16x128xf32>
    %c17 = arith.constant 17 : index
    %c0_45 = arith.constant 0 : index
    %49 = vector.load %arg9[%c17, %c0_45] : memref<48x128xbf16, #tpu.memory_space<vmem>>, vector<16x128xbf16>
    %c2_46 = arith.constant 2 : index
    %c0_47 = arith.constant 0 : index
    %c0_48 = arith.constant 0 : index
    %50 = vector.load %arg4[%c2_46, %c0_47, %c0_48] : memref<3x128x128xbf16, #tpu.memory_space<vmem>>, vector<1x128x128xbf16>
    %51 = vector.shape_cast %50 : vector<1x128x128xbf16> to vector<128x128xbf16>
    %cst_49 = arith.constant dense<0.000000e+00> : vector<16x128xf32>
    %52 = tpu.matmul %49, %51, %cst_49 {dimension_numbers = #tpu.dot_dimension_numbers<[1], [0], [0], [1], [0, 0, 1, 1], [], []>} : vector<16x128xbf16>, vector<128x128xbf16>, vector<16x128xf32> -> vector<16x128xf32>
    %53 = arith.addf %48, %52 : vector<16x128xf32>
    %c0_50 = arith.constant 0 : index
    %c0_51 = arith.constant 0 : index
    %c0_52 = arith.constant 0 : index
    %54 = vector.load %arg5[%c0_50, %c0_51, %c0_52] : memref<3x1x128xf32, #tpu.memory_space<vmem>>, vector<1x1x128xf32>
    %55 = vector.shape_cast %54 : vector<1x1x128xf32> to vector<1x128xf32>
    %56 = vector.broadcast %55 : vector<1x128xf32> to vector<16x128xf32>
    %57 = arith.addf %53, %56 : vector<16x128xf32>
    %cst_53 = arith.constant 0.000000e+00 : f32
    %58 = vector.broadcast %cst_53 : f32 to vector<16x128xf32>
    %59 = arith.maximumf %57, %58 : vector<16x128xf32>
    %c1_54 = arith.constant 1 : index
    %c0_55 = arith.constant 0 : index
    %c0_56 = arith.constant 0 : index
    %60 = vector.load %arg5[%c1_54, %c0_55, %c0_56] : memref<3x1x128xf32, #tpu.memory_space<vmem>>, vector<1x1x128xf32>
    %61 = vector.shape_cast %60 : vector<1x1x128xf32> to vector<1x128xf32>
    %62 = vector.broadcast %61 : vector<1x128xf32> to vector<16x128xf32>
    %63 = arith.mulf %59, %62 : vector<16x128xf32>
    %c2_57 = arith.constant 2 : index
    %c0_58 = arith.constant 0 : index
    %c0_59 = arith.constant 0 : index
    %64 = vector.load %arg5[%c2_57, %c0_58, %c0_59] : memref<3x1x128xf32, #tpu.memory_space<vmem>>, vector<1x1x128xf32>
    %65 = vector.shape_cast %64 : vector<1x1x128xf32> to vector<1x128xf32>
    %66 = vector.broadcast %65 : vector<1x128xf32> to vector<16x128xf32>
    %67 = arith.addf %63, %66 : vector<16x128xf32>
    %68 = arith.truncf %67 : vector<16x128xf32> to vector<16x128xbf16>
    %c0_60 = arith.constant 0 : index
    %c0_61 = arith.constant 0 : index
    %c0_62 = arith.constant 0 : index
    %69 = vector.load %arg6[%c0_60, %c0_61, %c0_62] : memref<2x8x16xbf16, #tpu.memory_space<vmem>>, vector<1x8x16xbf16>
    %70 = vector.shape_cast %69 : vector<1x8x16xbf16> to vector<8x16xbf16>
    %cst_63 = arith.constant dense<0.000000e+00> : vector<8x128xf32>
    %71 = tpu.matmul %70, %68, %cst_63 {dimension_numbers = #tpu.dot_dimension_numbers<[1], [0], [0], [1], [0, 0, 1, 1], [], []>} : vector<8x16xbf16>, vector<16x128xbf16>, vector<8x128xf32> -> vector<8x128xf32>
    %c1_64 = arith.constant 1 : index
    %c0_65 = arith.constant 0 : index
    %c0_66 = arith.constant 0 : index
    %72 = vector.load %arg6[%c1_64, %c0_65, %c0_66] : memref<2x8x16xbf16, #tpu.memory_space<vmem>>, vector<1x8x16xbf16>
    %73 = vector.shape_cast %72 : vector<1x8x16xbf16> to vector<8x16xbf16>
    %cst_67 = arith.constant dense<0.000000e+00> : vector<8x128xf32>
    %74 = tpu.matmul %73, %68, %cst_67 {dimension_numbers = #tpu.dot_dimension_numbers<[1], [0], [0], [1], [0, 0, 1, 1], [], []>} : vector<8x16xbf16>, vector<16x128xbf16>, vector<8x128xf32> -> vector<8x128xf32>
    %75 = arith.maximumf %71, %74 : vector<8x128xf32>
    %76 = arith.truncf %75 : vector<8x128xf32> to vector<8x128xbf16>
    %c0_68 = arith.constant 0 : index
    %c0_69 = arith.constant 0 : index
    %c0_70 = arith.constant 0 : index
    %77 = vector.load %arg7[%c0_68, %c0_69, %c0_70] : memref<2x128x64xbf16, #tpu.memory_space<vmem>>, vector<1x128x64xbf16>
    %78 = vector.shape_cast %77 : vector<1x128x64xbf16> to vector<128x64xbf16>
    %cst_71 = arith.constant dense<0.000000e+00> : vector<8x64xf32>
    %79 = tpu.matmul %76, %78, %cst_71 {dimension_numbers = #tpu.dot_dimension_numbers<[1], [0], [0], [1], [0, 0, 1, 1], [], []>} : vector<8x128xbf16>, vector<128x64xbf16>, vector<8x64xf32> -> vector<8x64xf32>
    %c1_72 = arith.constant 1 : index
    %c0_73 = arith.constant 0 : index
    %c0_74 = arith.constant 0 : index
    %80 = vector.load %arg7[%c1_72, %c0_73, %c0_74] : memref<2x128x64xbf16, #tpu.memory_space<vmem>>, vector<1x128x64xbf16>
    %81 = vector.shape_cast %80 : vector<1x128x64xbf16> to vector<128x64xbf16>
    %cst_75 = arith.constant dense<0.000000e+00> : vector<8x64xf32>
    %82 = tpu.matmul %76, %81, %cst_75 {dimension_numbers = #tpu.dot_dimension_numbers<[1], [0], [0], [1], [0, 0, 1, 1], [], []>} : vector<8x128xbf16>, vector<128x64xbf16>, vector<8x64xf32> -> vector<8x64xf32>
    %83 = arith.maximumf %79, %82 : vector<8x64xf32>
    %84 = arith.truncf %83 : vector<8x64xf32> to vector<8x64xbf16>
    %c0_76 = arith.constant 0 : index
    %c0_77 = arith.constant 0 : index
    %c0_78 = arith.constant 0 : index
    %85 = vector.load %arg8[%c0_76, %c0_77, %c0_78] : memref<1x8x64xbf16, #tpu.memory_space<vmem>>, vector<1x8x64xbf16>
    %86 = vector.shape_cast %85 : vector<1x8x64xbf16> to vector<8x64xbf16>
    %87 = vector.shape_cast %84 : vector<8x64xbf16> to vector<1x8x64xbf16>
    tpu.vector_store %arg8[%c0_76, %c0_77, %c0_78], %87 {strides = array<i32>} : memref<1x8x64xbf16, #tpu.memory_space<vmem>>, vector<1x8x64xbf16>,
    return
  }
  func.func @transform_0(%arg0: i32) -> (i32, i32, i32) {
    %c0_i32 = arith.constant 0 : i32
    %c0_i32_0 = arith.constant 0 : i32
    %c0_i32_1 = arith.constant 0 : i32
    return %arg0, %c0_i32, %c0_i32_0 : i32, i32, i32
  }
  func.func @transform_1(%arg0: i32) -> (i32, i32, i32) {
    %c0_i32 = arith.constant 0 : i32
    %c0_i32_0 = arith.constant 0 : i32
    %c0_i32_1 = arith.constant 0 : i32
    %c0_i32_2 = arith.constant 0 : i32
    return %c0_i32, %c0_i32_0, %c0_i32_1 : i32, i32, i32
  }
  func.func @transform_2(%arg0: i32) -> (i32, i32, i32) {
    %c0_i32 = arith.constant 0 : i32
    %c0_i32_0 = arith.constant 0 : i32
    %c0_i32_1 = arith.constant 0 : i32
    %c0_i32_2 = arith.constant 0 : i32
    return %c0_i32, %c0_i32_0, %c0_i32_1 : i32, i32, i32
  }
  func.func @transform_3(%arg0: i32) -> (i32, i32, i32) {
    %c0_i32 = arith.constant 0 : i32
    %c0_i32_0 = arith.constant 0 : i32
    %c0_i32_1 = arith.constant 0 : i32
    %c0_i32_2 = arith.constant 0 : i32
    return %c0_i32, %c0_i32_0, %c0_i32_1 : i32, i32, i32
  }
  func.func @transform_4(%arg0: i32) -> (i32, i32, i32) {
    %c0_i32 = arith.constant 0 : i32
    %c0_i32_0 = arith.constant 0 : i32
    %c0_i32_1 = arith.constant 0 : i32
    %c0_i32_2 = arith.constant 0 : i32
    return %c0_i32, %c0_i32_0, %c0_i32_1 : i32, i32, i32
  }
  func.func @transform_5(%arg0: i32) -> (i32, i32, i32) {
    %c0_i32 = arith.constant 0 : i32
    %c0_i32_0 = arith.constant 0 : i32
    %c0_i32_1 = arith.constant 0 : i32
    %c0_i32_2 = arith.constant 0 : i32
    return %c0_i32, %c0_i32_0, %c0_i32_1 : i32, i32, i32
  }
  func.func @transform_6(%arg0: i32) -> (i32, i32, i32) {
    %c0_i32 = arith.constant 0 : i32
    %c0_i32_0 = arith.constant 0 : i32
    %c0_i32_1 = arith.constant 0 : i32
    %c0_i32_2 = arith.constant 0 : i32
    return %c0_i32, %c0_i32_0, %c0_i32_1 : i32, i32, i32
  }
  func.func @transform_7(%arg0: i32) -> (i32, i32, i32) {
    %c0_i32 = arith.constant 0 : i32
    %c0_i32_0 = arith.constant 0 : i32
    %c0_i32_1 = arith.constant 0 : i32
    return %arg0, %c0_i32, %c0_i32_0 : i32, i32, i32
  }
}

module attributes {stable_mosaic.version = 11 : i64} {
  func.func @_block_kernel(%arg0: i32, %arg1: memref<1x34x96xbf16, #tpu.memory_space<vmem>>, %arg2: memref<3x96x256xbf16, #tpu.memory_space<vmem>>, %arg3: memref<3x1x256xf32, #tpu.memory_space<vmem>>, %arg4: memref<3x256x256xbf16, #tpu.memory_space<vmem>>, %arg5: memref<3x1x256xf32, #tpu.memory_space<vmem>>, %arg6: memref<2x18x32xbf16, #tpu.memory_space<vmem>>, %arg7: memref<2x256x128xbf16, #tpu.memory_space<vmem>>, %arg8: memref<1x18x128xbf16, #tpu.memory_space<vmem>>, %arg9: memref<64x256xbf16, #tpu.memory_space<vmem>>) attributes {dimension_semantics = [#tpu.dimension_semantics<parallel>], iteration_bounds = array<i64: 2>, scalar_prefetch = 0 : i64, scratch_operands = 1 : i64, tpu.core_type = #tpu.core_type<tc>, window_params = [{transform_indices = @transform_0, window_bounds = array<i64: 1, 34, 96>}, {pipeline_mode = #tpu.pipeline_mode<synchronous>, transform_indices = @transform_1, window_bounds = array<i64: 3, 96, 256>}, {pipeline_mode = #tpu.pipeline_mode<synchronous>, transform_indices = @transform_2, window_bounds = array<i64: 3, 1, 256>}, {pipeline_mode = #tpu.pipeline_mode<synchronous>, transform_indices = @transform_3, window_bounds = array<i64: 3, 256, 256>}, {pipeline_mode = #tpu.pipeline_mode<synchronous>, transform_indices = @transform_4, window_bounds = array<i64: 3, 1, 256>}, {pipeline_mode = #tpu.pipeline_mode<synchronous>, transform_indices = @transform_5, window_bounds = array<i64: 2, 18, 32>}, {pipeline_mode = #tpu.pipeline_mode<synchronous>, transform_indices = @transform_6, window_bounds = array<i64: 2, 256, 128>}, {transform_indices = @transform_7, window_bounds = array<i64: 1, 18, 128>}]} {
    %cst = arith.constant 0.000000e+00 : f32
    %0 = vector.broadcast %cst : f32 to vector<32x256xf32>
    %c0 = arith.constant 0 : index
    %c0_0 = arith.constant 0 : index
    %c0_1 = arith.constant 0 : index
    %1 = vector.load %arg1[%c0, %c0_0, %c0_1] : memref<1x34x96xbf16, #tpu.memory_space<vmem>>, vector<1x32x96xbf16>
    %2 = vector.shape_cast %1 : vector<1x32x96xbf16> to vector<32x96xbf16>
    %c0_2 = arith.constant 0 : index
    %c0_3 = arith.constant 0 : index
    %c0_4 = arith.constant 0 : index
    %3 = vector.load %arg2[%c0_2, %c0_3, %c0_4] : memref<3x96x256xbf16, #tpu.memory_space<vmem>>, vector<1x96x256xbf16>
    %4 = vector.shape_cast %3 : vector<1x96x256xbf16> to vector<96x256xbf16>
    %cst_5 = arith.constant dense<0.000000e+00> : vector<32x256xf32>
    %5 = tpu.matmul %2, %4, %cst_5 {dimension_numbers = #tpu.dot_dimension_numbers<[1], [0], [0], [1], [0, 0, 1, 1], [], []>} : vector<32x96xbf16>, vector<96x256xbf16>, vector<32x256xf32> -> vector<32x256xf32>
    %6 = arith.addf %0, %5 : vector<32x256xf32>
    %c0_6 = arith.constant 0 : index
    %c1 = arith.constant 1 : index
    %c0_7 = arith.constant 0 : index
    %7 = vector.load %arg1[%c0_6, %c1, %c0_7] : memref<1x34x96xbf16, #tpu.memory_space<vmem>>, vector<1x32x96xbf16>
    %8 = vector.shape_cast %7 : vector<1x32x96xbf16> to vector<32x96xbf16>
    %c1_8 = arith.constant 1 : index
    %c0_9 = arith.constant 0 : index
    %c0_10 = arith.constant 0 : index
    %9 = vector.load %arg2[%c1_8, %c0_9, %c0_10] : memref<3x96x256xbf16, #tpu.memory_space<vmem>>, vector<1x96x256xbf16>
    %10 = vector.shape_cast %9 : vector<1x96x256xbf16> to vector<96x256xbf16>
    %cst_11 = arith.constant dense<0.000000e+00> : vector<32x256xf32>
    %11 = tpu.matmul %8, %10, %cst_11 {dimension_numbers = #tpu.dot_dimension_numbers<[1], [0], [0], [1], [0, 0, 1, 1], [], []>} : vector<32x96xbf16>, vector<96x256xbf16>, vector<32x256xf32> -> vector<32x256xf32>
    %12 = arith.addf %6, %11 : vector<32x256xf32>
    %c0_12 = arith.constant 0 : index
    %c2 = arith.constant 2 : index
    %c0_13 = arith.constant 0 : index
    %13 = vector.load %arg1[%c0_12, %c2, %c0_13] : memref<1x34x96xbf16, #tpu.memory_space<vmem>>, vector<1x32x96xbf16>
    %14 = vector.shape_cast %13 : vector<1x32x96xbf16> to vector<32x96xbf16>
    %c2_14 = arith.constant 2 : index
    %c0_15 = arith.constant 0 : index
    %c0_16 = arith.constant 0 : index
    %15 = vector.load %arg2[%c2_14, %c0_15, %c0_16] : memref<3x96x256xbf16, #tpu.memory_space<vmem>>, vector<1x96x256xbf16>
    %16 = vector.shape_cast %15 : vector<1x96x256xbf16> to vector<96x256xbf16>
    %cst_17 = arith.constant dense<0.000000e+00> : vector<32x256xf32>
    %17 = tpu.matmul %14, %16, %cst_17 {dimension_numbers = #tpu.dot_dimension_numbers<[1], [0], [0], [1], [0, 0, 1, 1], [], []>} : vector<32x96xbf16>, vector<96x256xbf16>, vector<32x256xf32> -> vector<32x256xf32>
    %18 = arith.addf %12, %17 : vector<32x256xf32>
    %c1_18 = arith.constant 1 : index
    %c0_19 = arith.constant 0 : index
    %c0_20 = arith.constant 0 : index
    %19 = vector.load %arg3[%c1_18, %c0_19, %c0_20] : memref<3x1x256xf32, #tpu.memory_space<vmem>>, vector<1x1x256xf32>
    %20 = vector.shape_cast %19 : vector<1x1x256xf32> to vector<1x256xf32>
    %21 = vector.broadcast %20 : vector<1x256xf32> to vector<32x256xf32>
    %22 = arith.mulf %18, %21 : vector<32x256xf32>
    %c2_21 = arith.constant 2 : index
    %c0_22 = arith.constant 0 : index
    %c0_23 = arith.constant 0 : index
    %23 = vector.load %arg3[%c2_21, %c0_22, %c0_23] : memref<3x1x256xf32, #tpu.memory_space<vmem>>, vector<1x1x256xf32>
    %24 = vector.shape_cast %23 : vector<1x1x256xf32> to vector<1x256xf32>
    %25 = vector.broadcast %24 : vector<1x256xf32> to vector<32x256xf32>
    %26 = arith.addf %22, %25 : vector<32x256xf32>
    %cst_24 = arith.constant 0.000000e+00 : f32
    %27 = vector.broadcast %cst_24 : f32 to vector<32x256xf32>
    %28 = arith.maximumf %26, %27 : vector<32x256xf32>
    %29 = arith.truncf %28 : vector<32x256xf32> to vector<32x256xbf16>
    %cst_25 = arith.constant 0.000000e+00 : bf16
    %30 = vector.broadcast %cst_25 : bf16 to vector<16x256xbf16>
    %c0_26 = arith.constant 0 : index
    %c0_27 = arith.constant 0 : index
    %31 = vector.load %arg9[%c0_26, %c0_27] : memref<64x256xbf16, #tpu.memory_space<vmem>>, vector<16x256xbf16>
    tpu.vector_store %arg9[%c0_26, %c0_27], %30 {strides = array<i32>} : memref<64x256xbf16, #tpu.memory_space<vmem>>, vector<16x256xbf16>,
    %c48 = arith.constant 48 : index
    %c0_28 = arith.constant 0 : index
    %32 = vector.load %arg9[%c48, %c0_28] : memref<64x256xbf16, #tpu.memory_space<vmem>>, vector<16x256xbf16>
    tpu.vector_store %arg9[%c48, %c0_28], %30 {strides = array<i32>} : memref<64x256xbf16, #tpu.memory_space<vmem>>, vector<16x256xbf16>,
    %c16 = arith.constant 16 : index
    %c0_29 = arith.constant 0 : index
    %33 = vector.load %arg9[%c16, %c0_29] : memref<64x256xbf16, #tpu.memory_space<vmem>>, vector<32x256xbf16>
    tpu.vector_store %arg9[%c16, %c0_29], %29 {strides = array<i32>} : memref<64x256xbf16, #tpu.memory_space<vmem>>, vector<32x256xbf16>,
    %cst_30 = arith.constant 0.000000e+00 : f32
    %34 = vector.broadcast %cst_30 : f32 to vector<32x256xf32>
    %c15 = arith.constant 15 : index
    %c0_31 = arith.constant 0 : index
    %35 = vector.load %arg9[%c15, %c0_31] : memref<64x256xbf16, #tpu.memory_space<vmem>>, vector<32x256xbf16>
    %c0_32 = arith.constant 0 : index
    %c0_33 = arith.constant 0 : index
    %c0_34 = arith.constant 0 : index
    %36 = vector.load %arg4[%c0_32, %c0_33, %c0_34] : memref<3x256x256xbf16, #tpu.memory_space<vmem>>, vector<1x256x256xbf16>
    %37 = vector.shape_cast %36 : vector<1x256x256xbf16> to vector<256x256xbf16>
    %cst_35 = arith.constant dense<0.000000e+00> : vector<32x256xf32>
    %38 = tpu.matmul %35, %37, %cst_35 {dimension_numbers = #tpu.dot_dimension_numbers<[1], [0], [0], [1], [0, 0, 1, 1], [], []>} : vector<32x256xbf16>, vector<256x256xbf16>, vector<32x256xf32> -> vector<32x256xf32>
    %39 = arith.addf %34, %38 : vector<32x256xf32>
    %c16_36 = arith.constant 16 : index
    %c0_37 = arith.constant 0 : index
    %40 = vector.load %arg9[%c16_36, %c0_37] : memref<64x256xbf16, #tpu.memory_space<vmem>>, vector<32x256xbf16>
    %c1_38 = arith.constant 1 : index
    %c0_39 = arith.constant 0 : index
    %c0_40 = arith.constant 0 : index
    %41 = vector.load %arg4[%c1_38, %c0_39, %c0_40] : memref<3x256x256xbf16, #tpu.memory_space<vmem>>, vector<1x256x256xbf16>
    %42 = vector.shape_cast %41 : vector<1x256x256xbf16> to vector<256x256xbf16>
    %cst_41 = arith.constant dense<0.000000e+00> : vector<32x256xf32>
    %43 = tpu.matmul %40, %42, %cst_41 {dimension_numbers = #tpu.dot_dimension_numbers<[1], [0], [0], [1], [0, 0, 1, 1], [], []>} : vector<32x256xbf16>, vector<256x256xbf16>, vector<32x256xf32> -> vector<32x256xf32>
    %44 = arith.addf %39, %43 : vector<32x256xf32>
    %c17 = arith.constant 17 : index
    %c0_42 = arith.constant 0 : index
    %45 = vector.load %arg9[%c17, %c0_42] : memref<64x256xbf16, #tpu.memory_space<vmem>>, vector<32x256xbf16>
    %c2_43 = arith.constant 2 : index
    %c0_44 = arith.constant 0 : index
    %c0_45 = arith.constant 0 : index
    %46 = vector.load %arg4[%c2_43, %c0_44, %c0_45] : memref<3x256x256xbf16, #tpu.memory_space<vmem>>, vector<1x256x256xbf16>
    %47 = vector.shape_cast %46 : vector<1x256x256xbf16> to vector<256x256xbf16>
    %cst_46 = arith.constant dense<0.000000e+00> : vector<32x256xf32>
    %48 = tpu.matmul %45, %47, %cst_46 {dimension_numbers = #tpu.dot_dimension_numbers<[1], [0], [0], [1], [0, 0, 1, 1], [], []>} : vector<32x256xbf16>, vector<256x256xbf16>, vector<32x256xf32> -> vector<32x256xf32>
    %49 = arith.addf %44, %48 : vector<32x256xf32>
    %c1_47 = arith.constant 1 : index
    %c0_48 = arith.constant 0 : index
    %c0_49 = arith.constant 0 : index
    %50 = vector.load %arg5[%c1_47, %c0_48, %c0_49] : memref<3x1x256xf32, #tpu.memory_space<vmem>>, vector<1x1x256xf32>
    %51 = vector.shape_cast %50 : vector<1x1x256xf32> to vector<1x256xf32>
    %52 = vector.broadcast %51 : vector<1x256xf32> to vector<32x256xf32>
    %53 = arith.mulf %49, %52 : vector<32x256xf32>
    %c2_50 = arith.constant 2 : index
    %c0_51 = arith.constant 0 : index
    %c0_52 = arith.constant 0 : index
    %54 = vector.load %arg5[%c2_50, %c0_51, %c0_52] : memref<3x1x256xf32, #tpu.memory_space<vmem>>, vector<1x1x256xf32>
    %55 = vector.shape_cast %54 : vector<1x1x256xf32> to vector<1x256xf32>
    %56 = vector.broadcast %55 : vector<1x256xf32> to vector<32x256xf32>
    %57 = arith.addf %53, %56 : vector<32x256xf32>
    %cst_53 = arith.constant 0.000000e+00 : f32
    %58 = vector.broadcast %cst_53 : f32 to vector<32x256xf32>
    %59 = arith.maximumf %57, %58 : vector<32x256xf32>
    %60 = arith.truncf %59 : vector<32x256xf32> to vector<32x256xbf16>
    %c0_54 = arith.constant 0 : index
    %c0_55 = arith.constant 0 : index
    %c0_56 = arith.constant 0 : index
    %61 = vector.load %arg6[%c0_54, %c0_55, %c0_56] : memref<2x18x32xbf16, #tpu.memory_space<vmem>>, vector<1x18x32xbf16>
    %62 = vector.shape_cast %61 : vector<1x18x32xbf16> to vector<18x32xbf16>
    %cst_57 = arith.constant dense<0.000000e+00> : vector<18x256xf32>
    %63 = tpu.matmul %62, %60, %cst_57 {dimension_numbers = #tpu.dot_dimension_numbers<[1], [0], [0], [1], [0, 0, 1, 1], [], []>} : vector<18x32xbf16>, vector<32x256xbf16>, vector<18x256xf32> -> vector<18x256xf32>
    %c1_58 = arith.constant 1 : index
    %c0_59 = arith.constant 0 : index
    %c0_60 = arith.constant 0 : index
    %64 = vector.load %arg6[%c1_58, %c0_59, %c0_60] : memref<2x18x32xbf16, #tpu.memory_space<vmem>>, vector<1x18x32xbf16>
    %65 = vector.shape_cast %64 : vector<1x18x32xbf16> to vector<18x32xbf16>
    %cst_61 = arith.constant dense<0.000000e+00> : vector<18x256xf32>
    %66 = tpu.matmul %65, %60, %cst_61 {dimension_numbers = #tpu.dot_dimension_numbers<[1], [0], [0], [1], [0, 0, 1, 1], [], []>} : vector<18x32xbf16>, vector<32x256xbf16>, vector<18x256xf32> -> vector<18x256xf32>
    %67 = arith.maximumf %63, %66 : vector<18x256xf32>
    %68 = arith.truncf %67 : vector<18x256xf32> to vector<18x256xbf16>
    %c0_62 = arith.constant 0 : index
    %c0_63 = arith.constant 0 : index
    %c0_64 = arith.constant 0 : index
    %69 = vector.load %arg7[%c0_62, %c0_63, %c0_64] : memref<2x256x128xbf16, #tpu.memory_space<vmem>>, vector<1x256x128xbf16>
    %70 = vector.shape_cast %69 : vector<1x256x128xbf16> to vector<256x128xbf16>
    %cst_65 = arith.constant dense<0.000000e+00> : vector<18x128xf32>
    %71 = tpu.matmul %68, %70, %cst_65 {dimension_numbers = #tpu.dot_dimension_numbers<[1], [0], [0], [1], [0, 0, 1, 1], [], []>} : vector<18x256xbf16>, vector<256x128xbf16>, vector<18x128xf32> -> vector<18x128xf32>
    %c1_66 = arith.constant 1 : index
    %c0_67 = arith.constant 0 : index
    %c0_68 = arith.constant 0 : index
    %72 = vector.load %arg7[%c1_66, %c0_67, %c0_68] : memref<2x256x128xbf16, #tpu.memory_space<vmem>>, vector<1x256x128xbf16>
    %73 = vector.shape_cast %72 : vector<1x256x128xbf16> to vector<256x128xbf16>
    %cst_69 = arith.constant dense<0.000000e+00> : vector<18x128xf32>
    %74 = tpu.matmul %68, %73, %cst_69 {dimension_numbers = #tpu.dot_dimension_numbers<[1], [0], [0], [1], [0, 0, 1, 1], [], []>} : vector<18x256xbf16>, vector<256x128xbf16>, vector<18x128xf32> -> vector<18x128xf32>
    %75 = arith.maximumf %71, %74 : vector<18x128xf32>
    %76 = arith.truncf %75 : vector<18x128xf32> to vector<18x128xbf16>
    %c0_70 = arith.constant 0 : index
    %c0_71 = arith.constant 0 : index
    %c0_72 = arith.constant 0 : index
    %77 = vector.load %arg8[%c0_70, %c0_71, %c0_72] : memref<1x18x128xbf16, #tpu.memory_space<vmem>>, vector<1x18x128xbf16>
    %78 = vector.shape_cast %77 : vector<1x18x128xbf16> to vector<18x128xbf16>
    %79 = vector.shape_cast %76 : vector<18x128xbf16> to vector<1x18x128xbf16>
    tpu.vector_store %arg8[%c0_70, %c0_71, %c0_72], %79 {strides = array<i32>} : memref<1x18x128xbf16, #tpu.memory_space<vmem>>, vector<1x18x128xbf16>,
    return
  }
  func.func @transform_0(%arg0: i32) -> (i32, i32, i32) {
    %c0_i32 = arith.constant 0 : i32
    %c0_i32_0 = arith.constant 0 : i32
    %c0_i32_1 = arith.constant 0 : i32
    return %arg0, %c0_i32, %c0_i32_0 : i32, i32, i32
  }
  func.func @transform_1(%arg0: i32) -> (i32, i32, i32) {
    %c0_i32 = arith.constant 0 : i32
    %c0_i32_0 = arith.constant 0 : i32
    %c0_i32_1 = arith.constant 0 : i32
    %c0_i32_2 = arith.constant 0 : i32
    return %c0_i32, %c0_i32_0, %c0_i32_1 : i32, i32, i32
  }
  func.func @transform_2(%arg0: i32) -> (i32, i32, i32) {
    %c0_i32 = arith.constant 0 : i32
    %c0_i32_0 = arith.constant 0 : i32
    %c0_i32_1 = arith.constant 0 : i32
    %c0_i32_2 = arith.constant 0 : i32
    return %c0_i32, %c0_i32_0, %c0_i32_1 : i32, i32, i32
  }
  func.func @transform_3(%arg0: i32) -> (i32, i32, i32) {
    %c0_i32 = arith.constant 0 : i32
    %c0_i32_0 = arith.constant 0 : i32
    %c0_i32_1 = arith.constant 0 : i32
    %c0_i32_2 = arith.constant 0 : i32
    return %c0_i32, %c0_i32_0, %c0_i32_1 : i32, i32, i32
  }
  func.func @transform_4(%arg0: i32) -> (i32, i32, i32) {
    %c0_i32 = arith.constant 0 : i32
    %c0_i32_0 = arith.constant 0 : i32
    %c0_i32_1 = arith.constant 0 : i32
    %c0_i32_2 = arith.constant 0 : i32
    return %c0_i32, %c0_i32_0, %c0_i32_1 : i32, i32, i32
  }
  func.func @transform_5(%arg0: i32) -> (i32, i32, i32) {
    %c0_i32 = arith.constant 0 : i32
    %c0_i32_0 = arith.constant 0 : i32
    %c0_i32_1 = arith.constant 0 : i32
    %c0_i32_2 = arith.constant 0 : i32
    return %c0_i32, %c0_i32_0, %c0_i32_1 : i32, i32, i32
  }
  func.func @transform_6(%arg0: i32) -> (i32, i32, i32) {
    %c0_i32 = arith.constant 0 : i32
    %c0_i32_0 = arith.constant 0 : i32
    %c0_i32_1 = arith.constant 0 : i32
    %c0_i32_2 = arith.constant 0 : i32
    return %c0_i32, %c0_i32_0, %c0_i32_1 : i32, i32, i32
  }
  func.func @transform_7(%arg0: i32) -> (i32, i32, i32) {
    %c0_i32 = arith.constant 0 : i32
    %c0_i32_0 = arith.constant 0 : i32
    %c0_i32_1 = arith.constant 0 : i32
    return %arg0, %c0_i32, %c0_i32_0 : i32, i32, i32
  }
}

module attributes {stable_mosaic.version = 11 : i64} {
  func.func @_linear_kernel(%arg0: i32, %arg1: memref<2x512xbf16, #tpu.memory_space<vmem>>, %arg2: memref<512x128xbf16, #tpu.memory_space<vmem>>, %arg3: memref<1x128xf32, #tpu.memory_space<vmem>>, %arg4: memref<2x128xf32, #tpu.memory_space<vmem>>) attributes {dimension_semantics = [#tpu.dimension_semantics<arbitrary>], iteration_bounds = array<i64: 1>, scalar_prefetch = 0 : i64, scratch_operands = 0 : i64, tpu.core_type = #tpu.core_type<tc>, window_params = [{pipeline_mode = #tpu.pipeline_mode<synchronous>, transform_indices = @transform_0, window_bounds = array<i64: 2, 512>}, {pipeline_mode = #tpu.pipeline_mode<synchronous>, transform_indices = @transform_1, window_bounds = array<i64: 512, 128>}, {pipeline_mode = #tpu.pipeline_mode<synchronous>, transform_indices = @transform_2, window_bounds = array<i64: 1, 128>}, {pipeline_mode = #tpu.pipeline_mode<synchronous>, transform_indices = @transform_3, window_bounds = array<i64: 2, 128>}]} {
    %c0 = arith.constant 0 : index
    %c0_0 = arith.constant 0 : index
    %0 = vector.load %arg1[%c0, %c0_0] : memref<2x512xbf16, #tpu.memory_space<vmem>>, vector<2x512xbf16>
    %c0_1 = arith.constant 0 : index
    %c0_2 = arith.constant 0 : index
    %1 = vector.load %arg2[%c0_1, %c0_2] : memref<512x128xbf16, #tpu.memory_space<vmem>>, vector<512x128xbf16>
    %cst = arith.constant dense<0.000000e+00> : vector<2x128xf32>
    %2 = tpu.matmul %0, %1, %cst {dimension_numbers = #tpu.dot_dimension_numbers<[1], [0], [0], [1], [0, 0, 1, 1], [], []>} : vector<2x512xbf16>, vector<512x128xbf16>, vector<2x128xf32> -> vector<2x128xf32>
    %c0_3 = arith.constant 0 : index
    %c0_4 = arith.constant 0 : index
    %3 = vector.load %arg3[%c0_3, %c0_4] : memref<1x128xf32, #tpu.memory_space<vmem>>, vector<1x128xf32>
    %4 = vector.broadcast %3 : vector<1x128xf32> to vector<2x128xf32>
    %5 = arith.addf %2, %4 : vector<2x128xf32>
    %c0_5 = arith.constant 0 : index
    %c0_6 = arith.constant 0 : index
    %6 = vector.load %arg4[%c0_5, %c0_6] : memref<2x128xf32, #tpu.memory_space<vmem>>, vector<2x128xf32>
    tpu.vector_store %arg4[%c0_5, %c0_6], %5 {strides = array<i32>} : memref<2x128xf32, #tpu.memory_space<vmem>>, vector<2x128xf32>,
    return
  }
  func.func @transform_0(%arg0: i32) -> (i32, i32) {
    %c0_i32 = arith.constant 0 : i32
    %c0_i32_0 = arith.constant 0 : i32
    %c0_i32_1 = arith.constant 0 : i32
    return %c0_i32, %c0_i32_0 : i32, i32
  }
  func.func @transform_1(%arg0: i32) -> (i32, i32) {
    %c0_i32 = arith.constant 0 : i32
    %c0_i32_0 = arith.constant 0 : i32
    %c0_i32_1 = arith.constant 0 : i32
    return %c0_i32, %c0_i32_0 : i32, i32
  }
  func.func @transform_2(%arg0: i32) -> (i32, i32) {
    %c0_i32 = arith.constant 0 : i32
    %c0_i32_0 = arith.constant 0 : i32
    %c0_i32_1 = arith.constant 0 : i32
    return %c0_i32, %c0_i32_0 : i32, i32
  }
  func.func @transform_3(%arg0: i32) -> (i32, i32) {
    %c0_i32 = arith.constant 0 : i32
    %c0_i32_0 = arith.constant 0 : i32
    %c0_i32_1 = arith.constant 0 : i32
    return %c0_i32, %c0_i32_0 : i32, i32
  }
}

</mosaic_0001>

<llo_original>
// kernel: covid19_forward.5
$region0: #{covid19_forward.5}
  #allocation0 [shape = 'u32[]', space=smem, size = 0x4, offset = 0x4, fixed_abs, tag = 'smem constant byte address 0x4 - core index']
  #allocation1 [shape = 'u32[144,128]{1,0:T(1,128)}', space=vmem, size = 0x12000, scoped, tag = 'internal scratch']
  %s0 = inlined_call_operand.vmem [shape: bf16[2,512], index: 0, kind: input, shape index: {}]
  %s1 = inlined_call_operand.vmem [shape: bf16[512,128], index: 1, kind: input, shape index: {}]
  %s2 = inlined_call_operand.vmem [shape: f32[1,128], index: 2, kind: input, shape index: {}]
  %s3 = inlined_call_operand.hbm [shape: f32[2,128], index: 3, kind: output, shape index: {}]
  %s4 = sld [smem:[#allocation0]]
  $region22: #{covid19_forward.5} parent=0
    _
  %s6 = ssub.s32 1, %s4
  %s7 = scalar_select 0, %s6, %s4
  $region1: #{covid19_forward.5} parent=0
    #allocation2 [shape = 'u8[1024]{0}', space=vmem, size = 0x400, scoped, tag = 'output window, operand 0, single buffered']
    #allocation3 [shape = 's32[1]{0}', space=sflag, size = 0x4, scoped, tag = 'scoped memory for covid19_forward.5']
    %8 = vsyncpa [#allocation3], 0
    // Predicated region
    $region2: #{covid19_forward.5} parent=1 // pred_check
      _
    $region3: #{covid19_forward.5} parent=1 // pred_check_branch
      %10 = sbr.rel (0) target = $region5
    $region4: #{covid19_forward.5} parent=1 // pred_region
      _
    $region5: #{covid19_forward.5} parent=1 // pred_fallthru
      _
    // Predicated region
    $region6: #{covid19_forward.5} parent=1 // pred_check
      _
    $region7: #{covid19_forward.5} parent=1 // pred_check_branch
      %12 = sbr.rel (0) target = $region9
    $region8: #{covid19_forward.5} parent=1 // pred_region
      _
    $region9: #{covid19_forward.5} parent=1 // pred_fallthru
      _
    // Predicated region
    $region10: #{covid19_forward.5} parent=1 // pred_check
      _
    $region11: #{covid19_forward.5} parent=1 // pred_check_branch
      %14 = sbr.rel (0) target = $region13
    $region12: #{covid19_forward.5} parent=1 // pred_region
      _
    $region13: #{covid19_forward.5} parent=1 // pred_fallthru
      _
    %v16 = vld [vmem:[%s0] sm:$0xf]
    %v17 = vld [vmem:[%s1] sm:$0xf]
    %v18 = vld [vmem:[%s1 + $0x4] sm:$0xf]
    %v19 = vld [vmem:[%s1 + $0x8] sm:$0xf]
    %v20 = vld [vmem:[%s1 + $0xc] sm:$0xf]
    %v21 = vld [vmem:[%s1 + $0x10] sm:$0xf]
    %v22 = vld [vmem:[%s1 + $0x14] sm:$0xf]
    %v23 = vld [vmem:[%s1 + $0x18] sm:$0xf]
    %v24 = vld [vmem:[%s1 + $0x1c] sm:$0xf]
    %v25 = vld [vmem:[%s1 + $0x20] sm:$0xf]
    %v26 = vld [vmem:[%s1 + $0x24] sm:$0xf]
    %v27 = vld [vmem:[%s1 + $0x28] sm:$0xf]
    %v28 = vld [vmem:[%s1 + $0x2c] sm:$0xf]
    %v29 = vld [vmem:[%s1 + $0x30] sm:$0xf]
    %v30 = vld [vmem:[%s1 + $0x34] sm:$0xf]
    %v31 = vld [vmem:[%s1 + $0x38] sm:$0xf]
    %v32 = vld [vmem:[%s1 + $0x3c] sm:$0xf]
    %v33 = vld [vmem:[%s1 + $0x40] sm:$0xf]
    %v34 = vld [vmem:[%s1 + $0x44] sm:$0xf]
    %v35 = vld [vmem:[%s1 + $0x48] sm:$0xf]
    %v36 = vld [vmem:[%s1 + $0x4c] sm:$0xf]
    %v37 = vld [vmem:[%s1 + $0x50] sm:$0xf]
    %v38 = vld [vmem:[%s1 + $0x54] sm:$0xf]
    %v39 = vld [vmem:[%s1 + $0x58] sm:$0xf]
    %v40 = vld [vmem:[%s1 + $0x5c] sm:$0xf]
    %v41 = vld [vmem:[%s1 + $0x60] sm:$0xf]
    %v42 = vld [vmem:[%s1 + $0x64] sm:$0xf]
    %v43 = vld [vmem:[%s1 + $0x68] sm:$0xf]
    %v44 = vld [vmem:[%s1 + $0x6c] sm:$0xf]
    %v45 = vld [vmem:[%s1 + $0x70] sm:$0xf]
    %v46 = vld [vmem:[%s1 + $0x74] sm:$0xf]
    %v47 = vld [vmem:[%s1 + $0x78] sm:$0xf]
    %v48 = vld [vmem:[%s1 + $0x7c] sm:$0xf]
    %v49 = vld [vmem:[%s1 + $0x80] sm:$0xf]
    %v50 = vld [vmem:[%s1 + $0x84] sm:$0xf]
    %v51 = vld [vmem:[%s1 + $0x88] sm:$0xf]
    %v52 = vld [vmem:[%s1 + $0x8c] sm:$0xf]
    %v53 = vld [vmem:[%s1 + $0x90] sm:$0xf]
    %v54 = vld [vmem:[%s1 + $0x94] sm:$0xf]
    %v55 = vld [vmem:[%s1 + $0x98] sm:$0xf]
    %v56 = vld [vmem:[%s1 + $0x9c] sm:$0xf]
    %v57 = vld [vmem:[%s1 + $0xa0] sm:$0xf]
    %v58 = vld [vmem:[%s1 + $0xa4] sm:$0xf]
    %v59 = vld [vmem:[%s1 + $0xa8] sm:$0xf]
    %v60 = vld [vmem:[%s1 + $0xac] sm:$0xf]
    %v61 = vld [vmem:[%s1 + $0xb0] sm:$0xf]
    %v62 = vld [vmem:[%s1 + $0xb4] sm:$0xf]
    %v63 = vld [vmem:[%s1 + $0xb8] sm:$0xf]
    %v64 = vld [vmem:[%s1 + $0xbc] sm:$0xf]
    %v65 = vld [vmem:[%s1 + $0xc0] sm:$0xf]
    %v66 = vld [vmem:[%s1 + $0xc4] sm:$0xf]
    %v67 = vld [vmem:[%s1 + $0xc8] sm:$0xf]
    %v68 = vld [vmem:[%s1 + $0xcc] sm:$0xf]
    %v69 = vld [vmem:[%s1 + $0xd0] sm:$0xf]
    %v70 = vld [vmem:[%s1 + $0xd4] sm:$0xf]
    %v71 = vld [vmem:[%s1 + $0xd8] sm:$0xf]
    %v72 = vld [vmem:[%s1 + $0xdc] sm:$0xf]
    %v73 = vld [vmem:[%s1 + $0xe0] sm:$0xf]
    %v74 = vld [vmem:[%s1 + $0xe4] sm:$0xf]
    %v75 = vld [vmem:[%s1 + $0xe8] sm:$0xf]
    %v76 = vld [vmem:[%s1 + $0xec] sm:$0xf]
    %v77 = vld [vmem:[%s1 + $0xf0] sm:$0xf]
    %v78 = vld [vmem:[%s1 + $0xf4] sm:$0xf]
    %v79 = vld [vmem:[%s1 + $0xf8] sm:$0xf]
    %v80 = vld [vmem:[%s1 + $0xfc] sm:$0xf]
    %v81 = vld [vmem:[%s2] sm:$0x1]
    %v83 = vlaneseq
    %v84 = vshrl.u32 %v83, 7
    %v85 = vsub.s32 0, %v84
    %v86 = vrot.slane %v81, %v85
    %v90 = vunpack.c.l.s4 1966171168
    %v91 = vunpack.c.0.s8 %v90
    %v92 = vlaneseq
    %v93 = vshrl.u32 %v92, 7
    %v94 = vsub.s32 %v91, %v93
    %v95 = vrot.slane %v16, %v94
    %v96 = vcombine.high %v95, %v95
    %v98 = vunpack.c.l.s4 1966171168
    %v99 = vunpack.c.0.s8 %v98
    %v100 = vlaneseq
    %v101 = vshrl.u32 %v100, 7
    %v102 = vsub.s32 %v99, %v101
    %v103 = vrot.slane %v95, %v102
    %v105 = vunpack.c.l.s4 1966171168
    %v106 = vunpack.c.0.s8 %v105
    %v107 = vlaneseq
    %v108 = vshrl.u32 %v107, 7
    %v109 = vsub.s32 %v106, %v108
    %v110 = vrot.slane %v96, %v109
    %v111 = vcombine.high %v103, %v103
    %v112 = vcombine.high %v110, %v110
    %v181 = vunpack.c.l.b16 %v17
    %v182 = vunpack.c.l.b16 %v18
    %v183 = vunpack.c.l.b16 %v19
    %v184 = vunpack.c.l.b16 %v20
    %v185 = vunpack.c.l.b16 %v21
    %v186 = vunpack.c.l.b16 %v22
    %v187 = vunpack.c.l.b16 %v23
    %v188 = vunpack.c.l.b16 %v24
    %v189 = vunpack.c.l.b16 %v25
    %v190 = vunpack.c.l.b16 %v26
    %v191 = vunpack.c.l.b16 %v27
    %v192 = vunpack.c.l.b16 %v28
    %v193 = vunpack.c.l.b16 %v29
    %v194 = vunpack.c.l.b16 %v30
    %v195 = vunpack.c.l.b16 %v31
    %v196 = vunpack.c.l.b16 %v32
    %v197 = vunpack.c.l.b16 %v33
    %v198 = vunpack.c.l.b16 %v34
    %v199 = vunpack.c.l.b16 %v35
    %v200 = vunpack.c.l.b16 %v36
    %v201 = vunpack.c.l.b16 %v37
    %v202 = vunpack.c.l.b16 %v38
    %v203 = vunpack.c.l.b16 %v39
    %v204 = vunpack.c.l.b16 %v40
    %v205 = vunpack.c.l.b16 %v41
    %v206 = vunpack.c.l.b16 %v42
    %v207 = vunpack.c.l.b16 %v43
    %v208 = vunpack.c.l.b16 %v44
    %v209 = vunpack.c.l.b16 %v45
    %v210 = vunpack.c.l.b16 %v46
    %v211 = vunpack.c.l.b16 %v47
    %v212 = vunpack.c.l.b16 %v48
    %v213 = vunpack.c.l.b16 %v49
    %v214 = vunpack.c.l.b16 %v50
    %v215 = vunpack.c.l.b16 %v51
    %v216 = vunpack.c.l.b16 %v52
    %v217 = vunpack.c.l.b16 %v53
    %v218 = vunpack.c.l.b16 %v54
    %v219 = vunpack.c.l.b16 %v55
    %v220 = vunpack.c.l.b16 %v56
    %v221 = vunpack.c.l.b16 %v57
    %v222 = vunpack.c.l.b16 %v58
    %v223 = vunpack.c.l.b16 %v59
    %v224 = vunpack.c.l.b16 %v60
    %v225 = vunpack.c.l.b16 %v61
    %v226 = vunpack.c.l.b16 %v62
    %v227 = vunpack.c.l.b16 %v63
    %v228 = vunpack.c.l.b16 %v64
    %v229 = vunpack.c.l.b16 %v65
    %v230 = vunpack.c.l.b16 %v66
    %v231 = vunpack.c.l.b16 %v67
    %v232 = vunpack.c.l.b16 %v68
    %v233 = vunpack.c.l.b16 %v69
    %v234 = vunpack.c.l.b16 %v70
    %v235 = vunpack.c.l.b16 %v71
    %v236 = vunpack.c.l.b16 %v72
    %v237 = vunpack.c.l.b16 %v73
    %v238 = vunpack.c.l.b16 %v74
    %v239 = vunpack.c.l.b16 %v75
    %v240 = vunpack.c.l.b16 %v76
    %v241 = vunpack.c.l.b16 %v77
    %v242 = vunpack.c.l.b16 %v78
    %v243 = vunpack.c.l.b16 %v79
    %v244 = vunpack.c.l.b16 %v80
    %v245 = vpack.c.b16 %v182, %v181
    %v246 = vpack.c.b16 %v184, %v183
    %v247 = vpack.c.b16 %v186, %v185
    %v248 = vpack.c.b16 %v188, %v187
    %v249 = vpack.c.b16 %v190, %v189
    %v250 = vpack.c.b16 %v192, %v191
    %v251 = vpack.c.b16 %v194, %v193
    %v252 = vpack.c.b16 %v196, %v195
    %v253 = vpack.c.b16 %v198, %v197
    %v254 = vpack.c.b16 %v200, %v199
    %v255 = vpack.c.b16 %v202, %v201
    %v256 = vpack.c.b16 %v204, %v203
    %v257 = vpack.c.b16 %v206, %v205
    %v258 = vpack.c.b16 %v208, %v207
    %v259 = vpack.c.b16 %v210, %v209
    %v260 = vpack.c.b16 %v212, %v211
    %v261 = vpack.c.b16 %v214, %v213
    %v262 = vpack.c.b16 %v216, %v215
    %v263 = vpack.c.b16 %v218, %v217
    %v264 = vpack.c.b16 %v220, %v219
    %v265 = vpack.c.b16 %v222, %v221
    %v266 = vpack.c.b16 %v224, %v223
    %v267 = vpack.c.b16 %v226, %v225
    %v268 = vpack.c.b16 %v228, %v227
    %v269 = vpack.c.b16 %v230, %v229
    %v270 = vpack.c.b16 %v232, %v231
    %v271 = vpack.c.b16 %v234, %v233
    %v272 = vpack.c.b16 %v236, %v235
    %v273 = vpack.c.b16 %v238, %v237
    %v274 = vpack.c.b16 %v240, %v239
    %v275 = vpack.c.b16 %v242, %v241
    %v276 = vpack.c.b16 %v244, %v243
    %309 = vmatprep.subr.bf16.mxu0 0
    %310 = vmatpush1.bf16.msra.mxu0 %v252
    %311 = vmatprep.subr.bf16.mxu0 0
    %312 = vmatpush1.bf16.msra.mxu0 %v251
    %313 = vmatprep.subr.bf16.mxu0 0
    %314 = vmatpush1.bf16.msra.mxu0 %v250
    %315 = vmatprep.subr.bf16.mxu0 0
    %316 = vmatpush1.bf16.msra.mxu0 %v249
    %317 = vmatprep.subr.bf16.mxu0 0
    %318 = vmatpush1.bf16.msra.mxu0 %v248
    %319 = vmatprep.subr.bf16.mxu0 0
    %320 = vmatpush1.bf16.msra.mxu0 %v247
    %321 = vmatprep.subr.bf16.mxu0 0
    %322 = vmatpush1.bf16.msra.mxu0 %v246
    %323 = vmatprep.subr.bf16.mxu0 0
    %324 = vmatpush1.bf16.msra.mxu0 %v245
    %325 = vmatprep.subr.bf16.mxu0 0
    %326 = vmatpush2.bf16.msra.mxu0 %v260
    %327 = vmatprep.subr.bf16.mxu0 0
    %328 = vmatpush2.bf16.msra.mxu0 %v259
    %329 = vmatprep.subr.bf16.mxu0 0
    %330 = vmatpush2.bf16.msra.mxu0 %v258
    %331 = vmatprep.subr.bf16.mxu0 0
    %332 = vmatpush2.bf16.msra.mxu0 %v257
    %333 = vmatprep.subr.bf16.mxu0 0
    %334 = vmatpush2.bf16.msra.mxu0 %v256
    %335 = vmatprep.subr.bf16.mxu0 0
    %336 = vmatpush2.bf16.msra.mxu0 %v255
    %337 = vmatprep.subr.bf16.mxu0 0
    %338 = vmatpush2.bf16.msra.mxu0 %v254
    %339 = vmatprep.subr.bf16.mxu0 0
    %340 = vmatpush2.bf16.msra.mxu0 %v253
    %341 = vmatprep.mubr.bf16.mxu0 %v110
    %342 = vmatmul.mubr.bf16.gmra.mxu0 %v103
    %v343 = vpop.f32.mrf.mxu0
    %v344 = vadd.f32 %v86, %v343
    %v345 = vpop.f32.mrf.mxu0
    %v346 = vpop.f32.mrf.mxu0
    %v347 = vpop.f32.mrf.mxu0
    %348 = vdwg.mxu0
    %349 = vmatprep.subr.bf16.mxu0 0
    %350 = vmatpush1.bf16.msra.mxu0 %v268
    %351 = vmatprep.subr.bf16.mxu0 0
    %352 = vmatpush1.bf16.msra.mxu0 %v267
    %353 = vmatprep.subr.bf16.mxu0 0
    %354 = vmatpush1.bf16.msra.mxu0 %v266
    %355 = vmatprep.subr.bf16.mxu0 0
    %356 = vmatpush1.bf16.msra.mxu0 %v265
    %357 = vmatprep.subr.bf16.mxu0 0
    %358 = vmatpush1.bf16.msra.mxu0 %v264
    %359 = vmatprep.subr.bf16.mxu0 0
    %360 = vmatpush1.bf16.msra.mxu0 %v263
    %361 = vmatprep.subr.bf16.mxu0 0
    %362 = vmatpush1.bf16.msra.mxu0 %v262
    %363 = vmatprep.subr.bf16.mxu0 0
    %364 = vmatpush1.bf16.msra.mxu0 %v261
    %365 = vmatprep.subr.bf16.mxu0 0
    %366 = vmatpush2.bf16.msra.mxu0 %v276
    %367 = vmatprep.subr.bf16.mxu0 0
    %368 = vmatpush2.bf16.msra.mxu0 %v275
    %369 = vmatprep.subr.bf16.mxu0 0
    %370 = vmatpush2.bf16.msra.mxu0 %v274
    %371 = vmatprep.subr.bf16.mxu0 0
    %372 = vmatpush2.bf16.msra.mxu0 %v273
    %373 = vmatprep.subr.bf16.mxu0 0
    %374 = vmatpush2.bf16.msra.mxu0 %v272
    %375 = vmatprep.subr.bf16.mxu0 0
    %376 = vmatpush2.bf16.msra.mxu0 %v271
    %377 = vmatprep.subr.bf16.mxu0 0
    %378 = vmatpush2.bf16.msra.mxu0 %v270
    %379 = vmatprep.subr.bf16.mxu0 0
    %380 = vmatpush2.bf16.msra.mxu0 %v269
    %381 = vmatprep.mubr.bf16.mxu0 %v112
    %382 = vmatmul.mubr.bf16.gmra.mxu0 %v111
    %v383 = vpop.f32.mrf.mxu0
    %v384 = vadd.f32 %v344, %v383
    %v385 = vpop.f32.mrf.mxu0
    %v386 = vpop.f32.mrf.mxu0
    %v387 = vpop.f32.mrf.mxu0
    %388 = vdwg.mxu0
    %389 = vst [vmem:[#allocation2] sm:$0x3] %v384
    // Predicated region
    $region14: #{covid19_forward.5} parent=1 // pred_check
      _
    $region15: #{covid19_forward.5} parent=1 // pred_check_branch
      %391 = sbr.rel (0) target = $region17
    $region16: #{covid19_forward.5} parent=1 // pred_region
      %s393 = ssub.s32 32, 32
      %394 = vsyncadd [#allocation3], %s393
      %s396 = sshll.u32 [#allocation2], 4
      %s397 = int_to_ptr.vmem [resolvable:$true] %s396
      %399 = dma.vmem_to_hbm [thread:$0]  %s397, 32, %s3, [#allocation3]
    $region17: #{covid19_forward.5} parent=1 // pred_fallthru
      _
    // Predicated region
    $region18: #{covid19_forward.5} parent=1 // pred_check
      _
    $region19: #{covid19_forward.5} parent=1 // pred_check_branch
      %401 = sbr.rel (0) target = $region21
    $region20: #{covid19_forward.5} parent=1 // pred_region
      %402 = dma.done [#allocation3], 32
    $region21: #{covid19_forward.5} parent=1 // pred_fallthru
      _
    %403 = vsyncpa [#allocation3], 1

// kernel: covid19_forward.4
$region0: #{covid19_forward.4}
  #allocation0 [shape = 'u32[]', space=smem, size = 0x4, offset = 0x4, fixed_abs, tag = 'smem constant byte address 0x4 - core index']
  #allocation1 [shape = 'u32[144,128]{1,0:T(1,128)}', space=vmem, size = 0x12000, scoped, tag = 'internal scratch']
  #allocation2 [shape = 'bf16[48,128]{1,0:T(8,128)(2,1)}', space=vmem, size = 0x3000, scoped, tag = 'scratch operand']
  %s0 = inlined_call_operand.vmem [shape: bf16[2,18,128], index: 0, kind: input, shape index: {}]
  %s1 = inlined_call_operand.vmem [shape: bf16[3,128,128], index: 1, kind: input, shape index: {}]
  %s2 = inlined_call_operand.vmem [shape: f32[3,1,128], index: 2, kind: input, shape index: {}]
  %s3 = inlined_call_operand.vmem [shape: bf16[3,128,128], index: 3, kind: input, shape index: {}]
  %s4 = inlined_call_operand.vmem [shape: f32[3,1,128], index: 4, kind: input, shape index: {}]
  %s5 = inlined_call_operand.vmem [shape: bf16[2,8,16], index: 5, kind: input, shape index: {}]
  %s6 = inlined_call_operand.vmem [shape: bf16[2,128,64], index: 6, kind: input, shape index: {}]
  %s7 = inlined_call_operand.vmem [shape: bf16[2,8,64], index: 7, kind: output, shape index: {}]
  %s8 = sld [smem:[#allocation0]]
  $region61: #{covid19_forward.4} parent=0
    _
  %s10 = ssub.s32 1, %s8
  %s11 = scalar_select 0, %s10, %s8
  loop: start=0, step=1, limit=4
  $region2: #{covid19_forward.4} parent=0 // loop_pre_header
    _
  $region3: #{covid19_forward.4} parent=0 // loop_header
    %s13 = sphi 0, %s17
    %p14 = scmp.ge.s32.totalorder %s13, 4
    %s23 = sphi 0, %s25
    %s26 = sphi 0, %s23
    %s27 = sphi 0, %s26
    %s43 = sphi 0, %s27
    %s47 = sphi 0, %s47
    %s49 = sphi 0, %s47
    %s50 = sphi 0, %s49
    %s64 = sphi 0, %s50
    %s68 = sphi 0, %s68
    %s70 = sphi 0, %s68
    %s71 = sphi 0, %s70
    %s85 = sphi 0, %s71
    %s89 = sphi 0, %s89
    %s91 = sphi 0, %s89
    %s92 = sphi 0, %s91
    %s106 = sphi 0, %s92
    %s110 = sphi 0, %s110
    %s112 = sphi 0, %s110
    %s113 = sphi 0, %s112
    %s127 = sphi 0, %s113
    %s131 = sphi 0, %s131
    %s133 = sphi 0, %s131
    %s134 = sphi 0, %s133
    %s148 = sphi 0, %s134
    %s152 = sphi 0, %s152
    %s154 = sphi 0, %s152
    %s155 = sphi 0, %s154
    %s169 = sphi 0, %s155
    %s175 = sphi 0, %s177
    %s178 = sphi 0, %s175
    %s179 = sphi 0, %s178
    %s195 = sphi 0, %s179
  $region4: #{covid19_forward.4} parent=0 // loop_header_branch
    %16 = sbr.rel (%p14) target = $region8
  $region5: #{covid19_forward.4} parent=0 // loop_body
    %s18 = ssub.s32 %s13, 1
    %s19 = ssub.s32 %s13, 2
    %s20 = sadd.s32 %s13, 1
    %s21 = ssub.s32 %s13, %s20
    %p22 = scmp.eq.s32.totalorder %s21, 0
    %s24 = sadd.s32 %s23, 1
    %s25 = scalar_select %p22, %s23, %s24
    %p28 = pneg %p22
    %p29 = scmp.eq.s32.totalorder %s13, 1
    %p30 = por %p28, %p29
    %p31 = scmp.ne.s32.totalorder %s23, %s26
    %p32 = scmp.eq.s32.totalorder %s13, 0
    %p33 = por %p31, %p32
    %p34 = scmp.ne.s32.totalorder %s23, %s26
    %p35 = scmp.eq.s32.totalorder %s18, 1
    %p36 = por %p34, %p35
    %p37 = scmp.ne.s32.totalorder %s26, %s27
    %p38 = scmp.eq.s32.totalorder %s18, 0
    %p39 = por %p37, %p38
    %p40 = scmp.ne.s32.totalorder %s26, %s27
    %p41 = scmp.eq.s32.totalorder %s19, 1
    %p42 = por %p40, %p41
    %p44 = scmp.ne.s32.totalorder %s27, %s43
    %p45 = scmp.eq.s32.totalorder %s19, 0
    %p46 = por %p44, %p45
    %s48 = sadd.s32 %s47, 1
    %p51 = scmp.eq.s32.totalorder %s13, 1
    %p52 = scmp.ne.s32.totalorder %s47, %s49
    %p53 = scmp.eq.s32.totalorder %s13, 0
    %p54 = por %p52, %p53
    %p55 = scmp.ne.s32.totalorder %s47, %s49
    %p56 = scmp.eq.s32.totalorder %s18, 1
    %p57 = por %p55, %p56
    %p58 = scmp.ne.s32.totalorder %s49, %s50
    %p59 = scmp.eq.s32.totalorder %s18, 0
    %p60 = por %p58, %p59
    %p61 = scmp.ne.s32.totalorder %s49, %s50
    %p62 = scmp.eq.s32.totalorder %s19, 1
    %p63 = por %p61, %p62
    %p65 = scmp.ne.s32.totalorder %s50, %s64
    %p66 = scmp.eq.s32.totalorder %s19, 0
    %p67 = por %p65, %p66
    %s69 = sadd.s32 %s68, 1
    %p72 = scmp.eq.s32.totalorder %s13, 1
    %p73 = scmp.ne.s32.totalorder %s68, %s70
    %p74 = scmp.eq.s32.totalorder %s13, 0
    %p75 = por %p73, %p74
    %p76 = scmp.ne.s32.totalorder %s68, %s70
    %p77 = scmp.eq.s32.totalorder %s18, 1
    %p78 = por %p76, %p77
    %p79 = scmp.ne.s32.totalorder %s70, %s71
    %p80 = scmp.eq.s32.totalorder %s18, 0
    %p81 = por %p79, %p80
    %p82 = scmp.ne.s32.totalorder %s70, %s71
    %p83 = scmp.eq.s32.totalorder %s19, 1
    %p84 = por %p82, %p83
    %p86 = scmp.ne.s32.totalorder %s71, %s85
    %p87 = scmp.eq.s32.totalorder %s19, 0
    %p88 = por %p86, %p87
    %s90 = sadd.s32 %s89, 1
    %p93 = scmp.eq.s32.totalorder %s13, 1
    %p94 = scmp.ne.s32.totalorder %s89, %s91
    %p95 = scmp.eq.s32.totalorder %s13, 0
    %p96 = por %p94, %p95
    %p97 = scmp.ne.s32.totalorder %s89, %s91
    %p98 = scmp.eq.s32.totalorder %s18, 1
    %p99 = por %p97, %p98
    %p100 = scmp.ne.s32.totalorder %s91, %s92
    %p101 = scmp.eq.s32.totalorder %s18, 0
    %p102 = por %p100, %p101
    %p103 = scmp.ne.s32.totalorder %s91, %s92
    %p104 = scmp.eq.s32.totalorder %s19, 1
    %p105 = por %p103, %p104
    %p107 = scmp.ne.s32.totalorder %s92, %s106
    %p108 = scmp.eq.s32.totalorder %s19, 0
    %p109 = por %p107, %p108
    %s111 = sadd.s32 %s110, 1
    %p114 = scmp.eq.s32.totalorder %s13, 1
    %p115 = scmp.ne.s32.totalorder %s110, %s112
    %p116 = scmp.eq.s32.totalorder %s13, 0
    %p117 = por %p115, %p116
    %p118 = scmp.ne.s32.totalorder %s110, %s112
    %p119 = scmp.eq.s32.totalorder %s18, 1
    %p120 = por %p118, %p119
    %p121 = scmp.ne.s32.totalorder %s112, %s113
    %p122 = scmp.eq.s32.totalorder %s18, 0
    %p123 = por %p121, %p122
    %p124 = scmp.ne.s32.totalorder %s112, %s113
    %p125 = scmp.eq.s32.totalorder %s19, 1
    %p126 = por %p124, %p125
    %p128 = scmp.ne.s32.totalorder %s113, %s127
    %p129 = scmp.eq.s32.totalorder %s19, 0
    %p130 = por %p128, %p129
    %s132 = sadd.s32 %s131, 1
    %p135 = scmp.eq.s32.totalorder %s13, 1
    %p136 = scmp.ne.s32.totalorder %s131, %s133
    %p137 = scmp.eq.s32.totalorder %s13, 0
    %p138 = por %p136, %p137
    %p139 = scmp.ne.s32.totalorder %s131, %s133
    %p140 = scmp.eq.s32.totalorder %s18, 1
    %p141 = por %p139, %p140
    %p142 = scmp.ne.s32.totalorder %s133, %s134
    %p143 = scmp.eq.s32.totalorder %s18, 0
    %p144 = por %p142, %p143
    %p145 = scmp.ne.s32.totalorder %s133, %s134
    %p146 = scmp.eq.s32.totalorder %s19, 1
    %p147 = por %p145, %p146
    %p149 = scmp.ne.s32.totalorder %s134, %s148
    %p150 = scmp.eq.s32.totalorder %s19, 0
    %p151 = por %p149, %p150
    %s153 = sadd.s32 %s152, 1
    %p156 = scmp.eq.s32.totalorder %s13, 1
    %p157 = scmp.ne.s32.totalorder %s152, %s154
    %p158 = scmp.eq.s32.totalorder %s13, 0
    %p159 = por %p157, %p158
    %p160 = scmp.ne.s32.totalorder %s152, %s154
    %p161 = scmp.eq.s32.totalorder %s18, 1
    %p162 = por %p160, %p161
    %p163 = scmp.ne.s32.totalorder %s154, %s155
    %p164 = scmp.eq.s32.totalorder %s18, 0
    %p165 = por %p163, %p164
    %p166 = scmp.ne.s32.totalorder %s154, %s155
    %p167 = scmp.eq.s32.totalorder %s19, 1
    %p168 = por %p166, %p167
    %p170 = scmp.ne.s32.totalorder %s155, %s169
    %p171 = scmp.eq.s32.totalorder %s19, 0
    %p172 = por %p170, %p171
    %s173 = ssub.s32 %s13, %s20
    %p174 = scmp.eq.s32.totalorder %s173, 0
    %s176 = sadd.s32 %s175, 1
    %s177 = scalar_select %p174, %s175, %s176
    %p180 = pneg %p174
    %p181 = scmp.eq.s32.totalorder %s13, 1
    %p182 = por %p180, %p181
    %p183 = scmp.ne.s32.totalorder %s175, %s178
    %p184 = scmp.eq.s32.totalorder %s13, 0
    %p185 = por %p183, %p184
    %p186 = scmp.ne.s32.totalorder %s175, %s178
    %p187 = scmp.eq.s32.totalorder %s18, 1
    %p188 = por %p186, %p187
    %p189 = scmp.ne.s32.totalorder %s178, %s179
    %p190 = scmp.eq.s32.totalorder %s18, 0
    %p191 = por %p189, %p190
    %p192 = scmp.ne.s32.totalorder %s178, %s179
    %p193 = scmp.eq.s32.totalorder %s19, 1
    %p194 = por %p192, %p193
    %p196 = scmp.ne.s32.totalorder %s179, %s195
    %p197 = scmp.eq.s32.totalorder %s19, 0
    %p198 = por %p196, %p197
    %p199 = scmp.le.s32.totalorder 1, %s13
    %p200 = scmp.lt.s32.totalorder %s13, 3
    %p201 = pnand %p199, %p200
    %p202 = pneg %p201
    // Predicated region
    $region9: #{covid19_forward.4} parent=5 // pred_check
      _
    $region10: #{covid19_forward.4} parent=5 // pred_check_branch
      %204 = sbr.rel (%p201) target = $region12
    $region11: #{covid19_forward.4} parent=5 // pred_region
      %s205 = ssub.s32 %s13, 1
      // Predicated region
      $region13: #{covid19_forward.4} parent=11 // pred_check
        %p206 = pneg %p60
      $region14: #{covid19_forward.4} parent=11 // pred_check_branch
        %208 = sbr.rel (%p206) target = $region16
      $region15: #{covid19_forward.4} parent=11 // pred_region
        _
      $region16: #{covid19_forward.4} parent=11 // pred_fallthru
        _
      // Predicated region
      $region17: #{covid19_forward.4} parent=11 // pred_check
        %p209 = pneg %p81
      $region18: #{covid19_forward.4} parent=11 // pred_check_branch
        %211 = sbr.rel (%p209) target = $region20
      $region19: #{covid19_forward.4} parent=11 // pred_region
        _
      $region20: #{covid19_forward.4} parent=11 // pred_fallthru
        _
      // Predicated region
      $region21: #{covid19_forward.4} parent=11 // pred_check
        %p212 = pneg %p102
      $region22: #{covid19_forward.4} parent=11 // pred_check_branch
        %214 = sbr.rel (%p212) target = $region24
      $region23: #{covid19_forward.4} parent=11 // pred_region
        _
      $region24: #{covid19_forward.4} parent=11 // pred_fallthru
        _
      // Predicated region
      $region25: #{covid19_forward.4} parent=11 // pred_check
        %p215 = pneg %p123
      $region26: #{covid19_forward.4} parent=11 // pred_check_branch
        %217 = sbr.rel (%p215) target = $region28
      $region27: #{covid19_forward.4} parent=11 // pred_region
        _
      $region28: #{covid19_forward.4} parent=11 // pred_fallthru
        _
      // Predicated region
      $region29: #{covid19_forward.4} parent=11 // pred_check
        %p218 = pneg %p144
      $region30: #{covid19_forward.4} parent=11 // pred_check_branch
        %220 = sbr.rel (%p218) target = $region32
      $region31: #{covid19_forward.4} parent=11 // pred_region
        _
      $region32: #{covid19_forward.4} parent=11 // pred_fallthru
        _
      // Predicated region
      $region33: #{covid19_forward.4} parent=11 // pred_check
        %p221 = pneg %p165
      $region34: #{covid19_forward.4} parent=11 // pred_check_branch
        %223 = sbr.rel (%p221) target = $region36
      $region35: #{covid19_forward.4} parent=11 // pred_region
        _
      $region36: #{covid19_forward.4} parent=11 // pred_fallthru
        _
    $region12: #{covid19_forward.4} parent=5 // pred_fallthru
      _
    %p224 = scmp.lt.s32.totalorder %s13, 2
    // Predicated region
    $region37: #{covid19_forward.4} parent=5 // pred_check
      %p225 = pneg %p224
    $region38: #{covid19_forward.4} parent=5 // pred_check_branch
      %227 = sbr.rel (%p225) target = $region40
    $region39: #{covid19_forward.4} parent=5 // pred_region
      // Predicated region
      $region41: #{covid19_forward.4} parent=39 // pred_check
        %p228 = pneg %p33
      $region42: #{covid19_forward.4} parent=39 // pred_check_branch
        %230 = sbr.rel (%p228) target = $region44
      $region43: #{covid19_forward.4} parent=39 // pred_region
        %p231 = scmp.lt.s32.totalorder %s13, 1
        %s232 = scalar_select %p231, %s13, 1
        %s233 = smul.addr %s232, 3
        %s234 = smul.addr %s233, 4
        %s235 = scalar_lea.vmem %s0, %s234
      $region44: #{covid19_forward.4} parent=39 // pred_fallthru
        _
    $region40: #{covid19_forward.4} parent=5 // pred_fallthru
      _
    %p236 = scmp.le.s32.totalorder 1, %s13
    %p237 = scmp.lt.s32.totalorder %s13, 3
    %p238 = pnand %p236, %p237
    %p239 = pneg %p238
    // Predicated region
    $region45: #{covid19_forward.4} parent=5 // pred_check
      _
    $region46: #{covid19_forward.4} parent=5 // pred_check_branch
      %241 = sbr.rel (%p238) target = $region48
    $region47: #{covid19_forward.4} parent=5 // pred_region
      %s242 = ssub.s32 %s13, 1
      %p243 = scmp.lt.s32.totalorder %s18, 1
      %s244 = scalar_select %p243, %s18, 1
      %s245 = smul.addr %s244, 3
      %s246 = smul.addr %s245, 4
      %s247 = scalar_lea.vmem %s0, %s246
      %p248 = pneg %p39
      %p249 = pneg %p36
      %p250 = pneg %p60
      %p251 = pneg %p57
      %p252 = pneg %p81
      %p253 = pneg %p78
      %p254 = pneg %p102
      %p255 = pneg %p99
      %p256 = pneg %p123
      %p257 = pneg %p120
      %p258 = pneg %p144
      %p259 = pneg %p141
      %p260 = pneg %p165
      %p261 = pneg %p162
      %p262 = pneg %p191
      %p263 = pneg %p188
      %p264 = scmp.lt.s32.totalorder %s18, 1
      %s265 = scalar_select %p264, %s18, 1
      %s266 = smul.addr %s265, 4
      %s267 = scalar_lea.vmem %s7, %s266
      %p268 = scmp.lt.s32.totalorder %s18, 1
      %s269 = scalar_select %p268, %s18, 1
      %s270 = smul.addr %s269, 3
      %s271 = smul.addr %s270, 4
      %s272 = scalar_lea.vmem %s0, %s271
      %p273 = scmp.lt.s32.totalorder %s18, 1
      %s274 = scalar_select %p273, %s18, 1
      %s275 = smul.addr %s274, 4
      %s276 = scalar_lea.vmem %s7, %s275
      %v278 = vld [vmem:[%s272] sm:$0xf]
      %v279 = vld [vmem:[%s272 + $0x4] sm:$0xf]
      %v280 = vld [vmem:[%s1] sm:$0xf]
      %v281 = vld [vmem:[%s1 + $0x4] sm:$0xf]
      %v282 = vld [vmem:[%s1 + $0x8] sm:$0xf]
      %v283 = vld [vmem:[%s1 + $0xc] sm:$0xf]
      %v284 = vld [vmem:[%s1 + $0x10] sm:$0xf]
      %v285 = vld [vmem:[%s1 + $0x14] sm:$0xf]
      %v286 = vld [vmem:[%s1 + $0x18] sm:$0xf]
      %v287 = vld [vmem:[%s1 + $0x1c] sm:$0xf]
      %v288 = vld [vmem:[%s1 + $0x20] sm:$0xf]
      %v289 = vld [vmem:[%s1 + $0x24] sm:$0xf]
      %v290 = vld [vmem:[%s1 + $0x28] sm:$0xf]
      %v291 = vld [vmem:[%s1 + $0x2c] sm:$0xf]
      %v292 = vld [vmem:[%s1 + $0x30] sm:$0xf]
      %v293 = vld [vmem:[%s1 + $0x34] sm:$0xf]
      %v294 = vld [vmem:[%s1 + $0x38] sm:$0xf]
      %v295 = vld [vmem:[%s1 + $0x3c] sm:$0xf]
      %v296 = vld [vmem:[%s272 + $0x8] sm:$0x1]
      %s297 = scalar_lea.vmem %s1, 64
      %v298 = vld [vmem:[%s297] sm:$0xf]
      %v299 = vld [vmem:[%s297 + $0x4] sm:$0xf]
      %v300 = vld [vmem:[%s297 + $0x8] sm:$0xf]
      %v301 = vld [vmem:[%s297 + $0xc] sm:$0xf]
      %v302 = vld [vmem:[%s297 + $0x10] sm:$0xf]
      %v303 = vld [vmem:[%s297 + $0x14] sm:$0xf]
      %v304 = vld [vmem:[%s297 + $0x18] sm:$0xf]
      %v305 = vld [vmem:[%s297 + $0x1c] sm:$0xf]
      %v306 = vld [vmem:[%s297 + $0x20] sm:$0xf]
      %v307 = vld [vmem:[%s297 + $0x24] sm:$0xf]
      %v308 = vld [vmem:[%s297 + $0x28] sm:$0xf]
      %v309 = vld [vmem:[%s297 + $0x2c] sm:$0xf]
      %v310 = vld [vmem:[%s297 + $0x30] sm:$0xf]
      %v311 = vld [vmem:[%s297 + $0x34] sm:$0xf]
      %v312 = vld [vmem:[%s297 + $0x38] sm:$0xf]
      %v313 = vld [vmem:[%s297 + $0x3c] sm:$0xf]
      %v317 = vunpack.c.l.b16 %v278
      %v318 = vunpack.c.l.b16 %v279
      %v319 = vunpack.c.l.b16 %v296
      %v320 = vpack.c.b16 %v318, %v317
      %v321 = vpack.c.b16 %v319, %v319
      %vm322 = vsmask.f32 7424
      %v324 = vshrl.u32 %v320, 16
      %v326 = vshll.u32 %v320, 16
      %v328 = vrot.slane %v326, 1
      %v329 = vor.u32 %v324, %v328
      %v331 = vshll.u32 %v321, 16
      %v333 = vrot.slane %v331, 1
      %v334 = vsel %vm322, %v329, %v333
      %v352 = vunpack.c.l.b16 %v298
      %v353 = vunpack.c.l.b16 %v299
      %v354 = vunpack.c.l.b16 %v300
      %v355 = vunpack.c.l.b16 %v301
      %v356 = vunpack.c.l.b16 %v302
      %v357 = vunpack.c.l.b16 %v303
      %v358 = vunpack.c.l.b16 %v304
      %v359 = vunpack.c.l.b16 %v305
      %v360 = vunpack.c.l.b16 %v306
      %v361 = vunpack.c.l.b16 %v307
      %v362 = vunpack.c.l.b16 %v308
      %v363 = vunpack.c.l.b16 %v309
      %v364 = vunpack.c.l.b16 %v310
      %v365 = vunpack.c.l.b16 %v311
      %v366 = vunpack.c.l.b16 %v312
      %v367 = vunpack.c.l.b16 %v313
      %v368 = vpack.c.b16 %v353, %v352
      %v369 = vpack.c.b16 %v355, %v354
      %v370 = vpack.c.b16 %v357, %v356
      %v371 = vpack.c.b16 %v359, %v358
      %v372 = vpack.c.b16 %v361, %v360
      %v373 = vpack.c.b16 %v363, %v362
      %v374 = vpack.c.b16 %v365, %v364
      %v375 = vpack.c.b16 %v367, %v366
      %384 = vmatprep.subr.bf16.mxu0 0
      %385 = vmatpush1.bf16.msra.mxu0 %v375
      %386 = vmatprep.subr.bf16.mxu0 0
      %387 = vmatpush1.bf16.msra.mxu0 %v374
      %388 = vmatprep.subr.bf16.mxu0 0
      %389 = vmatpush1.bf16.msra.mxu0 %v373
      %390 = vmatprep.subr.bf16.mxu0 0
      %391 = vmatpush1.bf16.msra.mxu0 %v372
      %392 = vmatprep.subr.bf16.mxu0 0
      %393 = vmatpush1.bf16.msra.mxu0 %v371
      %394 = vmatprep.subr.bf16.mxu0 0
      %395 = vmatpush1.bf16.msra.mxu0 %v370
      %396 = vmatprep.subr.bf16.mxu0 0
      %397 = vmatpush1.bf16.msra.mxu0 %v369
      %398 = vmatprep.subr.bf16.mxu0 0
      %399 = vmatpush1.bf16.msra.mxu0 %v368
      %400 = vmatprep.subr.bf16.mxu0 0
      %401 = vmatpush2.bf16.msra.mxu0 0
      %402 = vmatprep.subr.bf16.mxu0 0
      %403 = vmatpush2.bf16.msra.mxu0 0
      %404 = vmatprep.subr.bf16.mxu0 0
      %405 = vmatpush2.bf16.msra.mxu0 0
      %406 = vmatprep.subr.bf16.mxu0 0
      %407 = vmatpush2.bf16.msra.mxu0 0
      %408 = vmatprep.subr.bf16.mxu0 0
      %409 = vmatpush2.bf16.msra.mxu0 0
      %410 = vmatprep.subr.bf16.mxu0 0
      %411 = vmatpush2.bf16.msra.mxu0 0
      %412 = vmatprep.subr.bf16.mxu0 0
      %413 = vmatpush2.bf16.msra.mxu0 0
      %414 = vmatprep.subr.bf16.mxu0 0
      %415 = vmatpush2.bf16.msra.mxu0 0
      %416 = vmatprep.mubr.bf16.mxu0 0
      %417 = vmatmul.mubr.bf16.gmra.mxu0 %v334
      %v418 = vpop.f32.mrf.mxu0
      %v419 = vadd.f32 0.0, %v418
      %v420 = vpop.f32.mrf.mxu0
      %v421 = vpop.f32.mrf.mxu0
      %v422 = vadd.f32 0.0, %v421
      %v423 = vpop.f32.mrf.mxu0
      %424 = vdwg.mxu0
      %v442 = vunpack.c.l.b16 %v280
      %v443 = vunpack.c.l.b16 %v281
      %v444 = vunpack.c.l.b16 %v282
      %v445 = vunpack.c.l.b16 %v283
      %v446 = vunpack.c.l.b16 %v284
      %v447 = vunpack.c.l.b16 %v285
      %v448 = vunpack.c.l.b16 %v286
      %v449 = vunpack.c.l.b16 %v287
      %v450 = vunpack.c.l.b16 %v288
      %v451 = vunpack.c.l.b16 %v289
      %v452 = vunpack.c.l.b16 %v290
      %v453 = vunpack.c.l.b16 %v291
      %v454 = vunpack.c.l.b16 %v292
      %v455 = vunpack.c.l.b16 %v293
      %v456 = vunpack.c.l.b16 %v294
      %v457 = vunpack.c.l.b16 %v295
      %v458 = vpack.c.b16 %v443, %v442
      %v459 = vpack.c.b16 %v445, %v444
      %v460 = vpack.c.b16 %v447, %v446
      %v461 = vpack.c.b16 %v449, %v448
      %v462 = vpack.c.b16 %v451, %v450
      %v463 = vpack.c.b16 %v453, %v452
      %v464 = vpack.c.b16 %v455, %v454
      %v465 = vpack.c.b16 %v457, %v456
      %474 = vmatprep.subr.bf16.mxu0 0
      %475 = vmatpush1.bf16.msra.mxu0 %v465
      %476 = vmatprep.subr.bf16.mxu0 0
      %477 = vmatpush1.bf16.msra.mxu0 %v464
      %478 = vmatprep.subr.bf16.mxu0 0
      %479 = vmatpush1.bf16.msra.mxu0 %v463
      %480 = vmatprep.subr.bf16.mxu0 0
      %481 = vmatpush1.bf16.msra.mxu0 %v462
      %482 = vmatprep.subr.bf16.mxu0 0
      %483 = vmatpush1.bf16.msra.mxu0 %v461
      %484 = vmatprep.subr.bf16.mxu0 0
      %485 = vmatpush1.bf16.msra.mxu0 %v460
      %486 = vmatprep.subr.bf16.mxu0 0
      %487 = vmatpush1.bf16.msra.mxu0 %v459
      %488 = vmatprep.subr.bf16.mxu0 0
      %489 = vmatpush1.bf16.msra.mxu0 %v458
      %490 = vmatprep.subr.bf16.mxu0 0
      %491 = vmatpush2.bf16.msra.mxu0 0
      %492 = vmatprep.subr.bf16.mxu0 0
      %493 = vmatpush2.bf16.msra.mxu0 0
      %494 = vmatprep.subr.bf16.mxu0 0
      %495 = vmatpush2.bf16.msra.mxu0 0
      %496 = vmatprep.subr.bf16.mxu0 0
      %497 = vmatpush2.bf16.msra.mxu0 0
      %498 = vmatprep.subr.bf16.mxu0 0
      %499 = vmatpush2.bf16.msra.mxu0 0
      %500 = vmatprep.subr.bf16.mxu0 0
      %501 = vmatpush2.bf16.msra.mxu0 0
      %502 = vmatprep.subr.bf16.mxu0 0
      %503 = vmatpush2.bf16.msra.mxu0 0
      %504 = vmatprep.subr.bf16.mxu0 0
      %505 = vmatpush2.bf16.msra.mxu0 0
      %506 = vmatprep.mubr.bf16.mxu0 0
      %507 = vmatmul.mubr.bf16.gmra.mxu0 %v320
      %v508 = vpop.f32.mrf.mxu0
      %v509 = vadd.f32 %v419, %v508
      %v510 = vpop.f32.mrf.mxu0
      %v511 = vpop.f32.mrf.mxu0
      %v512 = vadd.f32 %v422, %v511
      %v513 = vpop.f32.mrf.mxu0
      %514 = vdwg.mxu0
      %v515 = vld [vmem:[%s272] sm:$0xe]
      %s516 = scalar_lea.vmem %s1, 128
      %v517 = vld [vmem:[%s516] sm:$0xf]
      %v518 = vld [vmem:[%s516 + $0x4] sm:$0xf]
      %v519 = vld [vmem:[%s516 + $0x8] sm:$0xf]
      %v520 = vld [vmem:[%s516 + $0xc] sm:$0xf]
      %v521 = vld [vmem:[%s516 + $0x10] sm:$0xf]
      %v522 = vld [vmem:[%s516 + $0x14] sm:$0xf]
      %v523 = vld [vmem:[%s516 + $0x18] sm:$0xf]
      %v524 = vld [vmem:[%s516 + $0x1c] sm:$0xf]
      %v525 = vld [vmem:[%s516 + $0x20] sm:$0xf]
      %v526 = vld [vmem:[%s516 + $0x24] sm:$0xf]
      %v527 = vld [vmem:[%s516 + $0x28] sm:$0xf]
      %v528 = vld [vmem:[%s516 + $0x2c] sm:$0xf]
      %v529 = vld [vmem:[%s516 + $0x30] sm:$0xf]
      %v530 = vld [vmem:[%s516 + $0x34] sm:$0xf]
      %v531 = vld [vmem:[%s516 + $0x38] sm:$0xf]
      %v532 = vld [vmem:[%s516 + $0x3c] sm:$0xf]
      %v534 = vunpack.c.l.b16 %v515
      %v535 = vpack.c.b16 %v318, %v534
      %vm536 = vcmask 1046528
      %v537 = vrot.slane %v535, 1
      %v538 = vrot.slane %v321, 1
      %v539 = vsel %vm536, %v537, %v538
      %v557 = vunpack.c.l.b16 %v517
      %v558 = vunpack.c.l.b16 %v518
      %v559 = vunpack.c.l.b16 %v519
      %v560 = vunpack.c.l.b16 %v520
      %v561 = vunpack.c.l.b16 %v521
      %v562 = vunpack.c.l.b16 %v522
      %v563 = vunpack.c.l.b16 %v523
      %v564 = vunpack.c.l.b16 %v524
      %v565 = vunpack.c.l.b16 %v525
      %v566 = vunpack.c.l.b16 %v526
      %v567 = vunpack.c.l.b16 %v527
      %v568 = vunpack.c.l.b16 %v528
      %v569 = vunpack.c.l.b16 %v529
      %v570 = vunpack.c.l.b16 %v530
      %v571 = vunpack.c.l.b16 %v531
      %v572 = vunpack.c.l.b16 %v532
      %v573 = vpack.c.b16 %v558, %v557
      %v574 = vpack.c.b16 %v560, %v559
      %v575 = vpack.c.b16 %v562, %v561
      %v576 = vpack.c.b16 %v564, %v563
      %v577 = vpack.c.b16 %v566, %v565
      %v578 = vpack.c.b16 %v568, %v567
      %v579 = vpack.c.b16 %v570, %v569
      %v580 = vpack.c.b16 %v572, %v571
      %589 = vmatprep.subr.bf16.mxu0 0
      %590 = vmatpush1.bf16.msra.mxu0 %v580
      %591 = vmatprep.subr.bf16.mxu0 0
      %592 = vmatpush1.bf16.msra.mxu0 %v579
      %593 = vmatprep.subr.bf16.mxu0 0
      %594 = vmatpush1.bf16.msra.mxu0 %v578
      %595 = vmatprep.subr.bf16.mxu0 0
      %596 = vmatpush1.bf16.msra.mxu0 %v577
      %597 = vmatprep.subr.bf16.mxu0 0
      %598 = vmatpush1.bf16.msra.mxu0 %v576
      %599 = vmatprep.subr.bf16.mxu0 0
      %600 = vmatpush1.bf16.msra.mxu0 %v575
      %601 = vmatprep.subr.bf16.mxu0 0
      %602 = vmatpush1.bf16.msra.mxu0 %v574
      %603 = vmatprep.subr.bf16.mxu0 0
      %604 = vmatpush1.bf16.msra.mxu0 %v573
      %605 = vmatprep.subr.bf16.mxu0 0
      %606 = vmatpush2.bf16.msra.mxu0 0
      %607 = vmatprep.subr.bf16.mxu0 0
      %608 = vmatpush2.bf16.msra.mxu0 0
      %609 = vmatprep.subr.bf16.mxu0 0
      %610 = vmatpush2.bf16.msra.mxu0 0
      %611 = vmatprep.subr.bf16.mxu0 0
      %612 = vmatpush2.bf16.msra.mxu0 0
      %613 = vmatprep.subr.bf16.mxu0 0
      %614 = vmatpush2.bf16.msra.mxu0 0
      %615 = vmatprep.subr.bf16.mxu0 0
      %616 = vmatpush2.bf16.msra.mxu0 0
      %617 = vmatprep.subr.bf16.mxu0 0
      %618 = vmatpush2.bf16.msra.mxu0 0
      %619 = vmatprep.subr.bf16.mxu0 0
      %620 = vmatpush2.bf16.msra.mxu0 0
      %621 = vmatprep.mubr.bf16.mxu0 0
      %622 = vmatmul.mubr.bf16.gmra.mxu0 %v539
      %v623 = vpop.f32.mrf.mxu0
      %v624 = vadd.f32 0.0, %v623
      %v625 = vpop.f32.mrf.mxu0
      %v626 = vpop.f32.mrf.mxu0
      %v627 = vadd.f32 0.0, %v626
      %v628 = vpop.f32.mrf.mxu0
      %629 = vdwg.mxu0
      %v630 = vadd.f32 %v509, %v624
      %v631 = vadd.f32 %v512, %v627
      %v632 = vld [vmem:[%s2] sm:$0x1]
      %v634 = vlaneseq
      %v635 = vshrl.u32 %v634, 7
      %v636 = vsub.s32 0, %v635
      %v637 = vrot.slane %v632, %v636
      %v639 = vadd.f32 %v630, %v637
      %v640 = vadd.f32 %v631, %v637
      %v641 = vmax.f32 %v639, 0.0
      %v642 = vmax.f32 %v640, 0.0
      %s643 = scalar_lea.vmem %s2, 1
      %v644 = vld [vmem:[%s643] sm:$0x1]
      %v646 = vlaneseq
      %v647 = vshrl.u32 %v646, 7
      %v648 = vsub.s32 0, %v647
      %v649 = vrot.slane %v644, %v648
      %v651 = vmul.f32 %v641, %v649
      %v652 = vmul.f32 %v642, %v649
      %s653 = scalar_lea.vmem %s2, 2
      %v654 = vld [vmem:[%s653] sm:$0x1]
      %v656 = vlaneseq
      %v657 = vshrl.u32 %v656, 7
      %v658 = vsub.s32 0, %v657
      %v659 = vrot.slane %v654, %v658
      %v661 = vadd.f32 %v651, %v659
      %v662 = vadd.f32 %v652, %v659
      %v663 = vpack.c.bf16 %v662, %v661
      %664 = vst [vmem:[#allocation2] sm:$0xf] 0
      %665 = vst [vmem:[#allocation2 + $0x4] sm:$0xf] 0
      %666 = vst [vmem:[#allocation2 + $0x10] sm:$0xf] 0
      %667 = vst [vmem:[#allocation2 + $0x14] sm:$0xf] 0
      %v669 = vunpack.c.l.b16 %v663
      %v670 = vunpack.c.h.b16 %v663
      %v671 = vpack.c.b16 %v669, %v669
      %v672 = vpack.c.b16 %v670, %v670
      %675 = vst [vmem:[#allocation2 + $0x8] sm:$0xf] %v671
      %676 = vst [vmem:[#allocation2 + $0xc] sm:$0xf] %v672
      %v677 = vld [vmem:[#allocation2 + $0x4] sm:$0x8]
      %v678 = vld [vmem:[#allocation2 + $0x8] sm:$0xf]
      %v679 = vld [vmem:[#allocation2 + $0xc] sm:$0xf]
      %v680 = vld [vmem:[%s3] sm:$0xf]
      %v681 = vld [vmem:[%s3 + $0x4] sm:$0xf]
      %v682 = vld [vmem:[%s3 + $0x8] sm:$0xf]
      %v683 = vld [vmem:[%s3 + $0xc] sm:$0xf]
      %v684 = vld [vmem:[%s3 + $0x10] sm:$0xf]
      %v685 = vld [vmem:[%s3 + $0x14] sm:$0xf]
      %v686 = vld [vmem:[%s3 + $0x18] sm:$0xf]
      %v687 = vld [vmem:[%s3 + $0x1c] sm:$0xf]
      %v688 = vld [vmem:[%s3 + $0x20] sm:$0xf]
      %v689 = vld [vmem:[%s3 + $0x24] sm:$0xf]
      %v690 = vld [vmem:[%s3 + $0x28] sm:$0xf]
      %v691 = vld [vmem:[%s3 + $0x2c] sm:$0xf]
      %v692 = vld [vmem:[%s3 + $0x30] sm:$0xf]
      %v693 = vld [vmem:[%s3 + $0x34] sm:$0xf]
      %v694 = vld [vmem:[%s3 + $0x38] sm:$0xf]
      %v695 = vld [vmem:[%s3 + $0x3c] sm:$0xf]
      %s696 = scalar_lea.vmem %s3, 64
      %v697 = vld [vmem:[%s696] sm:$0xf]
      %v698 = vld [vmem:[%s696 + $0x4] sm:$0xf]
      %v699 = vld [vmem:[%s696 + $0x8] sm:$0xf]
      %v700 = vld [vmem:[%s696 + $0xc] sm:$0xf]
      %v701 = vld [vmem:[%s696 + $0x10] sm:$0xf]
      %v702 = vld [vmem:[%s696 + $0x14] sm:$0xf]
      %v703 = vld [vmem:[%s696 + $0x18] sm:$0xf]
      %v704 = vld [vmem:[%s696 + $0x1c] sm:$0xf]
      %v705 = vld [vmem:[%s696 + $0x20] sm:$0xf]
      %v706 = vld [vmem:[%s696 + $0x24] sm:$0xf]
      %v707 = vld [vmem:[%s696 + $0x28] sm:$0xf]
      %v708 = vld [vmem:[%s696 + $0x2c] sm:$0xf]
      %v709 = vld [vmem:[%s696 + $0x30] sm:$0xf]
      %v710 = vld [vmem:[%s696 + $0x34] sm:$0xf]
      %v711 = vld [vmem:[%s696 + $0x38] sm:$0xf]
      %v712 = vld [vmem:[%s696 + $0x3c] sm:$0xf]
      %v715 = vunpack.c.l.b16 %v678
      %v716 = vunpack.c.l.b16 %v679
      %v717 = vpack.c.b16 %v716, %v715
      %v735 = vunpack.c.l.b16 %v697
      %v736 = vunpack.c.l.b16 %v698
      %v737 = vunpack.c.l.b16 %v699
      %v738 = vunpack.c.l.b16 %v700
      %v739 = vunpack.c.l.b16 %v701
      %v740 = vunpack.c.l.b16 %v702
      %v741 = vunpack.c.l.b16 %v703
      %v742 = vunpack.c.l.b16 %v704
      %v743 = vunpack.c.l.b16 %v705
      %v744 = vunpack.c.l.b16 %v706
      %v745 = vunpack.c.l.b16 %v707
      %v746 = vunpack.c.l.b16 %v708
      %v747 = vunpack.c.l.b16 %v709
      %v748 = vunpack.c.l.b16 %v710
      %v749 = vunpack.c.l.b16 %v711
      %v750 = vunpack.c.l.b16 %v712
      %v751 = vpack.c.b16 %v736, %v735
      %v752 = vpack.c.b16 %v738, %v737
      %v753 = vpack.c.b16 %v740, %v739
      %v754 = vpack.c.b16 %v742, %v741
      %v755 = vpack.c.b16 %v744, %v743
      %v756 = vpack.c.b16 %v746, %v745
      %v757 = vpack.c.b16 %v748, %v747
      %v758 = vpack.c.b16 %v750, %v749
      %767 = vmatprep.subr.bf16.mxu0 0
      %768 = vmatpush1.bf16.msra.mxu0 %v758
      %769 = vmatprep.subr.bf16.mxu0 0
      %770 = vmatpush1.bf16.msra.mxu0 %v757
      %771 = vmatprep.subr.bf16.mxu0 0
      %772 = vmatpush1.bf16.msra.mxu0 %v756
      %773 = vmatprep.subr.bf16.mxu0 0
      %774 = vmatpush1.bf16.msra.mxu0 %v755
      %775 = vmatprep.subr.bf16.mxu0 0
      %776 = vmatpush1.bf16.msra.mxu0 %v754
      %777 = vmatprep.subr.bf16.mxu0 0
      %778 = vmatpush1.bf16.msra.mxu0 %v753
      %779 = vmatprep.subr.bf16.mxu0 0
      %780 = vmatpush1.bf16.msra.mxu0 %v752
      %781 = vmatprep.subr.bf16.mxu0 0
      %782 = vmatpush1.bf16.msra.mxu0 %v751
      %783 = vmatprep.subr.bf16.mxu0 0
      %784 = vmatpush2.bf16.msra.mxu0 0
      %785 = vmatprep.subr.bf16.mxu0 0
      %786 = vmatpush2.bf16.msra.mxu0 0
      %787 = vmatprep.subr.bf16.mxu0 0
      %788 = vmatpush2.bf16.msra.mxu0 0
      %789 = vmatprep.subr.bf16.mxu0 0
      %790 = vmatpush2.bf16.msra.mxu0 0
      %791 = vmatprep.subr.bf16.mxu0 0
      %792 = vmatpush2.bf16.msra.mxu0 0
      %793 = vmatprep.subr.bf16.mxu0 0
      %794 = vmatpush2.bf16.msra.mxu0 0
      %795 = vmatprep.subr.bf16.mxu0 0
      %796 = vmatpush2.bf16.msra.mxu0 0
      %797 = vmatprep.subr.bf16.mxu0 0
      %798 = vmatpush2.bf16.msra.mxu0 0
      %799 = vmatprep.mubr.bf16.mxu0 0
      %800 = vmatmul.mubr.bf16.gmra.mxu0 %v717
      %v801 = vpop.f32.mrf.mxu0
      %v802 = vadd.f32 0.0, %v801
      %v803 = vpop.f32.mrf.mxu0
      %v804 = vpop.f32.mrf.mxu0
      %v805 = vadd.f32 0.0, %v804
      %v806 = vpop.f32.mrf.mxu0
      %807 = vdwg.mxu0
      %v809 = vunpack.c.l.b16 %v677
      %v810 = vpack.c.b16 %v715, %v809
      %v811 = vpack.c.b16 %v716, %v716
      %vm812 = vsmask.f32 4352
      %v814 = vshrl.u32 %v810, 16
      %v816 = vrot.slane %v814, 3
      %v817 = vshll.u32 %v810, 16
      %v819 = vrot.slane %v817, 4
      %v820 = vor.u32 %v816, %v819
      %v822 = vshrl.u32 %v811, 16
      %v824 = vrot.slane %v822, 3
      %v825 = vshll.u32 %v811, 16
      %v827 = vrot.slane %v825, 4
      %v828 = vor.u32 %v824, %v827
      %v829 = vsel %vm812, %v820, %v828
      %v847 = vunpack.c.l.b16 %v680
      %v848 = vunpack.c.l.b16 %v681
      %v849 = vunpack.c.l.b16 %v682
      %v850 = vunpack.c.l.b16 %v683
      %v851 = vunpack.c.l.b16 %v684
      %v852 = vunpack.c.l.b16 %v685
      %v853 = vunpack.c.l.b16 %v686
      %v854 = vunpack.c.l.b16 %v687
      %v855 = vunpack.c.l.b16 %v688
      %v856 = vunpack.c.l.b16 %v689
      %v857 = vunpack.c.l.b16 %v690
      %v858 = vunpack.c.l.b16 %v691
      %v859 = vunpack.c.l.b16 %v692
      %v860 = vunpack.c.l.b16 %v693
      %v861 = vunpack.c.l.b16 %v694
      %v862 = vunpack.c.l.b16 %v695
      %v863 = vpack.c.b16 %v848, %v847
      %v864 = vpack.c.b16 %v850, %v849
      %v865 = vpack.c.b16 %v852, %v851
      %v866 = vpack.c.b16 %v854, %v853
      %v867 = vpack.c.b16 %v856, %v855
      %v868 = vpack.c.b16 %v858, %v857
      %v869 = vpack.c.b16 %v860, %v859
      %v870 = vpack.c.b16 %v862, %v861
      %879 = vmatprep.subr.bf16.mxu0 0
      %880 = vmatpush1.bf16.msra.mxu0 %v870
      %881 = vmatprep.subr.bf16.mxu0 0
      %882 = vmatpush1.bf16.msra.mxu0 %v869
      %883 = vmatprep.subr.bf16.mxu0 0
      %884 = vmatpush1.bf16.msra.mxu0 %v868
      %885 = vmatprep.subr.bf16.mxu0 0
      %886 = vmatpush1.bf16.msra.mxu0 %v867
      %887 = vmatprep.subr.bf16.mxu0 0
      %888 = vmatpush1.bf16.msra.mxu0 %v866
      %889 = vmatprep.subr.bf16.mxu0 0
      %890 = vmatpush1.bf16.msra.mxu0 %v865
      %891 = vmatprep.subr.bf16.mxu0 0
      %892 = vmatpush1.bf16.msra.mxu0 %v864
      %893 = vmatprep.subr.bf16.mxu0 0
      %894 = vmatpush1.bf16.msra.mxu0 %v863
      %895 = vmatprep.subr.bf16.mxu0 0
      %896 = vmatpush2.bf16.msra.mxu0 0
      %897 = vmatprep.subr.bf16.mxu0 0
      %898 = vmatpush2.bf16.msra.mxu0 0
      %899 = vmatprep.subr.bf16.mxu0 0
      %900 = vmatpush2.bf16.msra.mxu0 0
      %901 = vmatprep.subr.bf16.mxu0 0
      %902 = vmatpush2.bf16.msra.mxu0 0
      %903 = vmatprep.subr.bf16.mxu0 0
      %904 = vmatpush2.bf16.msra.mxu0 0
      %905 = vmatprep.subr.bf16.mxu0 0
      %906 = vmatpush2.bf16.msra.mxu0 0
      %907 = vmatprep.subr.bf16.mxu0 0
      %908 = vmatpush2.bf16.msra.mxu0 0
      %909 = vmatprep.subr.bf16.mxu0 0
      %910 = vmatpush2.bf16.msra.mxu0 0
      %911 = vmatprep.mubr.bf16.mxu0 0
      %912 = vmatmul.mubr.bf16.gmra.mxu0 %v829
      %v913 = vpop.f32.mrf.mxu0
      %v914 = vadd.f32 %v802, %v913
      %v915 = vpop.f32.mrf.mxu0
      %v916 = vpop.f32.mrf.mxu0
      %v917 = vadd.f32 %v805, %v916
      %v918 = vpop.f32.mrf.mxu0
      %919 = vdwg.mxu0
      %v920 = vld [vmem:[#allocation2 + $0x8] sm:$0xf]
      %v921 = vld [vmem:[#allocation2 + $0xc] sm:$0xf]
      %v922 = vld [vmem:[#allocation2 + $0x10] sm:$0x1]
      %s923 = scalar_lea.vmem %s3, 128
      %v924 = vld [vmem:[%s923] sm:$0xf]
      %v925 = vld [vmem:[%s923 + $0x4] sm:$0xf]
      %v926 = vld [vmem:[%s923 + $0x8] sm:$0xf]
      %v927 = vld [vmem:[%s923 + $0xc] sm:$0xf]
      %v928 = vld [vmem:[%s923 + $0x10] sm:$0xf]
      %v929 = vld [vmem:[%s923 + $0x14] sm:$0xf]
      %v930 = vld [vmem:[%s923 + $0x18] sm:$0xf]
      %v931 = vld [vmem:[%s923 + $0x1c] sm:$0xf]
      %v932 = vld [vmem:[%s923 + $0x20] sm:$0xf]
      %v933 = vld [vmem:[%s923 + $0x24] sm:$0xf]
      %v934 = vld [vmem:[%s923 + $0x28] sm:$0xf]
      %v935 = vld [vmem:[%s923 + $0x2c] sm:$0xf]
      %v936 = vld [vmem:[%s923 + $0x30] sm:$0xf]
      %v937 = vld [vmem:[%s923 + $0x34] sm:$0xf]
      %v938 = vld [vmem:[%s923 + $0x38] sm:$0xf]
      %v939 = vld [vmem:[%s923 + $0x3c] sm:$0xf]
      %v943 = vunpack.c.l.b16 %v920
      %v944 = vunpack.c.l.b16 %v921
      %v945 = vunpack.c.l.b16 %v922
      %v946 = vpack.c.b16 %v944, %v943
      %v947 = vpack.c.b16 %v945, %v945
      %v949 = vshrl.u32 %v946, 16
      %v951 = vshll.u32 %v946, 16
      %v953 = vrot.slane %v951, 1
      %v954 = vor.u32 %v949, %v953
      %v956 = vshll.u32 %v947, 16
      %v958 = vrot.slane %v956, 1
      %v959 = vsel %vm322, %v954, %v958
      %v977 = vunpack.c.l.b16 %v924
      %v978 = vunpack.c.l.b16 %v925
      %v979 = vunpack.c.l.b16 %v926
      %v980 = vunpack.c.l.b16 %v927
      %v981 = vunpack.c.l.b16 %v928
      %v982 = vunpack.c.l.b16 %v929
      %v983 = vunpack.c.l.b16 %v930
      %v984 = vunpack.c.l.b16 %v931
      %v985 = vunpack.c.l.b16 %v932
      %v986 = vunpack.c.l.b16 %v933
      %v987 = vunpack.c.l.b16 %v934
      %v988 = vunpack.c.l.b16 %v935
      %v989 = vunpack.c.l.b16 %v936
      %v990 = vunpack.c.l.b16 %v937
      %v991 = vunpack.c.l.b16 %v938
      %v992 = vunpack.c.l.b16 %v939
      %v993 = vpack.c.b16 %v978, %v977
      %v994 = vpack.c.b16 %v980, %v979
      %v995 = vpack.c.b16 %v982, %v981
      %v996 = vpack.c.b16 %v984, %v983
      %v997 = vpack.c.b16 %v986, %v985
      %v998 = vpack.c.b16 %v988, %v987
      %v999 = vpack.c.b16 %v990, %v989
      %v1000 = vpack.c.b16 %v992, %v991
      %1009 = vmatprep.subr.bf16.mxu0 0
      %1010 = vmatpush1.bf16.msra.mxu0 %v1000
      %1011 = vmatprep.subr.bf16.mxu0 0
      %1012 = vmatpush1.bf16.msra.mxu0 %v999
      %1013 = vmatprep.subr.bf16.mxu0 0
      %1014 = vmatpush1.bf16.msra.mxu0 %v998
      %1015 = vmatprep.subr.bf16.mxu0 0
      %1016 = vmatpush1.bf16.msra.mxu0 %v997
      %1017 = vmatprep.subr.bf16.mxu0 0
      %1018 = vmatpush1.bf16.msra.mxu0 %v996
      %1019 = vmatprep.subr.bf16.mxu0 0
      %1020 = vmatpush1.bf16.msra.mxu0 %v995
      %1021 = vmatprep.subr.bf16.mxu0 0
      %1022 = vmatpush1.bf16.msra.mxu0 %v994
      %1023 = vmatprep.subr.bf16.mxu0 0
      %1024 = vmatpush1.bf16.msra.mxu0 %v993
      %1025 = vmatprep.subr.bf16.mxu0 0
      %1026 = vmatpush2.bf16.msra.mxu0 0
      %1027 = vmatprep.subr.bf16.mxu0 0
      %1028 = vmatpush2.bf16.msra.mxu0 0
      %1029 = vmatprep.subr.bf16.mxu0 0
      %1030 = vmatpush2.bf16.msra.mxu0 0
      %1031 = vmatprep.subr.bf16.mxu0 0
      %1032 = vmatpush2.bf16.msra.mxu0 0
      %1033 = vmatprep.subr.bf16.mxu0 0
      %1034 = vmatpush2.bf16.msra.mxu0 0
      %1035 = vmatprep.subr.bf16.mxu0 0
      %1036 = vmatpush2.bf16.msra.mxu0 0
      %1037 = vmatprep.subr.bf16.mxu0 0
      %1038 = vmatpush2.bf16.msra.mxu0 0
      %1039 = vmatprep.subr.bf16.mxu0 0
      %1040 = vmatpush2.bf16.msra.mxu0 0
      %1041 = vmatprep.mubr.bf16.mxu0 0
      %1042 = vmatmul.mubr.bf16.gmra.mxu0 %v959
      %v1043 = vpop.f32.mrf.mxu0
      %v1044 = vadd.f32 0.0, %v1043
      %v1045 = vpop.f32.mrf.mxu0
      %v1046 = vpop.f32.mrf.mxu0
      %v1047 = vadd.f32 0.0, %v1046
      %v1048 = vpop.f32.mrf.mxu0
      %1049 = vdwg.mxu0
      %v1050 = vadd.f32 %v914, %v1044
      %v1051 = vadd.f32 %v917, %v1047
      %v1052 = vld [vmem:[%s4] sm:$0x1]
      %v1054 = vlaneseq
      %v1055 = vshrl.u32 %v1054, 7
      %v1056 = vsub.s32 0, %v1055
      %v1057 = vrot.slane %v1052, %v1056
      %v1059 = vadd.f32 %v1050, %v1057
      %v1060 = vadd.f32 %v1051, %v1057
      %v1061 = vmax.f32 %v1059, 0.0
      %v1062 = vmax.f32 %v1060, 0.0
      %s1063 = scalar_lea.vmem %s4, 1
      %v1064 = vld [vmem:[%s1063] sm:$0x1]
      %v1066 = vlaneseq
      %v1067 = vshrl.u32 %v1066, 7
      %v1068 = vsub.s32 0, %v1067
      %v1069 = vrot.slane %v1064, %v1068
      %v1071 = vmul.f32 %v1061, %v1069
      %v1072 = vmul.f32 %v1062, %v1069
      %s1073 = scalar_lea.vmem %s4, 2
      %v1074 = vld [vmem:[%s1073] sm:$0x1]
      %v1076 = vlaneseq
      %v1077 = vshrl.u32 %v1076, 7
      %v1078 = vsub.s32 0, %v1077
      %v1079 = vrot.slane %v1074, %v1078
      %v1081 = vadd.f32 %v1071, %v1079
      %v1082 = vadd.f32 %v1072, %v1079
      %v1083 = vpack.c.bf16 %v1082, %v1081
      %v1084 = vld [vmem:[%s5] sm:$0xf]
      %vm1085 = vcmask 130048
      %v1087 = vsel %vm1085, %v1084, 0
      %1089 = vmatprep.subr.bf16.mxu0 0
      %1090 = vmatpush1.bf16.msra.mxu0 0
      %1091 = vmatprep.subr.bf16.mxu0 0
      %1092 = vmatpush1.bf16.msra.mxu0 0
      %1093 = vmatprep.subr.bf16.mxu0 0
      %1094 = vmatpush1.bf16.msra.mxu0 0
      %1095 = vmatprep.subr.bf16.mxu0 0
      %1096 = vmatpush1.bf16.msra.mxu0 0
      %1097 = vmatprep.subr.bf16.mxu0 0
      %1098 = vmatpush1.bf16.msra.mxu0 0
      %1099 = vmatprep.subr.bf16.mxu0 0
      %1100 = vmatpush1.bf16.msra.mxu0 0
      %1101 = vmatprep.subr.bf16.mxu0 0
      %1102 = vmatpush1.bf16.msra.mxu0 0
      %1103 = vmatprep.subr.bf16.mxu0 0
      %1104 = vmatpush1.bf16.msra.mxu0 %v1083
      %1105 = vmatprep.subr.bf16.mxu0 0
      %1106 = vmatpush2.bf16.msra.mxu0 0
      %1107 = vmatprep.subr.bf16.mxu0 0
      %1108 = vmatpush2.bf16.msra.mxu0 0
      %1109 = vmatprep.subr.bf16.mxu0 0
      %1110 = vmatpush2.bf16.msra.mxu0 0
      %1111 = vmatprep.subr.bf16.mxu0 0
      %1112 = vmatpush2.bf16.msra.mxu0 0
      %1113 = vmatprep.subr.bf16.mxu0 0
      %1114 = vmatpush2.bf16.msra.mxu0 0
      %1115 = vmatprep.subr.bf16.mxu0 0
      %1116 = vmatpush2.bf16.msra.mxu0 0
      %1117 = vmatprep.subr.bf16.mxu0 0
      %1118 = vmatpush2.bf16.msra.mxu0 0
      %1119 = vmatprep.subr.bf16.mxu0 0
      %1120 = vmatpush2.bf16.msra.mxu0 0
      %1121 = vmatprep.mubr.bf16.mxu0 0
      %1122 = vmatmul.mubr.bf16.gmra.mxu0 %v1087
      %v1123 = vpop.f32.mrf.mxu0
      %v1124 = vadd.f32 0.0, %v1123
      %v1125 = vpop.f32.mrf.mxu0
      %v1126 = vpop.f32.mrf.mxu0
      %v1127 = vpop.f32.mrf.mxu0
      %1128 = vdwg.mxu0
      %s1129 = scalar_lea.vmem %s5, 4
      %v1130 = vld [vmem:[%s1129] sm:$0xf]
      %v1132 = vsel %vm1085, %v1130, 0
      %1134 = vmatprep.subr.bf16.mxu0 0
      %1135 = vmatpush1.bf16.msra.mxu0 0
      %1136 = vmatprep.subr.bf16.mxu0 0
      %1137 = vmatpush1.bf16.msra.mxu0 0
      %1138 = vmatprep.subr.bf16.mxu0 0
      %1139 = vmatpush1.bf16.msra.mxu0 0
      %1140 = vmatprep.subr.bf16.mxu0 0
      %1141 = vmatpush1.bf16.msra.mxu0 0
      %1142 = vmatprep.subr.bf16.mxu0 0
      %1143 = vmatpush1.bf16.msra.mxu0 0
      %1144 = vmatprep.subr.bf16.mxu0 0
      %1145 = vmatpush1.bf16.msra.mxu0 0
      %1146 = vmatprep.subr.bf16.mxu0 0
      %1147 = vmatpush1.bf16.msra.mxu0 0
      %1148 = vmatprep.subr.bf16.mxu0 0
      %1149 = vmatpush1.bf16.msra.mxu0 %v1083
      %1150 = vmatprep.subr.bf16.mxu0 0
      %1151 = vmatpush2.bf16.msra.mxu0 0
      %1152 = vmatprep.subr.bf16.mxu0 0
      %1153 = vmatpush2.bf16.msra.mxu0 0
      %1154 = vmatprep.subr.bf16.mxu0 0
      %1155 = vmatpush2.bf16.msra.mxu0 0
      %1156 = vmatprep.subr.bf16.mxu0 0
      %1157 = vmatpush2.bf16.msra.mxu0 0
      %1158 = vmatprep.subr.bf16.mxu0 0
      %1159 = vmatpush2.bf16.msra.mxu0 0
      %1160 = vmatprep.subr.bf16.mxu0 0
      %1161 = vmatpush2.bf16.msra.mxu0 0
      %1162 = vmatprep.subr.bf16.mxu0 0
      %1163 = vmatpush2.bf16.msra.mxu0 0
      %1164 = vmatprep.subr.bf16.mxu0 0
      %1165 = vmatpush2.bf16.msra.mxu0 0
      %1166 = vmatprep.mubr.bf16.mxu0 0
      %1167 = vmatmul.mubr.bf16.gmra.mxu0 %v1132
      %v1168 = vpop.f32.mrf.mxu0
      %v1169 = vadd.f32 0.0, %v1168
      %v1170 = vpop.f32.mrf.mxu0
      %v1171 = vpop.f32.mrf.mxu0
      %v1172 = vpop.f32.mrf.mxu0
      %1173 = vdwg.mxu0
      %v1174 = vmax.f32 %v1124, %v1169
      %v1175 = vpack.c.bf16 %v1174, %v1174
      %v1176 = vld [vmem:[%s6] sm:$0xf]
      %v1177 = vld [vmem:[%s6 + $0x4] sm:$0xf]
      %v1178 = vld [vmem:[%s6 + $0x8] sm:$0xf]
      %v1179 = vld [vmem:[%s6 + $0xc] sm:$0xf]
      %v1180 = vld [vmem:[%s6 + $0x10] sm:$0xf]
      %v1181 = vld [vmem:[%s6 + $0x14] sm:$0xf]
      %v1182 = vld [vmem:[%s6 + $0x18] sm:$0xf]
      %v1183 = vld [vmem:[%s6 + $0x1c] sm:$0xf]
      %v1184 = vld [vmem:[%s6 + $0x20] sm:$0xf]
      %v1185 = vld [vmem:[%s6 + $0x24] sm:$0xf]
      %v1186 = vld [vmem:[%s6 + $0x28] sm:$0xf]
      %v1187 = vld [vmem:[%s6 + $0x2c] sm:$0xf]
      %v1188 = vld [vmem:[%s6 + $0x30] sm:$0xf]
      %v1189 = vld [vmem:[%s6 + $0x34] sm:$0xf]
      %v1190 = vld [vmem:[%s6 + $0x38] sm:$0xf]
      %v1191 = vld [vmem:[%s6 + $0x3c] sm:$0xf]
      %v1208 = vunpack.c.l.b16 %v1176
      %v1209 = vunpack.c.l.b16 %v1177
      %v1210 = vunpack.c.l.b16 %v1178
      %v1211 = vunpack.c.l.b16 %v1179
      %v1212 = vunpack.c.l.b16 %v1180
      %v1213 = vunpack.c.l.b16 %v1181
      %v1214 = vunpack.c.l.b16 %v1182
      %v1215 = vunpack.c.l.b16 %v1183
      %v1216 = vunpack.c.l.b16 %v1184
      %v1217 = vunpack.c.l.b16 %v1185
      %v1218 = vunpack.c.l.b16 %v1186
      %v1219 = vunpack.c.l.b16 %v1187
      %v1220 = vunpack.c.l.b16 %v1188
      %v1221 = vunpack.c.l.b16 %v1189
      %v1222 = vunpack.c.l.b16 %v1190
      %v1223 = vunpack.c.l.b16 %v1191
      %v1224 = vpack.c.b16 %v1209, %v1208
      %v1225 = vpack.c.b16 %v1211, %v1210
      %v1226 = vpack.c.b16 %v1213, %v1212
      %v1227 = vpack.c.b16 %v1215, %v1214
      %v1228 = vpack.c.b16 %v1217, %v1216
      %v1229 = vpack.c.b16 %v1219, %v1218
      %v1230 = vpack.c.b16 %v1221, %v1220
      %v1231 = vpack.c.b16 %v1223, %v1222
      %1240 = vmatprep.subr.bf16.mxu0 0
      %1241 = vmatpush1.bf16.msra.mxu0 %v1231
      %1242 = vmatprep.subr.bf16.mxu0 0
      %1243 = vmatpush1.bf16.msra.mxu0 %v1230
      %1244 = vmatprep.subr.bf16.mxu0 0
      %1245 = vmatpush1.bf16.msra.mxu0 %v1229
      %1246 = vmatprep.subr.bf16.mxu0 0
      %1247 = vmatpush1.bf16.msra.mxu0 %v1228
      %1248 = vmatprep.subr.bf16.mxu0 0
      %1249 = vmatpush1.bf16.msra.mxu0 %v1227
      %1250 = vmatprep.subr.bf16.mxu0 0
      %1251 = vmatpush1.bf16.msra.mxu0 %v1226
      %1252 = vmatprep.subr.bf16.mxu0 0
      %1253 = vmatpush1.bf16.msra.mxu0 %v1225
      %1254 = vmatprep.subr.bf16.mxu0 0
      %1255 = vmatpush1.bf16.msra.mxu0 %v1224
      %1256 = vmatprep.subr.bf16.mxu0 0
      %1257 = vmatpush2.bf16.msra.mxu0 0
      %1258 = vmatprep.subr.bf16.mxu0 0
      %1259 = vmatpush2.bf16.msra.mxu0 0
      %1260 = vmatprep.subr.bf16.mxu0 0
      %1261 = vmatpush2.bf16.msra.mxu0 0
      %1262 = vmatprep.subr.bf16.mxu0 0
      %1263 = vmatpush2.bf16.msra.mxu0 0
      %1264 = vmatprep.subr.bf16.mxu0 0
      %1265 = vmatpush2.bf16.msra.mxu0 0
      %1266 = vmatprep.subr.bf16.mxu0 0
      %1267 = vmatpush2.bf16.msra.mxu0 0
      %1268 = vmatprep.subr.bf16.mxu0 0
      %1269 = vmatpush2.bf16.msra.mxu0 0
      %1270 = vmatprep.subr.bf16.mxu0 0
      %1271 = vmatpush2.bf16.msra.mxu0 0
      %1272 = vmatprep.mubr.bf16.mxu0 0
      %1273 = vmatmul.mubr.bf16.gmra.mxu0 %v1175
      %v1274 = vpop.f32.mrf.mxu0
      %v1275 = vadd.f32 0.0, %v1274
      %v1276 = vpop.f32.mrf.mxu0
      %v1277 = vpop.f32.mrf.mxu0
      %v1278 = vpop.f32.mrf.mxu0
      %1279 = vdwg.mxu0
      %s1280 = scalar_lea.vmem %s6, 64
      %v1281 = vld [vmem:[%s1280] sm:$0xf]
      %v1282 = vld [vmem:[%s1280 + $0x4] sm:$0xf]
      %v1283 = vld [vmem:[%s1280 + $0x8] sm:$0xf]
      %v1284 = vld [vmem:[%s1280 + $0xc] sm:$0xf]
      %v1285 = vld [vmem:[%s1280 + $0x10] sm:$0xf]
      %v1286 = vld [vmem:[%s1280 + $0x14] sm:$0xf]
      %v1287 = vld [vmem:[%s1280 + $0x18] sm:$0xf]
      %v1288 = vld [vmem:[%s1280 + $0x1c] sm:$0xf]
      %v1289 = vld [vmem:[%s1280 + $0x20] sm:$0xf]
      %v1290 = vld [vmem:[%s1280 + $0x24] sm:$0xf]
      %v1291 = vld [vmem:[%s1280 + $0x28] sm:$0xf]
      %v1292 = vld [vmem:[%s1280 + $0x2c] sm:$0xf]
      %v1293 = vld [vmem:[%s1280 + $0x30] sm:$0xf]
      %v1294 = vld [vmem:[%s1280 + $0x34] sm:$0xf]
      %v1295 = vld [vmem:[%s1280 + $0x38] sm:$0xf]
      %v1296 = vld [vmem:[%s1280 + $0x3c] sm:$0xf]
      %v1313 = vunpack.c.l.b16 %v1281
      %v1314 = vunpack.c.l.b16 %v1282
      %v1315 = vunpack.c.l.b16 %v1283
      %v1316 = vunpack.c.l.b16 %v1284
      %v1317 = vunpack.c.l.b16 %v1285
      %v1318 = vunpack.c.l.b16 %v1286
      %v1319 = vunpack.c.l.b16 %v1287
      %v1320 = vunpack.c.l.b16 %v1288
      %v1321 = vunpack.c.l.b16 %v1289
      %v1322 = vunpack.c.l.b16 %v1290
      %v1323 = vunpack.c.l.b16 %v1291
      %v1324 = vunpack.c.l.b16 %v1292
      %v1325 = vunpack.c.l.b16 %v1293
      %v1326 = vunpack.c.l.b16 %v1294
      %v1327 = vunpack.c.l.b16 %v1295
      %v1328 = vunpack.c.l.b16 %v1296
      %v1329 = vpack.c.b16 %v1314, %v1313
      %v1330 = vpack.c.b16 %v1316, %v1315
      %v1331 = vpack.c.b16 %v1318, %v1317
      %v1332 = vpack.c.b16 %v1320, %v1319
      %v1333 = vpack.c.b16 %v1322, %v1321
      %v1334 = vpack.c.b16 %v1324, %v1323
      %v1335 = vpack.c.b16 %v1326, %v1325
      %v1336 = vpack.c.b16 %v1328, %v1327
      %1345 = vmatprep.subr.bf16.mxu0 0
      %1346 = vmatpush1.bf16.msra.mxu0 %v1336
      %1347 = vmatprep.subr.bf16.mxu0 0
      %1348 = vmatpush1.bf16.msra.mxu0 %v1335
      %1349 = vmatprep.subr.bf16.mxu0 0
      %1350 = vmatpush1.bf16.msra.mxu0 %v1334
      %1351 = vmatprep.subr.bf16.mxu0 0
      %1352 = vmatpush1.bf16.msra.mxu0 %v1333
      %1353 = vmatprep.subr.bf16.mxu0 0
      %1354 = vmatpush1.bf16.msra.mxu0 %v1332
      %1355 = vmatprep.subr.bf16.mxu0 0
      %1356 = vmatpush1.bf16.msra.mxu0 %v1331
      %1357 = vmatprep.subr.bf16.mxu0 0
      %1358 = vmatpush1.bf16.msra.mxu0 %v1330
      %1359 = vmatprep.subr.bf16.mxu0 0
      %1360 = vmatpush1.bf16.msra.mxu0 %v1329
      %1361 = vmatprep.subr.bf16.mxu0 0
      %1362 = vmatpush2.bf16.msra.mxu0 0
      %1363 = vmatprep.subr.bf16.mxu0 0
      %1364 = vmatpush2.bf16.msra.mxu0 0
      %1365 = vmatprep.subr.bf16.mxu0 0
      %1366 = vmatpush2.bf16.msra.mxu0 0
      %1367 = vmatprep.subr.bf16.mxu0 0
      %1368 = vmatpush2.bf16.msra.mxu0 0
      %1369 = vmatprep.subr.bf16.mxu0 0
      %1370 = vmatpush2.bf16.msra.mxu0 0
      %1371 = vmatprep.subr.bf16.mxu0 0
      %1372 = vmatpush2.bf16.msra.mxu0 0
      %1373 = vmatprep.subr.bf16.mxu0 0
      %1374 = vmatpush2.bf16.msra.mxu0 0
      %1375 = vmatprep.subr.bf16.mxu0 0
      %1376 = vmatpush2.bf16.msra.mxu0 0
      %1377 = vmatprep.mubr.bf16.mxu0 0
      %1378 = vmatmul.mubr.bf16.gmra.mxu0 %v1175
      %v1379 = vpop.f32.mrf.mxu0
      %v1380 = vadd.f32 0.0, %v1379
      %v1381 = vpop.f32.mrf.mxu0
      %v1382 = vpop.f32.mrf.mxu0
      %v1383 = vpop.f32.mrf.mxu0
      %1384 = vdwg.mxu0
      %v1385 = vmax.f32 %v1275, %v1380
      %v1386 = vpack.c.bf16 %v1385, %v1385
      %vm1387 = vcmask 519168
      %1388 = vst.msk [vmem:[%s276] sm:$0xf] %vm1387, %v1386
      %p1389 = scmp.lt.s32.totalorder %s18, 1
      %s1390 = scalar_select %p1389, %s18, 1
      %s1391 = smul.addr %s1390, 4
      %s1392 = scalar_lea.vmem %s7, %s1391
      // Predicated region
      $region49: #{covid19_forward.4} parent=47 // pred_check
        %p1393 = pneg %p188
      $region50: #{covid19_forward.4} parent=47 // pred_check_branch
        %1395 = sbr.rel (%p1393) target = $region52
      $region51: #{covid19_forward.4} parent=47 // pred_region
        _
      $region52: #{covid19_forward.4} parent=47 // pred_fallthru
        _
    $region48: #{covid19_forward.4} parent=5 // pred_fallthru
      _
    %p1396 = scmp.le.s32.totalorder 2, %s13
    // Predicated region
    $region53: #{covid19_forward.4} parent=5 // pred_check
      %p1397 = pneg %p1396
    $region54: #{covid19_forward.4} parent=5 // pred_check_branch
      %1399 = sbr.rel (%p1397) target = $region56
    $region55: #{covid19_forward.4} parent=5 // pred_region
      %s1400 = ssub.s32 %s13, 2
      // Predicated region
      $region57: #{covid19_forward.4} parent=55 // pred_check
        %p1401 = pneg %p194
      $region58: #{covid19_forward.4} parent=55 // pred_check_branch
        %1403 = sbr.rel (%p1401) target = $region60
      $region59: #{covid19_forward.4} parent=55 // pred_region
        %p1404 = scmp.lt.s32.totalorder %s19, 1
        %s1405 = scalar_select %p1404, %s19, 1
        %s1406 = smul.addr %s1405, 4
        %s1407 = scalar_lea.vmem %s7, %s1406
      $region60: #{covid19_forward.4} parent=55 // pred_fallthru
        _
    $region56: #{covid19_forward.4} parent=5 // pred_fallthru
      _
  $region6: #{covid19_forward.4} parent=0 // loop_footer
    %s17 = sadd.s32 1, %s13
  $region7: #{covid19_forward.4} parent=0 // loop_footer_branch
    %12 = sbr.rel target = $region3
  $region8: #{covid19_forward.4} parent=0 // loop_exit
    _

// kernel: covid19_forward.3
$region0: #{covid19_forward.3}
  #allocation0 [shape = 'u32[]', space=smem, size = 0x4, offset = 0x4, fixed_abs, tag = 'smem constant byte address 0x4 - core index']
  #allocation1 [shape = 'u32[144,128]{1,0:T(1,128)}', space=vmem, size = 0x12000, scoped, tag = 'internal scratch']
  #allocation2 [shape = 'bf16[64,256]{1,0:T(8,128)(2,1)}', space=vmem, size = 0x8000, scoped, tag = 'scratch operand']
  %s0 = inlined_call_operand.vmem [shape: bf16[2,34,96], index: 0, kind: input, shape index: {}]
  %s1 = inlined_call_operand.vmem [shape: bf16[3,96,256], index: 1, kind: input, shape index: {}]
  %s2 = inlined_call_operand.vmem [shape: f32[3,1,256], index: 2, kind: input, shape index: {}]
  %s3 = inlined_call_operand.hbm [shape: bf16[3,256,256], index: 3, kind: input, shape index: {}]
  %s4 = inlined_call_operand.vmem [shape: f32[3,1,256], index: 4, kind: input, shape index: {}]
  %s5 = inlined_call_operand.vmem [shape: bf16[2,18,32], index: 5, kind: input, shape index: {}]
  %s6 = inlined_call_operand.vmem [shape: bf16[2,256,128], index: 6, kind: input, shape index: {}]
  %s7 = inlined_call_operand.vmem [shape: bf16[2,18,128], index: 7, kind: output, shape index: {}]
  %s8 = sld [smem:[#allocation0]]
  $region65: #{covid19_forward.3} parent=0
    _
  %s10 = ssub.s32 1, %s8
  %s11 = scalar_select 0, %s10, %s8
  $region1: #{covid19_forward.3} parent=0
    #allocation3 [shape = 'u8[393216]{0}', space=vmem, size = 0x60000, scoped, tag = 'input window, operand 3, single buffered']
    #allocation4 [shape = 's32[2]{0}', space=sflag, size = 0x8, scoped, tag = 'scoped memory for covid19_forward.3']
    %12 = vsyncpa [#allocation4], 0
    loop: start=0, step=1, limit=4
    $region2: #{covid19_forward.3} parent=1 // loop_pre_header
      _
    $region3: #{covid19_forward.3} parent=1 // loop_header
      %s14 = sphi 0, %s18
      %p15 = scmp.ge.s32.totalorder %s14, 4
      %s24 = sphi 0, %s26
      %s27 = sphi 0, %s24
      %s28 = sphi 0, %s27
      %s44 = sphi 0, %s28
      %s48 = sphi 0, %s48
      %s50 = sphi 0, %s48
      %s51 = sphi 0, %s50
      %s65 = sphi 0, %s51
      %s69 = sphi 0, %s69
      %s71 = sphi 0, %s69
      %s72 = sphi 0, %s71
      %s86 = sphi 0, %s72
      %s90 = sphi 0, %s90
      %s92 = sphi 0, %s90
      %s93 = sphi 0, %s92
      %s107 = sphi 0, %s93
      %s111 = sphi 0, %s111
      %s113 = sphi 0, %s111
      %s114 = sphi 0, %s113
      %s128 = sphi 0, %s114
      %s132 = sphi 0, %s132
      %s134 = sphi 0, %s132
      %s135 = sphi 0, %s134
      %s149 = sphi 0, %s135
      %s153 = sphi 0, %s153
      %s155 = sphi 0, %s153
      %s156 = sphi 0, %s155
      %s170 = sphi 0, %s156
      %s176 = sphi 0, %s178
      %s179 = sphi 0, %s176
      %s180 = sphi 0, %s179
      %s196 = sphi 0, %s180
    $region4: #{covid19_forward.3} parent=1 // loop_header_branch
      %17 = sbr.rel (%p15) target = $region8
    $region5: #{covid19_forward.3} parent=1 // loop_body
      %s19 = ssub.s32 %s14, 1
      %s20 = ssub.s32 %s14, 2
      %s21 = sadd.s32 %s14, 1
      %s22 = ssub.s32 %s14, %s21
      %p23 = scmp.eq.s32.totalorder %s22, 0
      %s25 = sadd.s32 %s24, 1
      %s26 = scalar_select %p23, %s24, %s25
      %p29 = pneg %p23
      %p30 = scmp.eq.s32.totalorder %s14, 1
      %p31 = por %p29, %p30
      %p32 = scmp.ne.s32.totalorder %s24, %s27
      %p33 = scmp.eq.s32.totalorder %s14, 0
      %p34 = por %p32, %p33
      %p35 = scmp.ne.s32.totalorder %s24, %s27
      %p36 = scmp.eq.s32.totalorder %s19, 1
      %p37 = por %p35, %p36
      %p38 = scmp.ne.s32.totalorder %s27, %s28
      %p39 = scmp.eq.s32.totalorder %s19, 0
      %p40 = por %p38, %p39
      %p41 = scmp.ne.s32.totalorder %s27, %s28
      %p42 = scmp.eq.s32.totalorder %s20, 1
      %p43 = por %p41, %p42
      %p45 = scmp.ne.s32.totalorder %s28, %s44
      %p46 = scmp.eq.s32.totalorder %s20, 0
      %p47 = por %p45, %p46
      %s49 = sadd.s32 %s48, 1
      %p52 = scmp.eq.s32.totalorder %s14, 1
      %p53 = scmp.ne.s32.totalorder %s48, %s50
      %p54 = scmp.eq.s32.totalorder %s14, 0
      %p55 = por %p53, %p54
      %p56 = scmp.ne.s32.totalorder %s48, %s50
      %p57 = scmp.eq.s32.totalorder %s19, 1
      %p58 = por %p56, %p57
      %p59 = scmp.ne.s32.totalorder %s50, %s51
      %p60 = scmp.eq.s32.totalorder %s19, 0
      %p61 = por %p59, %p60
      %p62 = scmp.ne.s32.totalorder %s50, %s51
      %p63 = scmp.eq.s32.totalorder %s20, 1
      %p64 = por %p62, %p63
      %p66 = scmp.ne.s32.totalorder %s51, %s65
      %p67 = scmp.eq.s32.totalorder %s20, 0
      %p68 = por %p66, %p67
      %s70 = sadd.s32 %s69, 1
      %p73 = scmp.eq.s32.totalorder %s14, 1
      %p74 = scmp.ne.s32.totalorder %s69, %s71
      %p75 = scmp.eq.s32.totalorder %s14, 0
      %p76 = por %p74, %p75
      %p77 = scmp.ne.s32.totalorder %s69, %s71
      %p78 = scmp.eq.s32.totalorder %s19, 1
      %p79 = por %p77, %p78
      %p80 = scmp.ne.s32.totalorder %s71, %s72
      %p81 = scmp.eq.s32.totalorder %s19, 0
      %p82 = por %p80, %p81
      %p83 = scmp.ne.s32.totalorder %s71, %s72
      %p84 = scmp.eq.s32.totalorder %s20, 1
      %p85 = por %p83, %p84
      %p87 = scmp.ne.s32.totalorder %s72, %s86
      %p88 = scmp.eq.s32.totalorder %s20, 0
      %p89 = por %p87, %p88
      %s91 = sadd.s32 %s90, 1
      %p94 = scmp.eq.s32.totalorder %s14, 1
      %p95 = scmp.ne.s32.totalorder %s90, %s92
      %p96 = scmp.eq.s32.totalorder %s14, 0
      %p97 = por %p95, %p96
      %p98 = scmp.ne.s32.totalorder %s90, %s92
      %p99 = scmp.eq.s32.totalorder %s19, 1
      %p100 = por %p98, %p99
      %p101 = scmp.ne.s32.totalorder %s92, %s93
      %p102 = scmp.eq.s32.totalorder %s19, 0
      %p103 = por %p101, %p102
      %p104 = scmp.ne.s32.totalorder %s92, %s93
      %p105 = scmp.eq.s32.totalorder %s20, 1
      %p106 = por %p104, %p105
      %p108 = scmp.ne.s32.totalorder %s93, %s107
      %p109 = scmp.eq.s32.totalorder %s20, 0
      %p110 = por %p108, %p109
      %s112 = sadd.s32 %s111, 1
      %p115 = scmp.eq.s32.totalorder %s14, 1
      %p116 = scmp.ne.s32.totalorder %s111, %s113
      %p117 = scmp.eq.s32.totalorder %s14, 0
      %p118 = por %p116, %p117
      %p119 = scmp.ne.s32.totalorder %s111, %s113
      %p120 = scmp.eq.s32.totalorder %s19, 1
      %p121 = por %p119, %p120
      %p122 = scmp.ne.s32.totalorder %s113, %s114
      %p123 = scmp.eq.s32.totalorder %s19, 0
      %p124 = por %p122, %p123
      %p125 = scmp.ne.s32.totalorder %s113, %s114
      %p126 = scmp.eq.s32.totalorder %s20, 1
      %p127 = por %p125, %p126
      %p129 = scmp.ne.s32.totalorder %s114, %s128
      %p130 = scmp.eq.s32.totalorder %s20, 0
      %p131 = por %p129, %p130
      %s133 = sadd.s32 %s132, 1
      %p136 = scmp.eq.s32.totalorder %s14, 1
      %p137 = scmp.ne.s32.totalorder %s132, %s134
      %p138 = scmp.eq.s32.totalorder %s14, 0
      %p139 = por %p137, %p138
      %p140 = scmp.ne.s32.totalorder %s132, %s134
      %p141 = scmp.eq.s32.totalorder %s19, 1
      %p142 = por %p140, %p141
      %p143 = scmp.ne.s32.totalorder %s134, %s135
      %p144 = scmp.eq.s32.totalorder %s19, 0
      %p145 = por %p143, %p144
      %p146 = scmp.ne.s32.totalorder %s134, %s135
      %p147 = scmp.eq.s32.totalorder %s20, 1
      %p148 = por %p146, %p147
      %p150 = scmp.ne.s32.totalorder %s135, %s149
      %p151 = scmp.eq.s32.totalorder %s20, 0
      %p152 = por %p150, %p151
      %s154 = sadd.s32 %s153, 1
      %p157 = scmp.eq.s32.totalorder %s14, 1
      %p158 = scmp.ne.s32.totalorder %s153, %s155
      %p159 = scmp.eq.s32.totalorder %s14, 0
      %p160 = por %p158, %p159
      %p161 = scmp.ne.s32.totalorder %s153, %s155
      %p162 = scmp.eq.s32.totalorder %s19, 1
      %p163 = por %p161, %p162
      %p164 = scmp.ne.s32.totalorder %s155, %s156
      %p165 = scmp.eq.s32.totalorder %s19, 0
      %p166 = por %p164, %p165
      %p167 = scmp.ne.s32.totalorder %s155, %s156
      %p168 = scmp.eq.s32.totalorder %s20, 1
      %p169 = por %p167, %p168
      %p171 = scmp.ne.s32.totalorder %s156, %s170
      %p172 = scmp.eq.s32.totalorder %s20, 0
      %p173 = por %p171, %p172
      %s174 = ssub.s32 %s14, %s21
      %p175 = scmp.eq.s32.totalorder %s174, 0
      %s177 = sadd.s32 %s176, 1
      %s178 = scalar_select %p175, %s176, %s177
      %p181 = pneg %p175
      %p182 = scmp.eq.s32.totalorder %s14, 1
      %p183 = por %p181, %p182
      %p184 = scmp.ne.s32.totalorder %s176, %s179
      %p185 = scmp.eq.s32.totalorder %s14, 0
      %p186 = por %p184, %p185
      %p187 = scmp.ne.s32.totalorder %s176, %s179
      %p188 = scmp.eq.s32.totalorder %s19, 1
      %p189 = por %p187, %p188
      %p190 = scmp.ne.s32.totalorder %s179, %s180
      %p191 = scmp.eq.s32.totalorder %s19, 0
      %p192 = por %p190, %p191
      %p193 = scmp.ne.s32.totalorder %s179, %s180
      %p194 = scmp.eq.s32.totalorder %s20, 1
      %p195 = por %p193, %p194
      %p197 = scmp.ne.s32.totalorder %s180, %s196
      %p198 = scmp.eq.s32.totalorder %s20, 0
      %p199 = por %p197, %p198
      %p200 = scmp.le.s32.totalorder 1, %s14
      %p201 = scmp.lt.s32.totalorder %s14, 3
      %p202 = pnand %p200, %p201
      %p203 = pneg %p202
      // Predicated region
      $region9: #{covid19_forward.3} parent=5 // pred_check
        _
      $region10: #{covid19_forward.3} parent=5 // pred_check_branch
        %205 = sbr.rel (%p202) target = $region12
      $region11: #{covid19_forward.3} parent=5 // pred_region
        %s206 = ssub.s32 %s14, 1
        // Predicated region
        $region13: #{covid19_forward.3} parent=11 // pred_check
          %p207 = pneg %p61
        $region14: #{covid19_forward.3} parent=11 // pred_check_branch
          %209 = sbr.rel (%p207) target = $region16
        $region15: #{covid19_forward.3} parent=11 // pred_region
          _
        $region16: #{covid19_forward.3} parent=11 // pred_fallthru
          _
        // Predicated region
        $region17: #{covid19_forward.3} parent=11 // pred_check
          %p210 = pneg %p82
        $region18: #{covid19_forward.3} parent=11 // pred_check_branch
          %212 = sbr.rel (%p210) target = $region20
        $region19: #{covid19_forward.3} parent=11 // pred_region
          _
        $region20: #{covid19_forward.3} parent=11 // pred_fallthru
          _
        // Predicated region
        $region21: #{covid19_forward.3} parent=11 // pred_check
          %p213 = pneg %p103
        $region22: #{covid19_forward.3} parent=11 // pred_check_branch
          %215 = sbr.rel (%p213) target = $region24
        $region23: #{covid19_forward.3} parent=11 // pred_region
          %s217 = ssub.s32 12288, 12288
          %218 = vsyncadd [#allocation4], %s217
          %s219 = sshll.u32 [#allocation3], 4
          %s220 = int_to_ptr.vmem [resolvable:$true] %s219
          %225 = dma.hbm_to_vmem [thread:$0]  %s3, 12288, %s220, [#allocation4], 128, 128, 8
        $region24: #{covid19_forward.3} parent=11 // pred_fallthru
          _
        // Predicated region
        $region25: #{covid19_forward.3} parent=11 // pred_check
          %p226 = pneg %p124
        $region26: #{covid19_forward.3} parent=11 // pred_check_branch
          %228 = sbr.rel (%p226) target = $region28
        $region27: #{covid19_forward.3} parent=11 // pred_region
          _
        $region28: #{covid19_forward.3} parent=11 // pred_fallthru
          _
        // Predicated region
        $region29: #{covid19_forward.3} parent=11 // pred_check
          %p229 = pneg %p145
        $region30: #{covid19_forward.3} parent=11 // pred_check_branch
          %231 = sbr.rel (%p229) target = $region32
        $region31: #{covid19_forward.3} parent=11 // pred_region
          _
        $region32: #{covid19_forward.3} parent=11 // pred_fallthru
          _
        // Predicated region
        $region33: #{covid19_forward.3} parent=11 // pred_check
          %p232 = pneg %p166
        $region34: #{covid19_forward.3} parent=11 // pred_check_branch
          %234 = sbr.rel (%p232) target = $region36
        $region35: #{covid19_forward.3} parent=11 // pred_region
          _
        $region36: #{covid19_forward.3} parent=11 // pred_fallthru
          _
      $region12: #{covid19_forward.3} parent=5 // pred_fallthru
        _
      %p235 = scmp.lt.s32.totalorder %s14, 2
      // Predicated region
      $region37: #{covid19_forward.3} parent=5 // pred_check
        %p236 = pneg %p235
      $region38: #{covid19_forward.3} parent=5 // pred_check_branch
        %238 = sbr.rel (%p236) target = $region40
      $region39: #{covid19_forward.3} parent=5 // pred_region
        // Predicated region
        $region41: #{covid19_forward.3} parent=39 // pred_check
          %p239 = pneg %p34
        $region42: #{covid19_forward.3} parent=39 // pred_check_branch
          %241 = sbr.rel (%p239) target = $region44
        $region43: #{covid19_forward.3} parent=39 // pred_region
          %p242 = scmp.lt.s32.totalorder %s14, 1
          %s243 = scalar_select %p242, %s14, 1
          %s244 = smul.addr %s243, 5
          %s245 = smul.addr %s244, 4
          %s246 = scalar_lea.vmem %s0, %s245
        $region44: #{covid19_forward.3} parent=39 // pred_fallthru
          _
      $region40: #{covid19_forward.3} parent=5 // pred_fallthru
        _
      %p247 = scmp.le.s32.totalorder 1, %s14
      %p248 = scmp.lt.s32.totalorder %s14, 3
      %p249 = pnand %p247, %p248
      %p250 = pneg %p249
      // Predicated region
      $region45: #{covid19_forward.3} parent=5 // pred_check
        _
      $region46: #{covid19_forward.3} parent=5 // pred_check_branch
        %252 = sbr.rel (%p249) target = $region48
      $region47: #{covid19_forward.3} parent=5 // pred_region
        %s253 = ssub.s32 %s14, 1
        // Predicated region
        $region49: #{covid19_forward.3} parent=47 // pred_check
          %p254 = pneg %p103
        $region50: #{covid19_forward.3} parent=47 // pred_check_branch
          %256 = sbr.rel (%p254) target = $region52
        $region51: #{covid19_forward.3} parent=47 // pred_region
          %257 = dma.done [#allocation4], 12288
        $region52: #{covid19_forward.3} parent=47 // pred_fallthru
          _
        %p258 = scmp.lt.s32.totalorder %s19, 1
        %s259 = scalar_select %p258, %s19, 1
        %s260 = smul.addr %s259, 5
        %s261 = smul.addr %s260, 4
        %s262 = scalar_lea.vmem %s0, %s261
        %p263 = pneg %p40
        %p264 = pneg %p37
        %p265 = pneg %p61
        %p266 = pneg %p58
        %p267 = pneg %p82
        %p268 = pneg %p79
        %p269 = pneg %p103
        %p270 = pneg %p100
        %p271 = pneg %p124
        %p272 = pneg %p121
        %p273 = pneg %p145
        %p274 = pneg %p142
        %p275 = pneg %p166
        %p276 = pneg %p163
        %p277 = pneg %p192
        %p278 = pneg %p189
        %p279 = scmp.lt.s32.totalorder %s19, 1
        %s280 = scalar_select %p279, %s19, 1
        %s281 = smul.addr %s280, 3
        %s282 = smul.addr %s281, 4
        %s283 = scalar_lea.vmem %s7, %s282
        %p284 = scmp.lt.s32.totalorder %s19, 1
        %s285 = scalar_select %p284, %s19, 1
        %s286 = smul.addr %s285, 5
        %s287 = smul.addr %s286, 4
        %s288 = scalar_lea.vmem %s0, %s287
        %p289 = scmp.lt.s32.totalorder %s19, 1
        %s290 = scalar_select %p289, %s19, 1
        %s291 = smul.addr %s290, 3
        %s292 = smul.addr %s291, 4
        %s293 = scalar_lea.vmem %s7, %s292
        %v295 = vld [vmem:[%s288] sm:$0xf]
        %v296 = vld [vmem:[%s288 + $0x4] sm:$0xf]
        %v297 = vld [vmem:[%s288 + $0x8] sm:$0xf]
        %v298 = vld [vmem:[%s288 + $0xc] sm:$0xf]
        %v299 = vld [vmem:[%s1] sm:$0xff]
        %v300 = vld [vmem:[%s1 + $0x8] sm:$0xff]
        %v301 = vld [vmem:[%s1 + $0x10] sm:$0xff]
        %v302 = vld [vmem:[%s1 + $0x18] sm:$0xff]
        %v303 = vld [vmem:[%s1 + $0x20] sm:$0xff]
        %v304 = vld [vmem:[%s1 + $0x28] sm:$0xff]
        %v305 = vld [vmem:[%s1 + $0x30] sm:$0xff]
        %v306 = vld [vmem:[%s1 + $0x38] sm:$0xff]
        %v307 = vld [vmem:[%s1 + $0x40] sm:$0xff]
        %v308 = vld [vmem:[%s1 + $0x48] sm:$0xff]
        %v309 = vld [vmem:[%s1 + $0x50] sm:$0xff]
        %v310 = vld [vmem:[%s1 + $0x58] sm:$0xff]
        %v311 = vld [vmem:[%s288 + $0x10] sm:$0x1]
        %s312 = scalar_lea.vmem %s1, 96
        %v313 = vld [vmem:[%s312] sm:$0xff]
        %v314 = vld [vmem:[%s312 + $0x8] sm:$0xff]
        %v315 = vld [vmem:[%s312 + $0x10] sm:$0xff]
        %v316 = vld [vmem:[%s312 + $0x18] sm:$0xff]
        %v317 = vld [vmem:[%s312 + $0x20] sm:$0xff]
        %v318 = vld [vmem:[%s312 + $0x28] sm:$0xff]
        %v319 = vld [vmem:[%s312 + $0x30] sm:$0xff]
        %v320 = vld [vmem:[%s312 + $0x38] sm:$0xff]
        %v321 = vld [vmem:[%s312 + $0x40] sm:$0xff]
        %v322 = vld [vmem:[%s312 + $0x48] sm:$0xff]
        %v323 = vld [vmem:[%s312 + $0x50] sm:$0xff]
        %v324 = vld [vmem:[%s312 + $0x58] sm:$0xff]
        %v330 = vunpack.c.l.b16 %v295
        %v331 = vunpack.c.l.b16 %v296
        %v332 = vunpack.c.l.b16 %v297
        %v333 = vunpack.c.l.b16 %v298
        %v334 = vunpack.c.l.b16 %v311
        %v335 = vpack.c.b16 %v331, %v330
        %v336 = vpack.c.b16 %v333, %v332
        %v337 = vpack.c.b16 %v334, %v334
        %vm338 = vsmask.f32 7424
        %v340 = vshrl.u32 %v335, 16
        %v342 = vshll.u32 %v335, 16
        %v344 = vrot.slane %v342, 1
        %v345 = vor.u32 %v340, %v344
        %v347 = vshll.u32 %v336, 16
        %v349 = vrot.slane %v347, 1
        %v350 = vsel %vm338, %v345, %v349
        %v351 = vshrl.u32 %v336, 16
        %v353 = vor.u32 %v351, %v349
        %v355 = vshll.u32 %v337, 16
        %v357 = vrot.slane %v355, 1
        %v358 = vsel %vm338, %v353, %v357
        %v371 = vunpack.c.l.b16 %v313
        %v372 = vunpack.c.h.b16 %v313
        %v373 = vunpack.c.l.b16 %v314
        %v374 = vunpack.c.h.b16 %v314
        %v375 = vunpack.c.l.b16 %v315
        %v376 = vunpack.c.h.b16 %v315
        %v377 = vunpack.c.l.b16 %v316
        %v378 = vunpack.c.h.b16 %v316
        %v379 = vunpack.c.l.b16 %v317
        %v380 = vunpack.c.h.b16 %v317
        %v381 = vunpack.c.l.b16 %v318
        %v382 = vunpack.c.h.b16 %v318
        %v383 = vunpack.c.l.b16 %v319
        %v384 = vunpack.c.h.b16 %v319
        %v385 = vunpack.c.l.b16 %v320
        %v386 = vunpack.c.h.b16 %v320
        %v387 = vunpack.c.l.b16 %v321
        %v388 = vunpack.c.h.b16 %v321
        %v389 = vunpack.c.l.b16 %v322
        %v390 = vunpack.c.h.b16 %v322
        %v391 = vunpack.c.l.b16 %v323
        %v392 = vunpack.c.h.b16 %v323
        %v393 = vunpack.c.l.b16 %v324
        %v394 = vunpack.c.h.b16 %v324
        %v395 = vpack.c.b16 %v373, %v371
        %v396 = vpack.c.b16 %v374, %v372
        %v397 = vpack.c.b16 %v377, %v375
        %v398 = vpack.c.b16 %v378, %v376
        %v399 = vpack.c.b16 %v381, %v379
        %v400 = vpack.c.b16 %v382, %v380
        %v401 = vpack.c.b16 %v385, %v383
        %v402 = vpack.c.b16 %v386, %v384
        %v403 = vpack.c.b16 %v389, %v387
        %v404 = vpack.c.b16 %v390, %v388
        %v405 = vpack.c.b16 %v393, %v391
        %v406 = vpack.c.b16 %v394, %v392
        %vm419 = vcmask 785408
        %v421 = vsel %vm419, %v350, 0
        %v424 = vsel %vm419, %v358, 0
        %426 = vmatprep.subr.bf16.mxu0 0
        %427 = vmatpush1.bf16.msra.mxu0 0
        %428 = vmatprep.subr.bf16.mxu0 0
        %429 = vmatpush1.bf16.msra.mxu0 0
        %430 = vmatprep.subr.bf16.mxu0 %v406
        %431 = vmatpush1.bf16.msra.mxu0 %v405
        %432 = vmatprep.subr.bf16.mxu0 %v404
        %433 = vmatpush1.bf16.msra.mxu0 %v403
        %434 = vmatprep.subr.bf16.mxu0 %v402
        %435 = vmatpush1.bf16.msra.mxu0 %v401
        %436 = vmatprep.subr.bf16.mxu0 %v400
        %437 = vmatpush1.bf16.msra.mxu0 %v399
        %438 = vmatprep.subr.bf16.mxu0 %v398
        %439 = vmatpush1.bf16.msra.mxu0 %v397
        %440 = vmatprep.subr.bf16.mxu0 %v396
        %441 = vmatpush1.bf16.msra.mxu0 %v395
        %442 = vmatprep.subr.bf16.mxu0 0
        %443 = vmatpush2.bf16.msra.mxu0 0
        %444 = vmatprep.subr.bf16.mxu0 0
        %445 = vmatpush2.bf16.msra.mxu0 0
        %446 = vmatprep.subr.bf16.mxu0 0
        %447 = vmatpush2.bf16.msra.mxu0 0
        %448 = vmatprep.subr.bf16.mxu0 0
        %449 = vmatpush2.bf16.msra.mxu0 0
        %450 = vmatprep.subr.bf16.mxu0 0
        %451 = vmatpush2.bf16.msra.mxu0 0
        %452 = vmatprep.subr.bf16.mxu0 0
        %453 = vmatpush2.bf16.msra.mxu0 0
        %454 = vmatprep.subr.bf16.mxu0 0
        %455 = vmatpush2.bf16.msra.mxu0 0
        %456 = vmatprep.subr.bf16.mxu0 0
        %457 = vmatpush2.bf16.msra.mxu0 0
        %458 = vmatprep.mubr.bf16.mxu0 0
        %459 = vmatmul.mubr.bf16.gmra.mxu0 %v421
        %v460 = vpop.f32.mrf.mxu0
        %v461 = vadd.f32 0.0, %v460
        %v462 = vpop.f32.mrf.mxu0
        %v463 = vadd.f32 0.0, %v462
        %v464 = vpop.f32.mrf.mxu0
        %v465 = vadd.f32 0.0, %v464
        %v466 = vpop.f32.mrf.mxu0
        %v467 = vadd.f32 0.0, %v466
        %468 = vmatprep.mubr.bf16.mxu0 0
        %469 = vmatmul.mubr.bf16.gmra.mxu0 %v424
        %v470 = vpop.f32.mrf.mxu0
        %v471 = vadd.f32 0.0, %v470
        %v472 = vpop.f32.mrf.mxu0
        %v473 = vadd.f32 0.0, %v472
        %v474 = vpop.f32.mrf.mxu0
        %v475 = vadd.f32 0.0, %v474
        %v476 = vpop.f32.mrf.mxu0
        %v477 = vadd.f32 0.0, %v476
        %478 = vdwg.mxu0
        %v491 = vunpack.c.l.b16 %v299
        %v492 = vunpack.c.h.b16 %v299
        %v493 = vunpack.c.l.b16 %v300
        %v494 = vunpack.c.h.b16 %v300
        %v495 = vunpack.c.l.b16 %v301
        %v496 = vunpack.c.h.b16 %v301
        %v497 = vunpack.c.l.b16 %v302
        %v498 = vunpack.c.h.b16 %v302
        %v499 = vunpack.c.l.b16 %v303
        %v500 = vunpack.c.h.b16 %v303
        %v501 = vunpack.c.l.b16 %v304
        %v502 = vunpack.c.h.b16 %v304
        %v503 = vunpack.c.l.b16 %v305
        %v504 = vunpack.c.h.b16 %v305
        %v505 = vunpack.c.l.b16 %v306
        %v506 = vunpack.c.h.b16 %v306
        %v507 = vunpack.c.l.b16 %v307
        %v508 = vunpack.c.h.b16 %v307
        %v509 = vunpack.c.l.b16 %v308
        %v510 = vunpack.c.h.b16 %v308
        %v511 = vunpack.c.l.b16 %v309
        %v512 = vunpack.c.h.b16 %v309
        %v513 = vunpack.c.l.b16 %v310
        %v514 = vunpack.c.h.b16 %v310
        %v515 = vpack.c.b16 %v493, %v491
        %v516 = vpack.c.b16 %v494, %v492
        %v517 = vpack.c.b16 %v497, %v495
        %v518 = vpack.c.b16 %v498, %v496
        %v519 = vpack.c.b16 %v501, %v499
        %v520 = vpack.c.b16 %v502, %v500
        %v521 = vpack.c.b16 %v505, %v503
        %v522 = vpack.c.b16 %v506, %v504
        %v523 = vpack.c.b16 %v509, %v507
        %v524 = vpack.c.b16 %v510, %v508
        %v525 = vpack.c.b16 %v513, %v511
        %v526 = vpack.c.b16 %v514, %v512
        %v539 = vsel %vm419, %v335, 0
        %v541 = vsel %vm419, %v336, 0
        %543 = vmatprep.subr.bf16.mxu0 0
        %544 = vmatpush1.bf16.msra.mxu0 0
        %545 = vmatprep.subr.bf16.mxu0 0
        %546 = vmatpush1.bf16.msra.mxu0 0
        %547 = vmatprep.subr.bf16.mxu0 %v526
        %548 = vmatpush1.bf16.msra.mxu0 %v525
        %549 = vmatprep.subr.bf16.mxu0 %v524
        %550 = vmatpush1.bf16.msra.mxu0 %v523
        %551 = vmatprep.subr.bf16.mxu0 %v522
        %552 = vmatpush1.bf16.msra.mxu0 %v521
        %553 = vmatprep.subr.bf16.mxu0 %v520
        %554 = vmatpush1.bf16.msra.mxu0 %v519
        %555 = vmatprep.subr.bf16.mxu0 %v518
        %556 = vmatpush1.bf16.msra.mxu0 %v517
        %557 = vmatprep.subr.bf16.mxu0 %v516
        %558 = vmatpush1.bf16.msra.mxu0 %v515
        %559 = vmatprep.subr.bf16.mxu0 0
        %560 = vmatpush2.bf16.msra.mxu0 0
        %561 = vmatprep.subr.bf16.mxu0 0
        %562 = vmatpush2.bf16.msra.mxu0 0
        %563 = vmatprep.subr.bf16.mxu0 0
        %564 = vmatpush2.bf16.msra.mxu0 0
        %565 = vmatprep.subr.bf16.mxu0 0
        %566 = vmatpush2.bf16.msra.mxu0 0
        %567 = vmatprep.subr.bf16.mxu0 0
        %568 = vmatpush2.bf16.msra.mxu0 0
        %569 = vmatprep.subr.bf16.mxu0 0
        %570 = vmatpush2.bf16.msra.mxu0 0
        %571 = vmatprep.subr.bf16.mxu0 0
        %572 = vmatpush2.bf16.msra.mxu0 0
        %573 = vmatprep.subr.bf16.mxu0 0
        %574 = vmatpush2.bf16.msra.mxu0 0
        %575 = vmatprep.mubr.bf16.mxu0 0
        %576 = vmatmul.mubr.bf16.gmra.mxu0 %v539
        %v577 = vpop.f32.mrf.mxu0
        %v578 = vadd.f32 %v461, %v577
        %v579 = vpop.f32.mrf.mxu0
        %v580 = vadd.f32 %v463, %v579
        %v581 = vpop.f32.mrf.mxu0
        %v582 = vadd.f32 %v465, %v581
        %v583 = vpop.f32.mrf.mxu0
        %v584 = vadd.f32 %v467, %v583
        %585 = vmatprep.mubr.bf16.mxu0 0
        %586 = vmatmul.mubr.bf16.gmra.mxu0 %v541
        %v587 = vpop.f32.mrf.mxu0
        %v588 = vadd.f32 %v471, %v587
        %v589 = vpop.f32.mrf.mxu0
        %v590 = vadd.f32 %v473, %v589
        %v591 = vpop.f32.mrf.mxu0
        %v592 = vadd.f32 %v475, %v591
        %v593 = vpop.f32.mrf.mxu0
        %v594 = vadd.f32 %v477, %v593
        %595 = vdwg.mxu0
        %v596 = vld [vmem:[%s288] sm:$0xe]
        %s597 = scalar_lea.vmem %s1, 192
        %v598 = vld [vmem:[%s597] sm:$0xff]
        %v599 = vld [vmem:[%s597 + $0x8] sm:$0xff]
        %v600 = vld [vmem:[%s597 + $0x10] sm:$0xff]
        %v601 = vld [vmem:[%s597 + $0x18] sm:$0xff]
        %v602 = vld [vmem:[%s597 + $0x20] sm:$0xff]
        %v603 = vld [vmem:[%s597 + $0x28] sm:$0xff]
        %v604 = vld [vmem:[%s597 + $0x30] sm:$0xff]
        %v605 = vld [vmem:[%s597 + $0x38] sm:$0xff]
        %v606 = vld [vmem:[%s597 + $0x40] sm:$0xff]
        %v607 = vld [vmem:[%s597 + $0x48] sm:$0xff]
        %v608 = vld [vmem:[%s597 + $0x50] sm:$0xff]
        %v609 = vld [vmem:[%s597 + $0x58] sm:$0xff]
        %v611 = vunpack.c.l.b16 %v596
        %v612 = vpack.c.b16 %v331, %v611
        %vm613 = vcmask 1046528
        %v614 = vrot.slane %v612, 1
        %v615 = vrot.slane %v336, 1
        %v616 = vsel %vm613, %v614, %v615
        %v617 = vrot.slane %v337, 1
        %v618 = vsel %vm613, %v615, %v617
        %v631 = vunpack.c.l.b16 %v598
        %v632 = vunpack.c.h.b16 %v598
        %v633 = vunpack.c.l.b16 %v599
        %v634 = vunpack.c.h.b16 %v599
        %v635 = vunpack.c.l.b16 %v600
        %v636 = vunpack.c.h.b16 %v600
        %v637 = vunpack.c.l.b16 %v601
        %v638 = vunpack.c.h.b16 %v601
        %v639 = vunpack.c.l.b16 %v602
        %v640 = vunpack.c.h.b16 %v602
        %v641 = vunpack.c.l.b16 %v603
        %v642 = vunpack.c.h.b16 %v603
        %v643 = vunpack.c.l.b16 %v604
        %v644 = vunpack.c.h.b16 %v604
        %v645 = vunpack.c.l.b16 %v605
        %v646 = vunpack.c.h.b16 %v605
        %v647 = vunpack.c.l.b16 %v606
        %v648 = vunpack.c.h.b16 %v606
        %v649 = vunpack.c.l.b16 %v607
        %v650 = vunpack.c.h.b16 %v607
        %v651 = vunpack.c.l.b16 %v608
        %v652 = vunpack.c.h.b16 %v608
        %v653 = vunpack.c.l.b16 %v609
        %v654 = vunpack.c.h.b16 %v609
        %v655 = vpack.c.b16 %v633, %v631
        %v656 = vpack.c.b16 %v634, %v632
        %v657 = vpack.c.b16 %v637, %v635
        %v658 = vpack.c.b16 %v638, %v636
        %v659 = vpack.c.b16 %v641, %v639
        %v660 = vpack.c.b16 %v642, %v640
        %v661 = vpack.c.b16 %v645, %v643
        %v662 = vpack.c.b16 %v646, %v644
        %v663 = vpack.c.b16 %v649, %v647
        %v664 = vpack.c.b16 %v650, %v648
        %v665 = vpack.c.b16 %v653, %v651
        %v666 = vpack.c.b16 %v654, %v652
        %v680 = vsel %vm419, %v616, 0
        %v683 = vsel %vm419, %v618, 0
        %685 = vmatprep.subr.bf16.mxu0 0
        %686 = vmatpush1.bf16.msra.mxu0 0
        %687 = vmatprep.subr.bf16.mxu0 0
        %688 = vmatpush1.bf16.msra.mxu0 0
        %689 = vmatprep.subr.bf16.mxu0 %v666
        %690 = vmatpush1.bf16.msra.mxu0 %v665
        %691 = vmatprep.subr.bf16.mxu0 %v664
        %692 = vmatpush1.bf16.msra.mxu0 %v663
        %693 = vmatprep.subr.bf16.mxu0 %v662
        %694 = vmatpush1.bf16.msra.mxu0 %v661
        %695 = vmatprep.subr.bf16.mxu0 %v660
        %696 = vmatpush1.bf16.msra.mxu0 %v659
        %697 = vmatprep.subr.bf16.mxu0 %v658
        %698 = vmatpush1.bf16.msra.mxu0 %v657
        %699 = vmatprep.subr.bf16.mxu0 %v656
        %700 = vmatpush1.bf16.msra.mxu0 %v655
        %701 = vmatprep.subr.bf16.mxu0 0
        %702 = vmatpush2.bf16.msra.mxu0 0
        %703 = vmatprep.subr.bf16.mxu0 0
        %704 = vmatpush2.bf16.msra.mxu0 0
        %705 = vmatprep.subr.bf16.mxu0 0
        %706 = vmatpush2.bf16.msra.mxu0 0
        %707 = vmatprep.subr.bf16.mxu0 0
        %708 = vmatpush2.bf16.msra.mxu0 0
        %709 = vmatprep.subr.bf16.mxu0 0
        %710 = vmatpush2.bf16.msra.mxu0 0
        %711 = vmatprep.subr.bf16.mxu0 0
        %712 = vmatpush2.bf16.msra.mxu0 0
        %713 = vmatprep.subr.bf16.mxu0 0
        %714 = vmatpush2.bf16.msra.mxu0 0
        %715 = vmatprep.subr.bf16.mxu0 0
        %716 = vmatpush2.bf16.msra.mxu0 0
        %717 = vmatprep.mubr.bf16.mxu0 0
        %718 = vmatmul.mubr.bf16.gmra.mxu0 %v680
        %v719 = vpop.f32.mrf.mxu0
        %v720 = vadd.f32 0.0, %v719
        %v721 = vpop.f32.mrf.mxu0
        %v722 = vadd.f32 0.0, %v721
        %v723 = vpop.f32.mrf.mxu0
        %v724 = vadd.f32 0.0, %v723
        %v725 = vpop.f32.mrf.mxu0
        %v726 = vadd.f32 0.0, %v725
        %727 = vmatprep.mubr.bf16.mxu0 0
        %728 = vmatmul.mubr.bf16.gmra.mxu0 %v683
        %v729 = vpop.f32.mrf.mxu0
        %v730 = vadd.f32 0.0, %v729
        %v731 = vpop.f32.mrf.mxu0
        %v732 = vadd.f32 0.0, %v731
        %v733 = vpop.f32.mrf.mxu0
        %v734 = vadd.f32 0.0, %v733
        %v735 = vpop.f32.mrf.mxu0
        %v736 = vadd.f32 0.0, %v735
        %737 = vdwg.mxu0
        %v738 = vadd.f32 %v578, %v720
        %v739 = vadd.f32 %v580, %v722
        %v740 = vadd.f32 %v582, %v724
        %v741 = vadd.f32 %v584, %v726
        %v742 = vadd.f32 %v588, %v730
        %v743 = vadd.f32 %v590, %v732
        %v744 = vadd.f32 %v592, %v734
        %v745 = vadd.f32 %v594, %v736
        %s746 = scalar_lea.vmem %s2, 2
        %v747 = vld [vmem:[%s746] sm:$0x3]
        %v749 = vlaneseq
        %v750 = vshrl.u32 %v749, 7
        %v751 = vsub.s32 0, %v750
        %v752 = vrot.slane %v747, %v751
        %v753 = vlaneseq
        %v754 = vshrl.u32 %v753, 7
        %v755 = vsub.s32 1, %v754
        %v756 = vrot.slane %v747, %v755
        %v759 = vmul.f32 %v738, %v752
        %v760 = vmul.f32 %v739, %v756
        %v761 = vmul.f32 %v740, %v752
        %v762 = vmul.f32 %v741, %v756
        %v763 = vmul.f32 %v742, %v752
        %v764 = vmul.f32 %v743, %v756
        %v765 = vmul.f32 %v744, %v752
        %v766 = vmul.f32 %v745, %v756
        %s767 = scalar_lea.vmem %s2, 4
        %v768 = vld [vmem:[%s767] sm:$0x3]
        %v770 = vlaneseq
        %v771 = vshrl.u32 %v770, 7
        %v772 = vsub.s32 0, %v771
        %v773 = vrot.slane %v768, %v772
        %v774 = vlaneseq
        %v775 = vshrl.u32 %v774, 7
        %v776 = vsub.s32 1, %v775
        %v777 = vrot.slane %v768, %v776
        %v780 = vadd.f32 %v759, %v773
        %v781 = vadd.f32 %v760, %v777
        %v782 = vadd.f32 %v761, %v773
        %v783 = vadd.f32 %v762, %v777
        %v784 = vadd.f32 %v763, %v773
        %v785 = vadd.f32 %v764, %v777
        %v786 = vadd.f32 %v765, %v773
        %v787 = vadd.f32 %v766, %v777
        %v788 = vmax.f32 %v780, 0.0
        %v789 = vmax.f32 %v781, 0.0
        %v790 = vmax.f32 %v782, 0.0
        %v791 = vmax.f32 %v783, 0.0
        %v792 = vmax.f32 %v784, 0.0
        %v793 = vmax.f32 %v785, 0.0
        %v794 = vmax.f32 %v786, 0.0
        %v795 = vmax.f32 %v787, 0.0
        %v796 = vpack.c.bf16 %v790, %v788
        %v797 = vpack.c.bf16 %v791, %v789
        %v798 = vpack.c.bf16 %v794, %v792
        %v799 = vpack.c.bf16 %v795, %v793
        %800 = vst [vmem:[#allocation2] sm:$0xff] 0
        %801 = vst [vmem:[#allocation2 + $0x8] sm:$0xff] 0
        %802 = vst [vmem:[#allocation2 + $0x30] sm:$0xff] 0
        %803 = vst [vmem:[#allocation2 + $0x38] sm:$0xff] 0
        %v808 = vunpack.c.l.b16 %v796
        %v809 = vunpack.c.l.b16 %v797
        %v810 = vunpack.c.h.b16 %v796
        %v811 = vunpack.c.h.b16 %v797
        %v812 = vunpack.c.l.b16 %v798
        %v813 = vunpack.c.l.b16 %v799
        %v814 = vunpack.c.h.b16 %v798
        %v815 = vunpack.c.h.b16 %v799
        %v816 = vpack.c.b16 %v809, %v808
        %v817 = vpack.c.b16 %v811, %v810
        %v818 = vpack.c.b16 %v813, %v812
        %v819 = vpack.c.b16 %v815, %v814
        %824 = vst [vmem:[#allocation2 + $0x10] sm:$0xff] %v816
        %825 = vst [vmem:[#allocation2 + $0x18] sm:$0xff] %v817
        %826 = vst [vmem:[#allocation2 + $0x20] sm:$0xff] %v818
        %827 = vst [vmem:[#allocation2 + $0x28] sm:$0xff] %v819
        %v828 = vld [vmem:[#allocation2 + $0x8] sm:$0x88]
        %v829 = vld [vmem:[#allocation2 + $0x10] sm:$0xff]
        %v830 = vld [vmem:[#allocation2 + $0x18] sm:$0xff]
        %v831 = vld [vmem:[#allocation2 + $0x20] sm:$0xff]
        %v832 = vld [vmem:[#allocation2 + $0x28] sm:$0xff]
        %v833 = vld [vmem:[#allocation3] sm:$0xff]
        %v834 = vld [vmem:[#allocation3 + $0x8] sm:$0xff]
        %v835 = vld [vmem:[#allocation3 + $0x10] sm:$0xff]
        %v836 = vld [vmem:[#allocation3 + $0x18] sm:$0xff]
        %v837 = vld [vmem:[#allocation3 + $0x20] sm:$0xff]
        %v838 = vld [vmem:[#allocation3 + $0x28] sm:$0xff]
        %v839 = vld [vmem:[#allocation3 + $0x30] sm:$0xff]
        %v840 = vld [vmem:[#allocation3 + $0x38] sm:$0xff]
        %v841 = vld [vmem:[#allocation3 + $0x40] sm:$0xff]
        %v842 = vld [vmem:[#allocation3 + $0x48] sm:$0xff]
        %v843 = vld [vmem:[#allocation3 + $0x50] sm:$0xff]
        %v844 = vld [vmem:[#allocation3 + $0x58] sm:$0xff]
        %v845 = vld [vmem:[#allocation3 + $0x60] sm:$0xff]
        %v846 = vld [vmem:[#allocation3 + $0x68] sm:$0xff]
        %v847 = vld [vmem:[#allocation3 + $0x70] sm:$0xff]
        %v848 = vld [vmem:[#allocation3 + $0x78] sm:$0xff]
        %v849 = vld [vmem:[#allocation3 + $0x80] sm:$0xff]
        %v850 = vld [vmem:[#allocation3 + $0x88] sm:$0xff]
        %v851 = vld [vmem:[#allocation3 + $0x90] sm:$0xff]
        %v852 = vld [vmem:[#allocation3 + $0x98] sm:$0xff]
        %v853 = vld [vmem:[#allocation3 + $0xa0] sm:$0xff]
        %v854 = vld [vmem:[#allocation3 + $0xa8] sm:$0xff]
        %v855 = vld [vmem:[#allocation3 + $0xb0] sm:$0xff]
        %v856 = vld [vmem:[#allocation3 + $0xb8] sm:$0xff]
        %v857 = vld [vmem:[#allocation3 + $0xc0] sm:$0xff]
        %v858 = vld [vmem:[#allocation3 + $0xc8] sm:$0xff]
        %v859 = vld [vmem:[#allocation3 + $0xd0] sm:$0xff]
        %v860 = vld [vmem:[#allocation3 + $0xd8] sm:$0xff]
        %v861 = vld [vmem:[#allocation3 + $0xe0] sm:$0xff]
        %v862 = vld [vmem:[#allocation3 + $0xe8] sm:$0xff]
        %v863 = vld [vmem:[#allocation3 + $0xf0] sm:$0xff]
        %v864 = vld [vmem:[#allocation3 + $0xf8] sm:$0xff]
        %s865 = scalar_lea.vmem [#allocation3], 256
        %v866 = vld [vmem:[%s865] sm:$0xff]
        %v867 = vld [vmem:[%s865 + $0x8] sm:$0xff]
        %v868 = vld [vmem:[%s865 + $0x10] sm:$0xff]
        %v869 = vld [vmem:[%s865 + $0x18] sm:$0xff]
        %v870 = vld [vmem:[%s865 + $0x20] sm:$0xff]
        %v871 = vld [vmem:[%s865 + $0x28] sm:$0xff]
        %v872 = vld [vmem:[%s865 + $0x30] sm:$0xff]
        %v873 = vld [vmem:[%s865 + $0x38] sm:$0xff]
        %v874 = vld [vmem:[%s865 + $0x40] sm:$0xff]
        %v875 = vld [vmem:[%s865 + $0x48] sm:$0xff]
        %v876 = vld [vmem:[%s865 + $0x50] sm:$0xff]
        %v877 = vld [vmem:[%s865 + $0x58] sm:$0xff]
        %v878 = vld [vmem:[%s865 + $0x60] sm:$0xff]
        %v879 = vld [vmem:[%s865 + $0x68] sm:$0xff]
        %v880 = vld [vmem:[%s865 + $0x70] sm:$0xff]
        %v881 = vld [vmem:[%s865 + $0x78] sm:$0xff]
        %v882 = vld [vmem:[%s865 + $0x80] sm:$0xff]
        %v883 = vld [vmem:[%s865 + $0x88] sm:$0xff]
        %v884 = vld [vmem:[%s865 + $0x90] sm:$0xff]
        %v885 = vld [vmem:[%s865 + $0x98] sm:$0xff]
        %v886 = vld [vmem:[%s865 + $0xa0] sm:$0xff]
        %v887 = vld [vmem:[%s865 + $0xa8] sm:$0xff]
        %v888 = vld [vmem:[%s865 + $0xb0] sm:$0xff]
        %v889 = vld [vmem:[%s865 + $0xb8] sm:$0xff]
        %v890 = vld [vmem:[%s865 + $0xc0] sm:$0xff]
        %v891 = vld [vmem:[%s865 + $0xc8] sm:$0xff]
        %v892 = vld [vmem:[%s865 + $0xd0] sm:$0xff]
        %v893 = vld [vmem:[%s865 + $0xd8] sm:$0xff]
        %v894 = vld [vmem:[%s865 + $0xe0] sm:$0xff]
        %v895 = vld [vmem:[%s865 + $0xe8] sm:$0xff]
        %v896 = vld [vmem:[%s865 + $0xf0] sm:$0xff]
        %v897 = vld [vmem:[%s865 + $0xf8] sm:$0xff]
        %v902 = vunpack.c.l.b16 %v829
        %v903 = vunpack.c.h.b16 %v829
        %v904 = vunpack.c.l.b16 %v830
        %v905 = vunpack.c.h.b16 %v830
        %v906 = vunpack.c.l.b16 %v831
        %v907 = vunpack.c.h.b16 %v831
        %v908 = vunpack.c.l.b16 %v832
        %v909 = vunpack.c.h.b16 %v832
        %v910 = vpack.c.b16 %v904, %v902
        %v911 = vpack.c.b16 %v905, %v903
        %v912 = vpack.c.b16 %v908, %v906
        %v913 = vpack.c.b16 %v909, %v907
        %v950 = vunpack.c.l.b16 %v866
        %v951 = vunpack.c.h.b16 %v866
        %v952 = vunpack.c.l.b16 %v867
        %v953 = vunpack.c.h.b16 %v867
        %v954 = vunpack.c.l.b16 %v868
        %v955 = vunpack.c.h.b16 %v868
        %v956 = vunpack.c.l.b16 %v869
        %v957 = vunpack.c.h.b16 %v869
        %v958 = vunpack.c.l.b16 %v870
        %v959 = vunpack.c.h.b16 %v870
        %v960 = vunpack.c.l.b16 %v871
        %v961 = vunpack.c.h.b16 %v871
        %v962 = vunpack.c.l.b16 %v872
        %v963 = vunpack.c.h.b16 %v872
        %v964 = vunpack.c.l.b16 %v873
        %v965 = vunpack.c.h.b16 %v873
        %v966 = vunpack.c.l.b16 %v874
        %v967 = vunpack.c.h.b16 %v874
        %v968 = vunpack.c.l.b16 %v875
        %v969 = vunpack.c.h.b16 %v875
        %v970 = vunpack.c.l.b16 %v876
        %v971 = vunpack.c.h.b16 %v876
        %v972 = vunpack.c.l.b16 %v877
        %v973 = vunpack.c.h.b16 %v877
        %v974 = vunpack.c.l.b16 %v878
        %v975 = vunpack.c.h.b16 %v878
        %v976 = vunpack.c.l.b16 %v879
        %v977 = vunpack.c.h.b16 %v879
        %v978 = vunpack.c.l.b16 %v880
        %v979 = vunpack.c.h.b16 %v880
        %v980 = vunpack.c.l.b16 %v881
        %v981 = vunpack.c.h.b16 %v881
        %v982 = vunpack.c.l.b16 %v882
        %v983 = vunpack.c.h.b16 %v882
        %v984 = vunpack.c.l.b16 %v883
        %v985 = vunpack.c.h.b16 %v883
        %v986 = vunpack.c.l.b16 %v884
        %v987 = vunpack.c.h.b16 %v884
        %v988 = vunpack.c.l.b16 %v885
        %v989 = vunpack.c.h.b16 %v885
        %v990 = vunpack.c.l.b16 %v886
        %v991 = vunpack.c.h.b16 %v886
        %v992 = vunpack.c.l.b16 %v887
        %v993 = vunpack.c.h.b16 %v887
        %v994 = vunpack.c.l.b16 %v888
        %v995 = vunpack.c.h.b16 %v888
        %v996 = vunpack.c.l.b16 %v889
        %v997 = vunpack.c.h.b16 %v889
        %v998 = vunpack.c.l.b16 %v890
        %v999 = vunpack.c.h.b16 %v890
        %v1000 = vunpack.c.l.b16 %v891
        %v1001 = vunpack.c.h.b16 %v891
        %v1002 = vunpack.c.l.b16 %v892
        %v1003 = vunpack.c.h.b16 %v892
        %v1004 = vunpack.c.l.b16 %v893
        %v1005 = vunpack.c.h.b16 %v893
        %v1006 = vunpack.c.l.b16 %v894
        %v1007 = vunpack.c.h.b16 %v894
        %v1008 = vunpack.c.l.b16 %v895
        %v1009 = vunpack.c.h.b16 %v895
        %v1010 = vunpack.c.l.b16 %v896
        %v1011 = vunpack.c.h.b16 %v896
        %v1012 = vunpack.c.l.b16 %v897
        %v1013 = vunpack.c.h.b16 %v897
        %v1014 = vpack.c.b16 %v952, %v950
        %v1015 = vpack.c.b16 %v953, %v951
        %v1016 = vpack.c.b16 %v956, %v954
        %v1017 = vpack.c.b16 %v957, %v955
        %v1018 = vpack.c.b16 %v960, %v958
        %v1019 = vpack.c.b16 %v961, %v959
        %v1020 = vpack.c.b16 %v964, %v962
        %v1021 = vpack.c.b16 %v965, %v963
        %v1022 = vpack.c.b16 %v968, %v966
        %v1023 = vpack.c.b16 %v969, %v967
        %v1024 = vpack.c.b16 %v972, %v970
        %v1025 = vpack.c.b16 %v973, %v971
        %v1026 = vpack.c.b16 %v976, %v974
        %v1027 = vpack.c.b16 %v977, %v975
        %v1028 = vpack.c.b16 %v980, %v978
        %v1029 = vpack.c.b16 %v981, %v979
        %v1030 = vpack.c.b16 %v984, %v982
        %v1031 = vpack.c.b16 %v985, %v983
        %v1032 = vpack.c.b16 %v988, %v986
        %v1033 = vpack.c.b16 %v989, %v987
        %v1034 = vpack.c.b16 %v992, %v990
        %v1035 = vpack.c.b16 %v993, %v991
        %v1036 = vpack.c.b16 %v996, %v994
        %v1037 = vpack.c.b16 %v997, %v995
        %v1038 = vpack.c.b16 %v1000, %v998
        %v1039 = vpack.c.b16 %v1001, %v999
        %v1040 = vpack.c.b16 %v1004, %v1002
        %v1041 = vpack.c.b16 %v1005, %v1003
        %v1042 = vpack.c.b16 %v1008, %v1006
        %v1043 = vpack.c.b16 %v1009, %v1007
        %v1044 = vpack.c.b16 %v1012, %v1010
        %v1045 = vpack.c.b16 %v1013, %v1011
        %1078 = vmatprep.subr.bf16.mxu0 %v1029
        %1079 = vmatpush1.bf16.msra.mxu0 %v1028
        %1080 = vmatprep.subr.bf16.mxu0 %v1027
        %1081 = vmatpush1.bf16.msra.mxu0 %v1026
        %1082 = vmatprep.subr.bf16.mxu0 %v1025
        %1083 = vmatpush1.bf16.msra.mxu0 %v1024
        %1084 = vmatprep.subr.bf16.mxu0 %v1023
        %1085 = vmatpush1.bf16.msra.mxu0 %v1022
        %1086 = vmatprep.subr.bf16.mxu0 %v1021
        %1087 = vmatpush1.bf16.msra.mxu0 %v1020
        %1088 = vmatprep.subr.bf16.mxu0 %v1019
        %1089 = vmatpush1.bf16.msra.mxu0 %v1018
        %1090 = vmatprep.subr.bf16.mxu0 %v1017
        %1091 = vmatpush1.bf16.msra.mxu0 %v1016
        %1092 = vmatprep.subr.bf16.mxu0 %v1015
        %1093 = vmatpush1.bf16.msra.mxu0 %v1014
        %1094 = vmatprep.subr.bf16.mxu0 %v1045
        %1095 = vmatpush2.bf16.msra.mxu0 %v1044
        %1096 = vmatprep.subr.bf16.mxu0 %v1043
        %1097 = vmatpush2.bf16.msra.mxu0 %v1042
        %1098 = vmatprep.subr.bf16.mxu0 %v1041
        %1099 = vmatpush2.bf16.msra.mxu0 %v1040
        %1100 = vmatprep.subr.bf16.mxu0 %v1039
        %1101 = vmatpush2.bf16.msra.mxu0 %v1038
        %1102 = vmatprep.subr.bf16.mxu0 %v1037
        %1103 = vmatpush2.bf16.msra.mxu0 %v1036
        %1104 = vmatprep.subr.bf16.mxu0 %v1035
        %1105 = vmatpush2.bf16.msra.mxu0 %v1034
        %1106 = vmatprep.subr.bf16.mxu0 %v1033
        %1107 = vmatpush2.bf16.msra.mxu0 %v1032
        %1108 = vmatprep.subr.bf16.mxu0 %v1031
        %1109 = vmatpush2.bf16.msra.mxu0 %v1030
        %1110 = vmatprep.mubr.bf16.mxu0 %v911
        %1111 = vmatmul.mubr.bf16.gmra.mxu0 %v910
        %v1112 = vpop.f32.mrf.mxu0
        %v1113 = vadd.f32 0.0, %v1112
        %v1114 = vpop.f32.mrf.mxu0
        %v1115 = vadd.f32 0.0, %v1114
        %v1116 = vpop.f32.mrf.mxu0
        %v1117 = vadd.f32 0.0, %v1116
        %v1118 = vpop.f32.mrf.mxu0
        %v1119 = vadd.f32 0.0, %v1118
        %1120 = vmatprep.mubr.bf16.mxu0 %v913
        %1121 = vmatmul.mubr.bf16.gmra.mxu0 %v912
        %v1122 = vpop.f32.mrf.mxu0
        %v1123 = vadd.f32 0.0, %v1122
        %v1124 = vpop.f32.mrf.mxu0
        %v1125 = vadd.f32 0.0, %v1124
        %v1126 = vpop.f32.mrf.mxu0
        %v1127 = vadd.f32 0.0, %v1126
        %v1128 = vpop.f32.mrf.mxu0
        %v1129 = vadd.f32 0.0, %v1128
        %1130 = vdwg.mxu0
        %v1132 = vunpack.c.l.b16 %v828
        %v1133 = vunpack.c.h.b16 %v828
        %v1134 = vpack.c.b16 %v902, %v1132
        %v1135 = vpack.c.b16 %v903, %v1133
        %v1136 = vpack.c.b16 %v906, %v904
        %v1137 = vpack.c.b16 %v907, %v905
        %v1138 = vpack.c.b16 %v908, %v908
        %v1139 = vpack.c.b16 %v909, %v909
        %vm1140 = vsmask.f32 4352
        %v1142 = vshrl.u32 %v1134, 16
        %v1144 = vrot.slane %v1142, 3
        %v1145 = vshll.u32 %v1134, 16
        %v1147 = vrot.slane %v1145, 4
        %v1148 = vor.u32 %v1144, %v1147
        %v1150 = vshrl.u32 %v1136, 16
        %v1152 = vrot.slane %v1150, 3
        %v1153 = vshll.u32 %v1136, 16
        %v1155 = vrot.slane %v1153, 4
        %v1156 = vor.u32 %v1152, %v1155
        %v1157 = vsel %vm1140, %v1148, %v1156
        %v1159 = vshrl.u32 %v1135, 16
        %v1161 = vrot.slane %v1159, 3
        %v1162 = vshll.u32 %v1135, 16
        %v1164 = vrot.slane %v1162, 4
        %v1165 = vor.u32 %v1161, %v1164
        %v1167 = vshrl.u32 %v1137, 16
        %v1169 = vrot.slane %v1167, 3
        %v1170 = vshll.u32 %v1137, 16
        %v1172 = vrot.slane %v1170, 4
        %v1173 = vor.u32 %v1169, %v1172
        %v1174 = vsel %vm1140, %v1165, %v1173
        %v1176 = vshrl.u32 %v1138, 16
        %v1178 = vrot.slane %v1176, 3
        %v1179 = vshll.u32 %v1138, 16
        %v1181 = vrot.slane %v1179, 4
        %v1182 = vor.u32 %v1178, %v1181
        %v1183 = vsel %vm1140, %v1156, %v1182
        %v1185 = vshrl.u32 %v1139, 16
        %v1187 = vrot.slane %v1185, 3
        %v1188 = vshll.u32 %v1139, 16
        %v1190 = vrot.slane %v1188, 4
        %v1191 = vor.u32 %v1187, %v1190
        %v1192 = vsel %vm1140, %v1173, %v1191
        %v1229 = vunpack.c.l.b16 %v833
        %v1230 = vunpack.c.h.b16 %v833
        %v1231 = vunpack.c.l.b16 %v834
        %v1232 = vunpack.c.h.b16 %v834
        %v1233 = vunpack.c.l.b16 %v835
        %v1234 = vunpack.c.h.b16 %v835
        %v1235 = vunpack.c.l.b16 %v836
        %v1236 = vunpack.c.h.b16 %v836
        %v1237 = vunpack.c.l.b16 %v837
        %v1238 = vunpack.c.h.b16 %v837
        %v1239 = vunpack.c.l.b16 %v838
        %v1240 = vunpack.c.h.b16 %v838
        %v1241 = vunpack.c.l.b16 %v839
        %v1242 = vunpack.c.h.b16 %v839
        %v1243 = vunpack.c.l.b16 %v840
        %v1244 = vunpack.c.h.b16 %v840
        %v1245 = vunpack.c.l.b16 %v841
        %v1246 = vunpack.c.h.b16 %v841
        %v1247 = vunpack.c.l.b16 %v842
        %v1248 = vunpack.c.h.b16 %v842
        %v1249 = vunpack.c.l.b16 %v843
        %v1250 = vunpack.c.h.b16 %v843
        %v1251 = vunpack.c.l.b16 %v844
        %v1252 = vunpack.c.h.b16 %v844
        %v1253 = vunpack.c.l.b16 %v845
        %v1254 = vunpack.c.h.b16 %v845
        %v1255 = vunpack.c.l.b16 %v846
        %v1256 = vunpack.c.h.b16 %v846
        %v1257 = vunpack.c.l.b16 %v847
        %v1258 = vunpack.c.h.b16 %v847
        %v1259 = vunpack.c.l.b16 %v848
        %v1260 = vunpack.c.h.b16 %v848
        %v1261 = vunpack.c.l.b16 %v849
        %v1262 = vunpack.c.h.b16 %v849
        %v1263 = vunpack.c.l.b16 %v850
        %v1264 = vunpack.c.h.b16 %v850
        %v1265 = vunpack.c.l.b16 %v851
        %v1266 = vunpack.c.h.b16 %v851
        %v1267 = vunpack.c.l.b16 %v852
        %v1268 = vunpack.c.h.b16 %v852
        %v1269 = vunpack.c.l.b16 %v853
        %v1270 = vunpack.c.h.b16 %v853
        %v1271 = vunpack.c.l.b16 %v854
        %v1272 = vunpack.c.h.b16 %v854
        %v1273 = vunpack.c.l.b16 %v855
        %v1274 = vunpack.c.h.b16 %v855
        %v1275 = vunpack.c.l.b16 %v856
        %v1276 = vunpack.c.h.b16 %v856
        %v1277 = vunpack.c.l.b16 %v857
        %v1278 = vunpack.c.h.b16 %v857
        %v1279 = vunpack.c.l.b16 %v858
        %v1280 = vunpack.c.h.b16 %v858
        %v1281 = vunpack.c.l.b16 %v859
        %v1282 = vunpack.c.h.b16 %v859
        %v1283 = vunpack.c.l.b16 %v860
        %v1284 = vunpack.c.h.b16 %v860
        %v1285 = vunpack.c.l.b16 %v861
        %v1286 = vunpack.c.h.b16 %v861
        %v1287 = vunpack.c.l.b16 %v862
        %v1288 = vunpack.c.h.b16 %v862
        %v1289 = vunpack.c.l.b16 %v863
        %v1290 = vunpack.c.h.b16 %v863
        %v1291 = vunpack.c.l.b16 %v864
        %v1292 = vunpack.c.h.b16 %v864
        %v1293 = vpack.c.b16 %v1231, %v1229
        %v1294 = vpack.c.b16 %v1232, %v1230
        %v1295 = vpack.c.b16 %v1235, %v1233
        %v1296 = vpack.c.b16 %v1236, %v1234
        %v1297 = vpack.c.b16 %v1239, %v1237
        %v1298 = vpack.c.b16 %v1240, %v1238
        %v1299 = vpack.c.b16 %v1243, %v1241
        %v1300 = vpack.c.b16 %v1244, %v1242
        %v1301 = vpack.c.b16 %v1247, %v1245
        %v1302 = vpack.c.b16 %v1248, %v1246
        %v1303 = vpack.c.b16 %v1251, %v1249
        %v1304 = vpack.c.b16 %v1252, %v1250
        %v1305 = vpack.c.b16 %v1255, %v1253
        %v1306 = vpack.c.b16 %v1256, %v1254
        %v1307 = vpack.c.b16 %v1259, %v1257
        %v1308 = vpack.c.b16 %v1260, %v1258
        %v1309 = vpack.c.b16 %v1263, %v1261
        %v1310 = vpack.c.b16 %v1264, %v1262
        %v1311 = vpack.c.b16 %v1267, %v1265
        %v1312 = vpack.c.b16 %v1268, %v1266
        %v1313 = vpack.c.b16 %v1271, %v1269
        %v1314 = vpack.c.b16 %v1272, %v1270
        %v1315 = vpack.c.b16 %v1275, %v1273
        %v1316 = vpack.c.b16 %v1276, %v1274
        %v1317 = vpack.c.b16 %v1279, %v1277
        %v1318 = vpack.c.b16 %v1280, %v1278
        %v1319 = vpack.c.b16 %v1283, %v1281
        %v1320 = vpack.c.b16 %v1284, %v1282
        %v1321 = vpack.c.b16 %v1287, %v1285
        %v1322 = vpack.c.b16 %v1288, %v1286
        %v1323 = vpack.c.b16 %v1291, %v1289
        %v1324 = vpack.c.b16 %v1292, %v1290
        %1357 = vmatprep.subr.bf16.mxu0 %v1308
        %1358 = vmatpush1.bf16.msra.mxu0 %v1307
        %1359 = vmatprep.subr.bf16.mxu0 %v1306
        %1360 = vmatpush1.bf16.msra.mxu0 %v1305
        %1361 = vmatprep.subr.bf16.mxu0 %v1304
        %1362 = vmatpush1.bf16.msra.mxu0 %v1303
        %1363 = vmatprep.subr.bf16.mxu0 %v1302
        %1364 = vmatpush1.bf16.msra.mxu0 %v1301
        %1365 = vmatprep.subr.bf16.mxu0 %v1300
        %1366 = vmatpush1.bf16.msra.mxu0 %v1299
        %1367 = vmatprep.subr.bf16.mxu0 %v1298
        %1368 = vmatpush1.bf16.msra.mxu0 %v1297
        %1369 = vmatprep.subr.bf16.mxu0 %v1296
        %1370 = vmatpush1.bf16.msra.mxu0 %v1295
        %1371 = vmatprep.subr.bf16.mxu0 %v1294
        %1372 = vmatpush1.bf16.msra.mxu0 %v1293
        %1373 = vmatprep.subr.bf16.mxu0 %v1324
        %1374 = vmatpush2.bf16.msra.mxu0 %v1323
        %1375 = vmatprep.subr.bf16.mxu0 %v1322
        %1376 = vmatpush2.bf16.msra.mxu0 %v1321
        %1377 = vmatprep.subr.bf16.mxu0 %v1320
        %1378 = vmatpush2.bf16.msra.mxu0 %v1319
        %1379 = vmatprep.subr.bf16.mxu0 %v1318
        %1380 = vmatpush2.bf16.msra.mxu0 %v1317
        %1381 = vmatprep.subr.bf16.mxu0 %v1316
        %1382 = vmatpush2.bf16.msra.mxu0 %v1315
        %1383 = vmatprep.subr.bf16.mxu0 %v1314
        %1384 = vmatpush2.bf16.msra.mxu0 %v1313
        %1385 = vmatprep.subr.bf16.mxu0 %v1312
        %1386 = vmatpush2.bf16.msra.mxu0 %v1311
        %1387 = vmatprep.subr.bf16.mxu0 %v1310
        %1388 = vmatpush2.bf16.msra.mxu0 %v1309
        %1389 = vmatprep.mubr.bf16.mxu0 %v1174
        %1390 = vmatmul.mubr.bf16.gmra.mxu0 %v1157
        %v1391 = vpop.f32.mrf.mxu0
        %v1392 = vadd.f32 %v1113, %v1391
        %v1393 = vpop.f32.mrf.mxu0
        %v1394 = vadd.f32 %v1115, %v1393
        %v1395 = vpop.f32.mrf.mxu0
        %v1396 = vadd.f32 %v1117, %v1395
        %v1397 = vpop.f32.mrf.mxu0
        %v1398 = vadd.f32 %v1119, %v1397
        %1399 = vmatprep.mubr.bf16.mxu0 %v1192
        %1400 = vmatmul.mubr.bf16.gmra.mxu0 %v1183
        %v1401 = vpop.f32.mrf.mxu0
        %v1402 = vadd.f32 %v1123, %v1401
        %v1403 = vpop.f32.mrf.mxu0
        %v1404 = vadd.f32 %v1125, %v1403
        %v1405 = vpop.f32.mrf.mxu0
        %v1406 = vadd.f32 %v1127, %v1405
        %v1407 = vpop.f32.mrf.mxu0
        %v1408 = vadd.f32 %v1129, %v1407
        %1409 = vdwg.mxu0
        %v1410 = vld [vmem:[#allocation2 + $0x10] sm:$0xff]
        %v1411 = vld [vmem:[#allocation2 + $0x18] sm:$0xff]
        %v1412 = vld [vmem:[#allocation2 + $0x20] sm:$0xff]
        %v1413 = vld [vmem:[#allocation2 + $0x28] sm:$0xff]
        %v1414 = vld [vmem:[#allocation2 + $0x30] sm:$0x11]
        %s1415 = scalar_lea.vmem [#allocation3], 512
        %v1416 = vld [vmem:[%s1415] sm:$0xff]
        %v1417 = vld [vmem:[%s1415 + $0x8] sm:$0xff]
        %v1418 = vld [vmem:[%s1415 + $0x10] sm:$0xff]
        %v1419 = vld [vmem:[%s1415 + $0x18] sm:$0xff]
        %v1420 = vld [vmem:[%s1415 + $0x20] sm:$0xff]
        %v1421 = vld [vmem:[%s1415 + $0x28] sm:$0xff]
        %v1422 = vld [vmem:[%s1415 + $0x30] sm:$0xff]
        %v1423 = vld [vmem:[%s1415 + $0x38] sm:$0xff]
        %v1424 = vld [vmem:[%s1415 + $0x40] sm:$0xff]
        %v1425 = vld [vmem:[%s1415 + $0x48] sm:$0xff]
        %v1426 = vld [vmem:[%s1415 + $0x50] sm:$0xff]
        %v1427 = vld [vmem:[%s1415 + $0x58] sm:$0xff]
        %v1428 = vld [vmem:[%s1415 + $0x60] sm:$0xff]
        %v1429 = vld [vmem:[%s1415 + $0x68] sm:$0xff]
        %v1430 = vld [vmem:[%s1415 + $0x70] sm:$0xff]
        %v1431 = vld [vmem:[%s1415 + $0x78] sm:$0xff]
        %v1432 = vld [vmem:[%s1415 + $0x80] sm:$0xff]
        %v1433 = vld [vmem:[%s1415 + $0x88] sm:$0xff]
        %v1434 = vld [vmem:[%s1415 + $0x90] sm:$0xff]
        %v1435 = vld [vmem:[%s1415 + $0x98] sm:$0xff]
        %v1436 = vld [vmem:[%s1415 + $0xa0] sm:$0xff]
        %v1437 = vld [vmem:[%s1415 + $0xa8] sm:$0xff]
        %v1438 = vld [vmem:[%s1415 + $0xb0] sm:$0xff]
        %v1439 = vld [vmem:[%s1415 + $0xb8] sm:$0xff]
        %v1440 = vld [vmem:[%s1415 + $0xc0] sm:$0xff]
        %v1441 = vld [vmem:[%s1415 + $0xc8] sm:$0xff]
        %v1442 = vld [vmem:[%s1415 + $0xd0] sm:$0xff]
        %v1443 = vld [vmem:[%s1415 + $0xd8] sm:$0xff]
        %v1444 = vld [vmem:[%s1415 + $0xe0] sm:$0xff]
        %v1445 = vld [vmem:[%s1415 + $0xe8] sm:$0xff]
        %v1446 = vld [vmem:[%s1415 + $0xf0] sm:$0xff]
        %v1447 = vld [vmem:[%s1415 + $0xf8] sm:$0xff]
        %v1453 = vunpack.c.l.b16 %v1410
        %v1454 = vunpack.c.h.b16 %v1410
        %v1455 = vunpack.c.l.b16 %v1411
        %v1456 = vunpack.c.h.b16 %v1411
        %v1457 = vunpack.c.l.b16 %v1412
        %v1458 = vunpack.c.h.b16 %v1412
        %v1459 = vunpack.c.l.b16 %v1413
        %v1460 = vunpack.c.h.b16 %v1413
        %v1461 = vunpack.c.l.b16 %v1414
        %v1462 = vunpack.c.h.b16 %v1414
        %v1463 = vpack.c.b16 %v1455, %v1453
        %v1464 = vpack.c.b16 %v1456, %v1454
        %v1465 = vpack.c.b16 %v1459, %v1457
        %v1466 = vpack.c.b16 %v1460, %v1458
        %v1467 = vpack.c.b16 %v1461, %v1461
        %v1468 = vpack.c.b16 %v1462, %v1462
        %v1470 = vshrl.u32 %v1463, 16
        %v1472 = vshll.u32 %v1463, 16
        %v1474 = vrot.slane %v1472, 1
        %v1475 = vor.u32 %v1470, %v1474
        %v1477 = vshll.u32 %v1465, 16
        %v1479 = vrot.slane %v1477, 1
        %v1480 = vsel %vm338, %v1475, %v1479
        %v1482 = vshrl.u32 %v1464, 16
        %v1484 = vshll.u32 %v1464, 16
        %v1486 = vrot.slane %v1484, 1
        %v1487 = vor.u32 %v1482, %v1486
        %v1489 = vshll.u32 %v1466, 16
        %v1491 = vrot.slane %v1489, 1
        %v1492 = vsel %vm338, %v1487, %v1491
        %v1493 = vshrl.u32 %v1465, 16
        %v1495 = vor.u32 %v1493, %v1479
        %v1497 = vshll.u32 %v1467, 16
        %v1499 = vrot.slane %v1497, 1
        %v1500 = vsel %vm338, %v1495, %v1499
        %v1501 = vshrl.u32 %v1466, 16
        %v1503 = vor.u32 %v1501, %v1491
        %v1505 = vshll.u32 %v1468, 16
        %v1507 = vrot.slane %v1505, 1
        %v1508 = vsel %vm338, %v1503, %v1507
        %v1545 = vunpack.c.l.b16 %v1416
        %v1546 = vunpack.c.h.b16 %v1416
        %v1547 = vunpack.c.l.b16 %v1417
        %v1548 = vunpack.c.h.b16 %v1417
        %v1549 = vunpack.c.l.b16 %v1418
        %v1550 = vunpack.c.h.b16 %v1418
        %v1551 = vunpack.c.l.b16 %v1419
        %v1552 = vunpack.c.h.b16 %v1419
        %v1553 = vunpack.c.l.b16 %v1420
        %v1554 = vunpack.c.h.b16 %v1420
        %v1555 = vunpack.c.l.b16 %v1421
        %v1556 = vunpack.c.h.b16 %v1421
        %v1557 = vunpack.c.l.b16 %v1422
        %v1558 = vunpack.c.h.b16 %v1422
        %v1559 = vunpack.c.l.b16 %v1423
        %v1560 = vunpack.c.h.b16 %v1423
        %v1561 = vunpack.c.l.b16 %v1424
        %v1562 = vunpack.c.h.b16 %v1424
        %v1563 = vunpack.c.l.b16 %v1425
        %v1564 = vunpack.c.h.b16 %v1425
        %v1565 = vunpack.c.l.b16 %v1426
        %v1566 = vunpack.c.h.b16 %v1426
        %v1567 = vunpack.c.l.b16 %v1427
        %v1568 = vunpack.c.h.b16 %v1427
        %v1569 = vunpack.c.l.b16 %v1428
        %v1570 = vunpack.c.h.b16 %v1428
        %v1571 = vunpack.c.l.b16 %v1429
        %v1572 = vunpack.c.h.b16 %v1429
        %v1573 = vunpack.c.l.b16 %v1430
        %v1574 = vunpack.c.h.b16 %v1430
        %v1575 = vunpack.c.l.b16 %v1431
        %v1576 = vunpack.c.h.b16 %v1431
        %v1577 = vunpack.c.l.b16 %v1432
        %v1578 = vunpack.c.h.b16 %v1432
        %v1579 = vunpack.c.l.b16 %v1433
        %v1580 = vunpack.c.h.b16 %v1433
        %v1581 = vunpack.c.l.b16 %v1434
        %v1582 = vunpack.c.h.b16 %v1434
        %v1583 = vunpack.c.l.b16 %v1435
        %v1584 = vunpack.c.h.b16 %v1435
        %v1585 = vunpack.c.l.b16 %v1436
        %v1586 = vunpack.c.h.b16 %v1436
        %v1587 = vunpack.c.l.b16 %v1437
        %v1588 = vunpack.c.h.b16 %v1437
        %v1589 = vunpack.c.l.b16 %v1438
        %v1590 = vunpack.c.h.b16 %v1438
        %v1591 = vunpack.c.l.b16 %v1439
        %v1592 = vunpack.c.h.b16 %v1439
        %v1593 = vunpack.c.l.b16 %v1440
        %v1594 = vunpack.c.h.b16 %v1440
        %v1595 = vunpack.c.l.b16 %v1441
        %v1596 = vunpack.c.h.b16 %v1441
        %v1597 = vunpack.c.l.b16 %v1442
        %v1598 = vunpack.c.h.b16 %v1442
        %v1599 = vunpack.c.l.b16 %v1443
        %v1600 = vunpack.c.h.b16 %v1443
        %v1601 = vunpack.c.l.b16 %v1444
        %v1602 = vunpack.c.h.b16 %v1444
        %v1603 = vunpack.c.l.b16 %v1445
        %v1604 = vunpack.c.h.b16 %v1445
        %v1605 = vunpack.c.l.b16 %v1446
        %v1606 = vunpack.c.h.b16 %v1446
        %v1607 = vunpack.c.l.b16 %v1447
        %v1608 = vunpack.c.h.b16 %v1447
        %v1609 = vpack.c.b16 %v1547, %v1545
        %v1610 = vpack.c.b16 %v1548, %v1546
        %v1611 = vpack.c.b16 %v1551, %v1549
        %v1612 = vpack.c.b16 %v1552, %v1550
        %v1613 = vpack.c.b16 %v1555, %v1553
        %v1614 = vpack.c.b16 %v1556, %v1554
        %v1615 = vpack.c.b16 %v1559, %v1557
        %v1616 = vpack.c.b16 %v1560, %v1558
        %v1617 = vpack.c.b16 %v1563, %v1561
        %v1618 = vpack.c.b16 %v1564, %v1562
        %v1619 = vpack.c.b16 %v1567, %v1565
        %v1620 = vpack.c.b16 %v1568, %v1566
        %v1621 = vpack.c.b16 %v1571, %v1569
        %v1622 = vpack.c.b16 %v1572, %v1570
        %v1623 = vpack.c.b16 %v1575, %v1573
        %v1624 = vpack.c.b16 %v1576, %v1574
        %v1625 = vpack.c.b16 %v1579, %v1577
        %v1626 = vpack.c.b16 %v1580, %v1578
        %v1627 = vpack.c.b16 %v1583, %v1581
        %v1628 = vpack.c.b16 %v1584, %v1582
        %v1629 = vpack.c.b16 %v1587, %v1585
        %v1630 = vpack.c.b16 %v1588, %v1586
        %v1631 = vpack.c.b16 %v1591, %v1589
        %v1632 = vpack.c.b16 %v1592, %v1590
        %v1633 = vpack.c.b16 %v1595, %v1593
        %v1634 = vpack.c.b16 %v1596, %v1594
        %v1635 = vpack.c.b16 %v1599, %v1597
        %v1636 = vpack.c.b16 %v1600, %v1598
        %v1637 = vpack.c.b16 %v1603, %v1601
        %v1638 = vpack.c.b16 %v1604, %v1602
        %v1639 = vpack.c.b16 %v1607, %v1605
        %v1640 = vpack.c.b16 %v1608, %v1606
        %1673 = vmatprep.subr.bf16.mxu0 %v1624
        %1674 = vmatpush1.bf16.msra.mxu0 %v1623
        %1675 = vmatprep.subr.bf16.mxu0 %v1622
        %1676 = vmatpush1.bf16.msra.mxu0 %v1621
        %1677 = vmatprep.subr.bf16.mxu0 %v1620
        %1678 = vmatpush1.bf16.msra.mxu0 %v1619
        %1679 = vmatprep.subr.bf16.mxu0 %v1618
        %1680 = vmatpush1.bf16.msra.mxu0 %v1617
        %1681 = vmatprep.subr.bf16.mxu0 %v1616
        %1682 = vmatpush1.bf16.msra.mxu0 %v1615
        %1683 = vmatprep.subr.bf16.mxu0 %v1614
        %1684 = vmatpush1.bf16.msra.mxu0 %v1613
        %1685 = vmatprep.subr.bf16.mxu0 %v1612
        %1686 = vmatpush1.bf16.msra.mxu0 %v1611
        %1687 = vmatprep.subr.bf16.mxu0 %v1610
        %1688 = vmatpush1.bf16.msra.mxu0 %v1609
        %1689 = vmatprep.subr.bf16.mxu0 %v1640
        %1690 = vmatpush2.bf16.msra.mxu0 %v1639
        %1691 = vmatprep.subr.bf16.mxu0 %v1638
        %1692 = vmatpush2.bf16.msra.mxu0 %v1637
        %1693 = vmatprep.subr.bf16.mxu0 %v1636
        %1694 = vmatpush2.bf16.msra.mxu0 %v1635
        %1695 = vmatprep.subr.bf16.mxu0 %v1634
        %1696 = vmatpush2.bf16.msra.mxu0 %v1633
        %1697 = vmatprep.subr.bf16.mxu0 %v1632
        %1698 = vmatpush2.bf16.msra.mxu0 %v1631
        %1699 = vmatprep.subr.bf16.mxu0 %v1630
        %1700 = vmatpush2.bf16.msra.mxu0 %v1629
        %1701 = vmatprep.subr.bf16.mxu0 %v1628
        %1702 = vmatpush2.bf16.msra.mxu0 %v1627
        %1703 = vmatprep.subr.bf16.mxu0 %v1626
        %1704 = vmatpush2.bf16.msra.mxu0 %v1625
        %1705 = vmatprep.mubr.bf16.mxu0 %v1492
        %1706 = vmatmul.mubr.bf16.gmra.mxu0 %v1480
        %v1707 = vpop.f32.mrf.mxu0
        %v1708 = vadd.f32 0.0, %v1707
        %v1709 = vpop.f32.mrf.mxu0
        %v1710 = vadd.f32 0.0, %v1709
        %v1711 = vpop.f32.mrf.mxu0
        %v1712 = vadd.f32 0.0, %v1711
        %v1713 = vpop.f32.mrf.mxu0
        %v1714 = vadd.f32 0.0, %v1713
        %1715 = vmatprep.mubr.bf16.mxu0 %v1508
        %1716 = vmatmul.mubr.bf16.gmra.mxu0 %v1500
        %v1717 = vpop.f32.mrf.mxu0
        %v1718 = vadd.f32 0.0, %v1717
        %v1719 = vpop.f32.mrf.mxu0
        %v1720 = vadd.f32 0.0, %v1719
        %v1721 = vpop.f32.mrf.mxu0
        %v1722 = vadd.f32 0.0, %v1721
        %v1723 = vpop.f32.mrf.mxu0
        %v1724 = vadd.f32 0.0, %v1723
        %1725 = vdwg.mxu0
        %v1726 = vadd.f32 %v1392, %v1708
        %v1727 = vadd.f32 %v1394, %v1710
        %v1728 = vadd.f32 %v1396, %v1712
        %v1729 = vadd.f32 %v1398, %v1714
        %v1730 = vadd.f32 %v1402, %v1718
        %v1731 = vadd.f32 %v1404, %v1720
        %v1732 = vadd.f32 %v1406, %v1722
        %v1733 = vadd.f32 %v1408, %v1724
        %s1734 = scalar_lea.vmem %s4, 2
        %v1735 = vld [vmem:[%s1734] sm:$0x3]
        %v1737 = vlaneseq
        %v1738 = vshrl.u32 %v1737, 7
        %v1739 = vsub.s32 0, %v1738
        %v1740 = vrot.slane %v1735, %v1739
        %v1741 = vlaneseq
        %v1742 = vshrl.u32 %v1741, 7
        %v1743 = vsub.s32 1, %v1742
        %v1744 = vrot.slane %v1735, %v1743
        %v1747 = vmul.f32 %v1726, %v1740
        %v1748 = vmul.f32 %v1727, %v1744
        %v1749 = vmul.f32 %v1728, %v1740
        %v1750 = vmul.f32 %v1729, %v1744
        %v1751 = vmul.f32 %v1730, %v1740
        %v1752 = vmul.f32 %v1731, %v1744
        %v1753 = vmul.f32 %v1732, %v1740
        %v1754 = vmul.f32 %v1733, %v1744
        %s1755 = scalar_lea.vmem %s4, 4
        %v1756 = vld [vmem:[%s1755] sm:$0x3]
        %v1758 = vlaneseq
        %v1759 = vshrl.u32 %v1758, 7
        %v1760 = vsub.s32 0, %v1759
        %v1761 = vrot.slane %v1756, %v1760
        %v1762 = vlaneseq
        %v1763 = vshrl.u32 %v1762, 7
        %v1764 = vsub.s32 1, %v1763
        %v1765 = vrot.slane %v1756, %v1764
        %v1768 = vadd.f32 %v1747, %v1761
        %v1769 = vadd.f32 %v1748, %v1765
        %v1770 = vadd.f32 %v1749, %v1761
        %v1771 = vadd.f32 %v1750, %v1765
        %v1772 = vadd.f32 %v1751, %v1761
        %v1773 = vadd.f32 %v1752, %v1765
        %v1774 = vadd.f32 %v1753, %v1761
        %v1775 = vadd.f32 %v1754, %v1765
        %v1776 = vmax.f32 %v1768, 0.0
        %v1777 = vmax.f32 %v1769, 0.0
        %v1778 = vmax.f32 %v1770, 0.0
        %v1779 = vmax.f32 %v1771, 0.0
        %v1780 = vmax.f32 %v1772, 0.0
        %v1781 = vmax.f32 %v1773, 0.0
        %v1782 = vmax.f32 %v1774, 0.0
        %v1783 = vmax.f32 %v1775, 0.0
        %v1784 = vpack.c.bf16 %v1778, %v1776
        %v1785 = vpack.c.bf16 %v1779, %v1777
        %v1786 = vpack.c.bf16 %v1782, %v1780
        %v1787 = vpack.c.bf16 %v1783, %v1781
        %v1788 = vld [vmem:[%s5] sm:$0xf]
        %v1789 = vld [vmem:[%s5 + $0x4] sm:$0xf]
        %v1790 = vld [vmem:[%s5 + $0x8] sm:$0x1]
        %v1794 = vunpack.c.l.b16 %v1788
        %v1795 = vunpack.c.l.b16 %v1789
        %v1796 = vunpack.c.l.b16 %v1790
        %v1797 = vpack.c.b16 %v1795, %v1794
        %v1798 = vpack.c.b16 %v1796, %v1796
        %vm1799 = vcmask 261120
        %v1801 = vsel %vm1799, %v1797, 0
        %v1804 = vsel %vm1799, %v1798, 0
        %1806 = vmatprep.subr.bf16.mxu0 0
        %1807 = vmatpush1.bf16.msra.mxu0 0
        %1808 = vmatprep.subr.bf16.mxu0 0
        %1809 = vmatpush1.bf16.msra.mxu0 0
        %1810 = vmatprep.subr.bf16.mxu0 0
        %1811 = vmatpush1.bf16.msra.mxu0 0
        %1812 = vmatprep.subr.bf16.mxu0 0
        %1813 = vmatpush1.bf16.msra.mxu0 0
        %1814 = vmatprep.subr.bf16.mxu0 0
        %1815 = vmatpush1.bf16.msra.mxu0 0
        %1816 = vmatprep.subr.bf16.mxu0 0
        %1817 = vmatpush1.bf16.msra.mxu0 0
        %1818 = vmatprep.subr.bf16.mxu0 %v1787
        %1819 = vmatpush1.bf16.msra.mxu0 %v1786
        %1820 = vmatprep.subr.bf16.mxu0 %v1785
        %1821 = vmatpush1.bf16.msra.mxu0 %v1784
        %1822 = vmatprep.subr.bf16.mxu0 0
        %1823 = vmatpush2.bf16.msra.mxu0 0
        %1824 = vmatprep.subr.bf16.mxu0 0
        %1825 = vmatpush2.bf16.msra.mxu0 0
        %1826 = vmatprep.subr.bf16.mxu0 0
        %1827 = vmatpush2.bf16.msra.mxu0 0
        %1828 = vmatprep.subr.bf16.mxu0 0
        %1829 = vmatpush2.bf16.msra.mxu0 0
        %1830 = vmatprep.subr.bf16.mxu0 0
        %1831 = vmatpush2.bf16.msra.mxu0 0
        %1832 = vmatprep.subr.bf16.mxu0 0
        %1833 = vmatpush2.bf16.msra.mxu0 0
        %1834 = vmatprep.subr.bf16.mxu0 0
        %1835 = vmatpush2.bf16.msra.mxu0 0
        %1836 = vmatprep.subr.bf16.mxu0 0
        %1837 = vmatpush2.bf16.msra.mxu0 0
        %1838 = vmatprep.mubr.bf16.mxu0 0
        %1839 = vmatmul.mubr.bf16.gmra.mxu0 %v1801
        %v1840 = vpop.f32.mrf.mxu0
        %v1841 = vadd.f32 0.0, %v1840
        %v1842 = vpop.f32.mrf.mxu0
        %v1843 = vadd.f32 0.0, %v1842
        %v1844 = vpop.f32.mrf.mxu0
        %v1845 = vadd.f32 0.0, %v1844
        %v1846 = vpop.f32.mrf.mxu0
        %v1847 = vadd.f32 0.0, %v1846
        %1848 = vmatprep.mubr.bf16.mxu0 0
        %1849 = vmatmul.mubr.bf16.gmra.mxu0 %v1804
        %v1850 = vpop.f32.mrf.mxu0
        %v1851 = vadd.f32 0.0, %v1850
        %v1852 = vpop.f32.mrf.mxu0
        %v1853 = vadd.f32 0.0, %v1852
        %v1854 = vpop.f32.mrf.mxu0
        %v1855 = vpop.f32.mrf.mxu0
        %1856 = vdwg.mxu0
        %s1857 = scalar_lea.vmem %s5, 12
        %v1858 = vld [vmem:[%s1857] sm:$0xf]
        %v1859 = vld [vmem:[%s1857 + $0x4] sm:$0xf]
        %v1860 = vld [vmem:[%s1857 + $0x8] sm:$0x1]
        %v1864 = vunpack.c.l.b16 %v1858
        %v1865 = vunpack.c.l.b16 %v1859
        %v1866 = vunpack.c.l.b16 %v1860
        %v1867 = vpack.c.b16 %v1865, %v1864
        %v1868 = vpack.c.b16 %v1866, %v1866
        %v1870 = vsel %vm1799, %v1867, 0
        %v1873 = vsel %vm1799, %v1868, 0
        %1875 = vmatprep.subr.bf16.mxu0 0
        %1876 = vmatpush1.bf16.msra.mxu0 0
        %1877 = vmatprep.subr.bf16.mxu0 0
        %1878 = vmatpush1.bf16.msra.mxu0 0
        %1879 = vmatprep.subr.bf16.mxu0 0
        %1880 = vmatpush1.bf16.msra.mxu0 0
        %1881 = vmatprep.subr.bf16.mxu0 0
        %1882 = vmatpush1.bf16.msra.mxu0 0
        %1883 = vmatprep.subr.bf16.mxu0 0
        %1884 = vmatpush1.bf16.msra.mxu0 0
        %1885 = vmatprep.subr.bf16.mxu0 0
        %1886 = vmatpush1.bf16.msra.mxu0 0
        %1887 = vmatprep.subr.bf16.mxu0 %v1787
        %1888 = vmatpush1.bf16.msra.mxu0 %v1786
        %1889 = vmatprep.subr.bf16.mxu0 %v1785
        %1890 = vmatpush1.bf16.msra.mxu0 %v1784
        %1891 = vmatprep.subr.bf16.mxu0 0
        %1892 = vmatpush2.bf16.msra.mxu0 0
        %1893 = vmatprep.subr.bf16.mxu0 0
        %1894 = vmatpush2.bf16.msra.mxu0 0
        %1895 = vmatprep.subr.bf16.mxu0 0
        %1896 = vmatpush2.bf16.msra.mxu0 0
        %1897 = vmatprep.subr.bf16.mxu0 0
        %1898 = vmatpush2.bf16.msra.mxu0 0
        %1899 = vmatprep.subr.bf16.mxu0 0
        %1900 = vmatpush2.bf16.msra.mxu0 0
        %1901 = vmatprep.subr.bf16.mxu0 0
        %1902 = vmatpush2.bf16.msra.mxu0 0
        %1903 = vmatprep.subr.bf16.mxu0 0
        %1904 = vmatpush2.bf16.msra.mxu0 0
        %1905 = vmatprep.subr.bf16.mxu0 0
        %1906 = vmatpush2.bf16.msra.mxu0 0
        %1907 = vmatprep.mubr.bf16.mxu0 0
        %1908 = vmatmul.mubr.bf16.gmra.mxu0 %v1870
        %v1909 = vpop.f32.mrf.mxu0
        %v1910 = vadd.f32 0.0, %v1909
        %v1911 = vpop.f32.mrf.mxu0
        %v1912 = vadd.f32 0.0, %v1911
        %v1913 = vpop.f32.mrf.mxu0
        %v1914 = vadd.f32 0.0, %v1913
        %v1915 = vpop.f32.mrf.mxu0
        %v1916 = vadd.f32 0.0, %v1915
        %1917 = vmatprep.mubr.bf16.mxu0 0
        %1918 = vmatmul.mubr.bf16.gmra.mxu0 %v1873
        %v1919 = vpop.f32.mrf.mxu0
        %v1920 = vadd.f32 0.0, %v1919
        %v1921 = vpop.f32.mrf.mxu0
        %v1922 = vadd.f32 0.0, %v1921
        %v1923 = vpop.f32.mrf.mxu0
        %v1924 = vpop.f32.mrf.mxu0
        %1925 = vdwg.mxu0
        %v1926 = vmax.f32 %v1841, %v1910
        %v1927 = vmax.f32 %v1843, %v1912
        %v1928 = vmax.f32 %v1845, %v1914
        %v1929 = vmax.f32 %v1847, %v1916
        %v1930 = vmax.f32 %v1851, %v1920
        %v1931 = vmax.f32 %v1853, %v1922
        %v1932 = vpack.c.bf16 %v1928, %v1926
        %v1933 = vpack.c.bf16 %v1929, %v1927
        %v1934 = vpack.c.bf16 %v1930, %v1930
        %v1935 = vpack.c.bf16 %v1931, %v1931
        %v1936 = vld [vmem:[%s6] sm:$0xf]
        %v1937 = vld [vmem:[%s6 + $0x4] sm:$0xf]
        %v1938 = vld [vmem:[%s6 + $0x8] sm:$0xf]
        %v1939 = vld [vmem:[%s6 + $0xc] sm:$0xf]
        %v1940 = vld [vmem:[%s6 + $0x10] sm:$0xf]
        %v1941 = vld [vmem:[%s6 + $0x14] sm:$0xf]
        %v1942 = vld [vmem:[%s6 + $0x18] sm:$0xf]
        %v1943 = vld [vmem:[%s6 + $0x1c] sm:$0xf]
        %v1944 = vld [vmem:[%s6 + $0x20] sm:$0xf]
        %v1945 = vld [vmem:[%s6 + $0x24] sm:$0xf]
        %v1946 = vld [vmem:[%s6 + $0x28] sm:$0xf]
        %v1947 = vld [vmem:[%s6 + $0x2c] sm:$0xf]
        %v1948 = vld [vmem:[%s6 + $0x30] sm:$0xf]
        %v1949 = vld [vmem:[%s6 + $0x34] sm:$0xf]
        %v1950 = vld [vmem:[%s6 + $0x38] sm:$0xf]
        %v1951 = vld [vmem:[%s6 + $0x3c] sm:$0xf]
        %v1952 = vld [vmem:[%s6 + $0x40] sm:$0xf]
        %v1953 = vld [vmem:[%s6 + $0x44] sm:$0xf]
        %v1954 = vld [vmem:[%s6 + $0x48] sm:$0xf]
        %v1955 = vld [vmem:[%s6 + $0x4c] sm:$0xf]
        %v1956 = vld [vmem:[%s6 + $0x50] sm:$0xf]
        %v1957 = vld [vmem:[%s6 + $0x54] sm:$0xf]
        %v1958 = vld [vmem:[%s6 + $0x58] sm:$0xf]
        %v1959 = vld [vmem:[%s6 + $0x5c] sm:$0xf]
        %v1960 = vld [vmem:[%s6 + $0x60] sm:$0xf]
        %v1961 = vld [vmem:[%s6 + $0x64] sm:$0xf]
        %v1962 = vld [vmem:[%s6 + $0x68] sm:$0xf]
        %v1963 = vld [vmem:[%s6 + $0x6c] sm:$0xf]
        %v1964 = vld [vmem:[%s6 + $0x70] sm:$0xf]
        %v1965 = vld [vmem:[%s6 + $0x74] sm:$0xf]
        %v1966 = vld [vmem:[%s6 + $0x78] sm:$0xf]
        %v1967 = vld [vmem:[%s6 + $0x7c] sm:$0xf]
        %v2000 = vunpack.c.l.b16 %v1936
        %v2001 = vunpack.c.l.b16 %v1937
        %v2002 = vunpack.c.l.b16 %v1938
        %v2003 = vunpack.c.l.b16 %v1939
        %v2004 = vunpack.c.l.b16 %v1940
        %v2005 = vunpack.c.l.b16 %v1941
        %v2006 = vunpack.c.l.b16 %v1942
        %v2007 = vunpack.c.l.b16 %v1943
        %v2008 = vunpack.c.l.b16 %v1944
        %v2009 = vunpack.c.l.b16 %v1945
        %v2010 = vunpack.c.l.b16 %v1946
        %v2011 = vunpack.c.l.b16 %v1947
        %v2012 = vunpack.c.l.b16 %v1948
        %v2013 = vunpack.c.l.b16 %v1949
        %v2014 = vunpack.c.l.b16 %v1950
        %v2015 = vunpack.c.l.b16 %v1951
        %v2016 = vunpack.c.l.b16 %v1952
        %v2017 = vunpack.c.l.b16 %v1953
        %v2018 = vunpack.c.l.b16 %v1954
        %v2019 = vunpack.c.l.b16 %v1955
        %v2020 = vunpack.c.l.b16 %v1956
        %v2021 = vunpack.c.l.b16 %v1957
        %v2022 = vunpack.c.l.b16 %v1958
        %v2023 = vunpack.c.l.b16 %v1959
        %v2024 = vunpack.c.l.b16 %v1960
        %v2025 = vunpack.c.l.b16 %v1961
        %v2026 = vunpack.c.l.b16 %v1962
        %v2027 = vunpack.c.l.b16 %v1963
        %v2028 = vunpack.c.l.b16 %v1964
        %v2029 = vunpack.c.l.b16 %v1965
        %v2030 = vunpack.c.l.b16 %v1966
        %v2031 = vunpack.c.l.b16 %v1967
        %v2032 = vpack.c.b16 %v2001, %v2000
        %v2033 = vpack.c.b16 %v2003, %v2002
        %v2034 = vpack.c.b16 %v2005, %v2004
        %v2035 = vpack.c.b16 %v2007, %v2006
        %v2036 = vpack.c.b16 %v2009, %v2008
        %v2037 = vpack.c.b16 %v2011, %v2010
        %v2038 = vpack.c.b16 %v2013, %v2012
        %v2039 = vpack.c.b16 %v2015, %v2014
        %v2040 = vpack.c.b16 %v2017, %v2016
        %v2041 = vpack.c.b16 %v2019, %v2018
        %v2042 = vpack.c.b16 %v2021, %v2020
        %v2043 = vpack.c.b16 %v2023, %v2022
        %v2044 = vpack.c.b16 %v2025, %v2024
        %v2045 = vpack.c.b16 %v2027, %v2026
        %v2046 = vpack.c.b16 %v2029, %v2028
        %v2047 = vpack.c.b16 %v2031, %v2030
        %2064 = vmatprep.subr.bf16.mxu0 0
        %2065 = vmatpush1.bf16.msra.mxu0 %v2039
        %2066 = vmatprep.subr.bf16.mxu0 0
        %2067 = vmatpush1.bf16.msra.mxu0 %v2038
        %2068 = vmatprep.subr.bf16.mxu0 0
        %2069 = vmatpush1.bf16.msra.mxu0 %v2037
        %2070 = vmatprep.subr.bf16.mxu0 0
        %2071 = vmatpush1.bf16.msra.mxu0 %v2036
        %2072 = vmatprep.subr.bf16.mxu0 0
        %2073 = vmatpush1.bf16.msra.mxu0 %v2035
        %2074 = vmatprep.subr.bf16.mxu0 0
        %2075 = vmatpush1.bf16.msra.mxu0 %v2034
        %2076 = vmatprep.subr.bf16.mxu0 0
        %2077 = vmatpush1.bf16.msra.mxu0 %v2033
        %2078 = vmatprep.subr.bf16.mxu0 0
        %2079 = vmatpush1.bf16.msra.mxu0 %v2032
        %2080 = vmatprep.subr.bf16.mxu0 0
        %2081 = vmatpush2.bf16.msra.mxu0 %v2047
        %2082 = vmatprep.subr.bf16.mxu0 0
        %2083 = vmatpush2.bf16.msra.mxu0 %v2046
        %2084 = vmatprep.subr.bf16.mxu0 0
        %2085 = vmatpush2.bf16.msra.mxu0 %v2045
        %2086 = vmatprep.subr.bf16.mxu0 0
        %2087 = vmatpush2.bf16.msra.mxu0 %v2044
        %2088 = vmatprep.subr.bf16.mxu0 0
        %2089 = vmatpush2.bf16.msra.mxu0 %v2043
        %2090 = vmatprep.subr.bf16.mxu0 0
        %2091 = vmatpush2.bf16.msra.mxu0 %v2042
        %2092 = vmatprep.subr.bf16.mxu0 0
        %2093 = vmatpush2.bf16.msra.mxu0 %v2041
        %2094 = vmatprep.subr.bf16.mxu0 0
        %2095 = vmatpush2.bf16.msra.mxu0 %v2040
        %2096 = vmatprep.mubr.bf16.mxu0 %v1933
        %2097 = vmatmul.mubr.bf16.gmra.mxu0 %v1932
        %v2098 = vpop.f32.mrf.mxu0
        %v2099 = vadd.f32 0.0, %v2098
        %v2100 = vpop.f32.mrf.mxu0
        %v2101 = vpop.f32.mrf.mxu0
        %v2102 = vadd.f32 0.0, %v2101
        %v2103 = vpop.f32.mrf.mxu0
        %2104 = vmatprep.mubr.bf16.mxu0 %v1935
        %2105 = vmatmul.mubr.bf16.gmra.mxu0 %v1934
        %v2106 = vpop.f32.mrf.mxu0
        %v2107 = vadd.f32 0.0, %v2106
        %v2108 = vpop.f32.mrf.mxu0
        %v2109 = vpop.f32.mrf.mxu0
        %v2110 = vpop.f32.mrf.mxu0
        %2111 = vdwg.mxu0
        %s2112 = scalar_lea.vmem %s6, 128
        %v2113 = vld [vmem:[%s2112] sm:$0xf]
        %v2114 = vld [vmem:[%s2112 + $0x4] sm:$0xf]
        %v2115 = vld [vmem:[%s2112 + $0x8] sm:$0xf]
        %v2116 = vld [vmem:[%s2112 + $0xc] sm:$0xf]
        %v2117 = vld [vmem:[%s2112 + $0x10] sm:$0xf]
        %v2118 = vld [vmem:[%s2112 + $0x14] sm:$0xf]
        %v2119 = vld [vmem:[%s2112 + $0x18] sm:$0xf]
        %v2120 = vld [vmem:[%s2112 + $0x1c] sm:$0xf]
        %v2121 = vld [vmem:[%s2112 + $0x20] sm:$0xf]
        %v2122 = vld [vmem:[%s2112 + $0x24] sm:$0xf]
        %v2123 = vld [vmem:[%s2112 + $0x28] sm:$0xf]
        %v2124 = vld [vmem:[%s2112 + $0x2c] sm:$0xf]
        %v2125 = vld [vmem:[%s2112 + $0x30] sm:$0xf]
        %v2126 = vld [vmem:[%s2112 + $0x34] sm:$0xf]
        %v2127 = vld [vmem:[%s2112 + $0x38] sm:$0xf]
        %v2128 = vld [vmem:[%s2112 + $0x3c] sm:$0xf]
        %v2129 = vld [vmem:[%s2112 + $0x40] sm:$0xf]
        %v2130 = vld [vmem:[%s2112 + $0x44] sm:$0xf]
        %v2131 = vld [vmem:[%s2112 + $0x48] sm:$0xf]
        %v2132 = vld [vmem:[%s2112 + $0x4c] sm:$0xf]
        %v2133 = vld [vmem:[%s2112 + $0x50] sm:$0xf]
        %v2134 = vld [vmem:[%s2112 + $0x54] sm:$0xf]
        %v2135 = vld [vmem:[%s2112 + $0x58] sm:$0xf]
        %v2136 = vld [vmem:[%s2112 + $0x5c] sm:$0xf]
        %v2137 = vld [vmem:[%s2112 + $0x60] sm:$0xf]
        %v2138 = vld [vmem:[%s2112 + $0x64] sm:$0xf]
        %v2139 = vld [vmem:[%s2112 + $0x68] sm:$0xf]
        %v2140 = vld [vmem:[%s2112 + $0x6c] sm:$0xf]
        %v2141 = vld [vmem:[%s2112 + $0x70] sm:$0xf]
        %v2142 = vld [vmem:[%s2112 + $0x74] sm:$0xf]
        %v2143 = vld [vmem:[%s2112 + $0x78] sm:$0xf]
        %v2144 = vld [vmem:[%s2112 + $0x7c] sm:$0xf]
        %v2177 = vunpack.c.l.b16 %v2113
        %v2178 = vunpack.c.l.b16 %v2114
        %v2179 = vunpack.c.l.b16 %v2115
        %v2180 = vunpack.c.l.b16 %v2116
        %v2181 = vunpack.c.l.b16 %v2117
        %v2182 = vunpack.c.l.b16 %v2118
        %v2183 = vunpack.c.l.b16 %v2119
        %v2184 = vunpack.c.l.b16 %v2120
        %v2185 = vunpack.c.l.b16 %v2121
        %v2186 = vunpack.c.l.b16 %v2122
        %v2187 = vunpack.c.l.b16 %v2123
        %v2188 = vunpack.c.l.b16 %v2124
        %v2189 = vunpack.c.l.b16 %v2125
        %v2190 = vunpack.c.l.b16 %v2126
        %v2191 = vunpack.c.l.b16 %v2127
        %v2192 = vunpack.c.l.b16 %v2128
        %v2193 = vunpack.c.l.b16 %v2129
        %v2194 = vunpack.c.l.b16 %v2130
        %v2195 = vunpack.c.l.b16 %v2131
        %v2196 = vunpack.c.l.b16 %v2132
        %v2197 = vunpack.c.l.b16 %v2133
        %v2198 = vunpack.c.l.b16 %v2134
        %v2199 = vunpack.c.l.b16 %v2135
        %v2200 = vunpack.c.l.b16 %v2136
        %v2201 = vunpack.c.l.b16 %v2137
        %v2202 = vunpack.c.l.b16 %v2138
        %v2203 = vunpack.c.l.b16 %v2139
        %v2204 = vunpack.c.l.b16 %v2140
        %v2205 = vunpack.c.l.b16 %v2141
        %v2206 = vunpack.c.l.b16 %v2142
        %v2207 = vunpack.c.l.b16 %v2143
        %v2208 = vunpack.c.l.b16 %v2144
        %v2209 = vpack.c.b16 %v2178, %v2177
        %v2210 = vpack.c.b16 %v2180, %v2179
        %v2211 = vpack.c.b16 %v2182, %v2181
        %v2212 = vpack.c.b16 %v2184, %v2183
        %v2213 = vpack.c.b16 %v2186, %v2185
        %v2214 = vpack.c.b16 %v2188, %v2187
        %v2215 = vpack.c.b16 %v2190, %v2189
        %v2216 = vpack.c.b16 %v2192, %v2191
        %v2217 = vpack.c.b16 %v2194, %v2193
        %v2218 = vpack.c.b16 %v2196, %v2195
        %v2219 = vpack.c.b16 %v2198, %v2197
        %v2220 = vpack.c.b16 %v2200, %v2199
        %v2221 = vpack.c.b16 %v2202, %v2201
        %v2222 = vpack.c.b16 %v2204, %v2203
        %v2223 = vpack.c.b16 %v2206, %v2205
        %v2224 = vpack.c.b16 %v2208, %v2207
        %2241 = vmatprep.subr.bf16.mxu0 0
        %2242 = vmatpush1.bf16.msra.mxu0 %v2216
        %2243 = vmatprep.subr.bf16.mxu0 0
        %2244 = vmatpush1.bf16.msra.mxu0 %v2215
        %2245 = vmatprep.subr.bf16.mxu0 0
        %2246 = vmatpush1.bf16.msra.mxu0 %v2214
        %2247 = vmatprep.subr.bf16.mxu0 0
        %2248 = vmatpush1.bf16.msra.mxu0 %v2213
        %2249 = vmatprep.subr.bf16.mxu0 0
        %2250 = vmatpush1.bf16.msra.mxu0 %v2212
        %2251 = vmatprep.subr.bf16.mxu0 0
        %2252 = vmatpush1.bf16.msra.mxu0 %v2211
        %2253 = vmatprep.subr.bf16.mxu0 0
        %2254 = vmatpush1.bf16.msra.mxu0 %v2210
        %2255 = vmatprep.subr.bf16.mxu0 0
        %2256 = vmatpush1.bf16.msra.mxu0 %v2209
        %2257 = vmatprep.subr.bf16.mxu0 0
        %2258 = vmatpush2.bf16.msra.mxu0 %v2224
        %2259 = vmatprep.subr.bf16.mxu0 0
        %2260 = vmatpush2.bf16.msra.mxu0 %v2223
        %2261 = vmatprep.subr.bf16.mxu0 0
        %2262 = vmatpush2.bf16.msra.mxu0 %v2222
        %2263 = vmatprep.subr.bf16.mxu0 0
        %2264 = vmatpush2.bf16.msra.mxu0 %v2221
        %2265 = vmatprep.subr.bf16.mxu0 0
        %2266 = vmatpush2.bf16.msra.mxu0 %v2220
        %2267 = vmatprep.subr.bf16.mxu0 0
        %2268 = vmatpush2.bf16.msra.mxu0 %v2219
        %2269 = vmatprep.subr.bf16.mxu0 0
        %2270 = vmatpush2.bf16.msra.mxu0 %v2218
        %2271 = vmatprep.subr.bf16.mxu0 0
        %2272 = vmatpush2.bf16.msra.mxu0 %v2217
        %2273 = vmatprep.mubr.bf16.mxu0 %v1933
        %2274 = vmatmul.mubr.bf16.gmra.mxu0 %v1932
        %v2275 = vpop.f32.mrf.mxu0
        %v2276 = vadd.f32 0.0, %v2275
        %v2277 = vpop.f32.mrf.mxu0
        %v2278 = vpop.f32.mrf.mxu0
        %v2279 = vadd.f32 0.0, %v2278
        %v2280 = vpop.f32.mrf.mxu0
        %2281 = vmatprep.mubr.bf16.mxu0 %v1935
        %2282 = vmatmul.mubr.bf16.gmra.mxu0 %v1934
        %v2283 = vpop.f32.mrf.mxu0
        %v2284 = vadd.f32 0.0, %v2283
        %v2285 = vpop.f32.mrf.mxu0
        %v2286 = vpop.f32.mrf.mxu0
        %v2287 = vpop.f32.mrf.mxu0
        %2288 = vdwg.mxu0
        %v2289 = vmax.f32 %v2099, %v2276
        %v2290 = vmax.f32 %v2102, %v2279
        %v2291 = vmax.f32 %v2107, %v2284
        %v2292 = vpack.c.bf16 %v2290, %v2289
        %v2293 = vpack.c.bf16 %v2291, %v2291
        %v2296 = vunpack.c.l.b16 %v2292
        %v2297 = vunpack.c.h.b16 %v2292
        %v2298 = vunpack.c.l.b16 %v2293
        %v2299 = vpack.c.b16 %v2296, %v2296
        %v2300 = vpack.c.b16 %v2297, %v2297
        %v2301 = vpack.c.b16 %v2298, %v2298
        %2305 = vst [vmem:[%s293] sm:$0xf] %v2299
        %2306 = vst [vmem:[%s293 + $0x4] sm:$0xf] %v2300
        %2307 = vst [vmem:[%s293 + $0x8] sm:$0x1] %v2301
        %p2308 = scmp.lt.s32.totalorder %s19, 1
        %s2309 = scalar_select %p2308, %s19, 1
        %s2310 = smul.addr %s2309, 3
        %s2311 = smul.addr %s2310, 4
        %s2312 = scalar_lea.vmem %s7, %s2311
        // Predicated region
        $region53: #{covid19_forward.3} parent=47 // pred_check
          %p2313 = pneg %p189
        $region54: #{covid19_forward.3} parent=47 // pred_check_branch
          %2315 = sbr.rel (%p2313) target = $region56
        $region55: #{covid19_forward.3} parent=47 // pred_region
          _
        $region56: #{covid19_forward.3} parent=47 // pred_fallthru
          _
      $region48: #{covid19_forward.3} parent=5 // pred_fallthru
        _
      %p2316 = scmp.le.s32.totalorder 2, %s14
      // Predicated region
      $region57: #{covid19_forward.3} parent=5 // pred_check
        %p2317 = pneg %p2316
      $region58: #{covid19_forward.3} parent=5 // pred_check_branch
        %2319 = sbr.rel (%p2317) target = $region60
      $region59: #{covid19_forward.3} parent=5 // pred_region
        %s2320 = ssub.s32 %s14, 2
        // Predicated region
        $region61: #{covid19_forward.3} parent=59 // pred_check
          %p2321 = pneg %p195
        $region62: #{covid19_forward.3} parent=59 // pred_check_branch
          %2323 = sbr.rel (%p2321) target = $region64
        $region63: #{covid19_forward.3} parent=59 // pred_region
          %p2324 = scmp.lt.s32.totalorder %s20, 1
          %s2325 = scalar_select %p2324, %s20, 1
          %s2326 = smul.addr %s2325, 3
          %s2327 = smul.addr %s2326, 4
          %s2328 = scalar_lea.vmem %s7, %s2327
        $region64: #{covid19_forward.3} parent=59 // pred_fallthru
          _
      $region60: #{covid19_forward.3} parent=5 // pred_fallthru
        _
    $region6: #{covid19_forward.3} parent=1 // loop_footer
      %s18 = sadd.s32 1, %s14
    $region7: #{covid19_forward.3} parent=1 // loop_footer_branch
      %13 = sbr.rel target = $region3
    $region8: #{covid19_forward.3} parent=1 // loop_exit
      _
    %2329 = vsyncpa [#allocation4], 1
    %s2330 = scalar_lea.sflag [#allocation4], 1
    %2331 = vsyncpa %s2330, 1

</llo_original>
